<compile_context>
chip_gen: v7x
topology: tpu7x:2x2x1
jax: 0.10.0
libtpu: 0.0.40
codegen_flags: <defaults>
</compile_context>

<pallas_src>
import math

import jax
import jax.numpy as jnp
from jax.experimental import pallas as pl
from jax.experimental.pallas import tpu as pltpu


NEG_INF = -1e18


# --------------------------------------------------------------------------
# Fused multi-layer decoder kernel
# --------------------------------------------------------------------------
def _make_decoder_kernel(bblk, T, S, D, heads):
    assert D % heads == 0
    dh = D // heads
    scale = 1.0 / math.sqrt(dh)
    N = bblk * T
    BH = bblk * heads

    def kernel(x_ref, mem_ref, tgt_add_ref, src_add_ref,
               ln_g_ref, ln_b_ref,
               self_qkv_w_ref, self_qkv_b_ref, self_out_w_ref, self_out_b_ref,
               ctx_qkv_w_ref, ctx_qkv_b_ref, ctx_out_w_ref, ctx_out_b_ref,
               ff_w1_ref, ff_b1_ref, ff_w2_ref, ff_b2_ref,
               fin_g_ref, fin_b_ref,
               out_ref, attn_ref):
        layer = pl.program_id(1)
        last = pl.num_programs(1) - 1

        # Layer 0 consumes the embedding block; later layers read the
        # activation carried in the resident output block (same block index
        # across the layer axis -> stays in VMEM, no HBM round trip).
        @pl.when(layer == 0)
        def _():
            out_ref[...] = x_ref[...]

        x = out_ref[...].reshape(N, D)                      # (N, D) f32 carry
        mem_bf = mem_ref[...].reshape(bblk * S, D)          # (bblk*S, D) bf16

        def layer_norm(v, g, b):
            mu = jnp.mean(v, axis=-1, keepdims=True)
            var = jnp.mean(jnp.square(v - mu), axis=-1, keepdims=True)
            return (v - mu) * jax.lax.rsqrt(var + 1e-6) * g + b

        def ln(v, idx):
            return layer_norm(v, ln_g_ref[pl.ds(idx, 1), :],
                              ln_b_ref[pl.ds(idx, 1), :])

        # Causal additive mask rebuilt in-kernel (no dense (T,T) mask DMA).
        row = jax.lax.broadcasted_iota(jnp.int32, (T, T), 0)
        col = jax.lax.broadcasted_iota(jnp.int32, (T, T), 1)
        causal_add = jnp.where(col > row, jnp.float32(NEG_INF), jnp.float32(0.0))
        self_mask = causal_add[None, :, :] + tgt_add_ref[...]      # (bblk, T, T)
        ctx_mask = src_add_ref[...]                                 # (bblk, 1, S)

        def split_heads(m, L_):
            # (bblk*L_, D) -> (bblk*heads, L_, dh)
            # TODO(synk): switch to pltpu.einshape / reshape+swapaxes once a
            # lane-dim split + transpose is guaranteed to lower on all targets.
            m3 = m.reshape(bblk, L_, D)
            st = jnp.stack([m3[..., h * dh:(h + 1) * dh] for h in range(heads)],
                           axis=1)                           # (bblk, H, L_, dh)
            return st.reshape(BH, L_, dh)

        def merge_heads(c):
            # (bblk*heads, T, dh) -> (N, D), head-major lane concat.
            c4 = c.reshape(bblk, heads, T, dh)
            return jnp.concatenate([c4[:, h] for h in range(heads)],
                                   axis=-1).reshape(N, D)

        def mha(q_bf, kv_bf, L_, qkv_w_ref, qkv_b_ref, out_w_ref, out_b_ref,
                add_mask, exact):
            wq, wk, wv = qkv_w_ref[0], qkv_w_ref[1], qkv_w_ref[2]   # (D, D) bf16
            bq = qkv_b_ref[pl.ds(0, 1), :]
            bk = qkv_b_ref[pl.ds(1, 1), :]
            bv = qkv_b_ref[pl.ds(2, 1), :]

            # Full-width projections over all bblk*rows (single MXU matmuls).
            q = (jnp.dot(q_bf, wq, preferred_element_type=jnp.float32) + bq) * scale
            k = jnp.dot(kv_bf, wk, preferred_element_type=jnp.float32) + bk
            v = jnp.dot(kv_bf, wv, preferred_element_type=jnp.float32) + bv

            # Cast k/v to bf16 exactly once, batch (bblk, heads) together.
            qh = split_heads(q, T).astype(jnp.bfloat16)      # (BH, T, dh)
            kh = split_heads(k, L_).astype(jnp.bfloat16)     # (BH, L_, dh)
            vh = split_heads(v, L_).astype(jnp.bfloat16)     # (BH, L_, dh)

            scores = jnp.einsum('btd,bld->btl', qh, kh,
                                preferred_element_type=jnp.float32)  # (BH, T, L_)
            scores = scores.reshape(bblk, heads, T, L_) + add_mask[:, None]

            m = jnp.max(scores, axis=-1, keepdims=True)
            e = jnp.exp(scores - m)
            denom = jnp.sum(e, axis=-1, keepdims=True)
            if exact:
                attn_w = e / denom                     # exported attention: exact
            else:
                attn_w = e * pl.reciprocal(denom, approx=True)   # EUP slot

            ctx = jnp.einsum('btl,bld->btd',
                             attn_w.reshape(BH, T, L_).astype(jnp.bfloat16), vh,
                             preferred_element_type=jnp.float32)   # (BH, T, dh)

            # Single (N, D) @ (D, D) output projection.
            merged = merge_heads(ctx).astype(jnp.bfloat16)
            out = jnp.dot(merged, out_w_ref[...],
                          preferred_element_type=jnp.float32) + out_b_ref[...]
            return out, attn_w                         # attn_w: (bblk, H, T, L_)

        # --- masked multi-head self attention --------------------------------
        x_norm_bf = ln(x, 0).astype(jnp.bfloat16)
        self_out, _ = mha(x_norm_bf, x_norm_bf, T,
                          self_qkv_w_ref, self_qkv_b_ref,
                          self_out_w_ref, self_out_b_ref,
                          self_mask, exact=False)
        query = self_out + x                 # dropout = identity (eval)

        # --- multi-head context attention -------------------------------------
        q_norm_bf = ln(query, 1).astype(jnp.bfloat16)
        ctx_out, ctx_attn = mha(q_norm_bf, mem_bf, S,
                                ctx_qkv_w_ref, ctx_qkv_b_ref,
                                ctx_out_w_ref, ctx_out_b_ref,
                                ctx_mask, exact=True)
        y = ctx_out + query                  # dropout = identity (eval)

        # --- position-wise feed forward ----------------------------------------
        ff_in = ln(y, 2).astype(jnp.bfloat16)
        inter = jnp.maximum(
            jnp.dot(ff_in, ff_w1_ref[...], preferred_element_type=jnp.float32)
            + ff_b1_ref[...], 0.0)
        ff_out = jnp.dot(inter.astype(jnp.bfloat16), ff_w2_ref[...],
                         preferred_element_type=jnp.float32) + ff_b2_ref[...]
        out = ff_out + y

        @pl.when(layer != last)
        def _():
            out_ref[...] = out.reshape(bblk, T, D)

        @pl.when(layer == last)
        def _():
            # Fused final LayerNorm of the decoder stack.
            out_ref[...] = layer_norm(out, fin_g_ref[...], fin_b_ref[...]
                                      ).reshape(bblk, T, D)
            # Head-0 context attention of the last layer (OpenNMT convention).
            # TODO(synk): pad the attn lane dim to a multiple of 128 outside the
            # kernel if S is lane-sparse and this store shows up in profiles.
            attn_ref[...] = ctx_attn[:, 0, :, :]

    return kernel


# --------------------------------------------------------------------------
# Generation-aware tiling helpers
# --------------------------------------------------------------------------
def _gen_config():
    try:
        kind = jax.devices()[0].device_kind.lower()
    except Exception:
        kind = ""
    if "v7" in kind:
        # 64 MiB physical VMEM, 2 TensorCores/chip.
        return {"vmem_cap": 48 * 2 ** 20, "row_target": 256, "two_tc": True}
    if "v6" in kind:
        # 128 MiB VMEM, 256-wide MXU.
        return {"vmem_cap": 100 * 2 ** 20, "row_target": 256, "two_tc": False}
    # v5e / default.
    return {"vmem_cap": 64 * 2 ** 20, "row_target": 128, "two_tc": False}


def _pick_bblk(B, T, row_target, two_tc):
    divisors = [d for d in range(1, B + 1) if B % d == 0]
    cands = [d for d in divisors if d * T >= row_target]
    bblk = cands[0] if cands else divisors[-1]
    if two_tc and B >= 2:
        # Keep >= 2 grid steps on the parallel axis so both cores are used.
        while B // bblk < 2:
            bblk = max(d for d in divisors if d < bblk)
    return bblk


def _vmem_limit_bytes(bblk, T, S, D, F, heads, cap):
    f32, bf16 = 4, 2
    data = bblk * (T * D * f32 + S * D * bf16 + T * f32 + S * f32)
    outs = bblk * (T * D + T * S) * f32
    weights = (6 * D * D + 2 * D * D + 2 * D * F) * bf16 + (16 * D + 2 * F) * f32
    scratch = bblk * (2 * heads * T * max(T, S) + T * F + 12 * T * D) * f32
    est = 2 * (data + weights + outs) + scratch + (4 << 20)
    return int(min(cap, max(16 * 2 ** 20, est)))


def _cost_estimate(B, T, S, D, F, heads, L):
    proj = 2 * B * (6 * T + 2 * S) * D * D               # qkv + out projections
    attn = 4 * B * D * (T * T + T * S)                   # scores + context
    ffn = 4 * B * T * D * F
    ln_flops = 8 * 4 * B * T * D
    trans = B * heads * T * (T + S)
    bytes_per_layer = (8 * D * D + 2 * D * F) * 2 + B * (T * D + S * D) * 4
    return pl.CostEstimate(flops=int(L * (proj + attn + ffn + ln_flops)),
                           transcendentals=int(L * trans),
                           bytes_accessed=int(L * bytes_per_layer))


# --------------------------------------------------------------------------
# Wrapper: one pallas_call for the whole decoder stack
# --------------------------------------------------------------------------
def decoder_stack_call(x, mem_bf16, tgt_add, src_add, lw, fin_gamma, fin_beta,
                       heads):
    """x: (B,T,D) f32, mem_bf16: (B,S,D) bf16, masks: (B,1,T)/(B,1,S) f32."""
    B, T, D = x.shape
    S = mem_bf16.shape[1]
    L = lw["ff_w1"].shape[0]
    F = lw["ff_w1"].shape[-1]

    cfg = _gen_config()
    bblk = _pick_bblk(B, T, cfg["row_target"], cfg["two_tc"])
    grid = (B // bblk, L)

    kernel = _make_decoder_kernel(bblk, T, S, D, heads)

    def data(shape):              # per-batch-block, constant over the layer axis
        return pl.BlockSpec(shape, lambda b, l: (b, 0, 0))

    in_specs = [
        data((bblk, T, D)),                                         # x (embeds)
        data((bblk, S, D)),                                         # memory (bf16)
        data((bblk, 1, T)),                                         # tgt pad mask
        data((bblk, 1, S)),                                         # src pad mask
        pl.BlockSpec((None, 3, D), lambda b, l: (l, 0, 0)),         # ln_gamma
        pl.BlockSpec((None, 3, D), lambda b, l: (l, 0, 0)),         # ln_beta
        pl.BlockSpec((None, 3, D, D), lambda b, l: (l, 0, 0, 0)),   # self qkv w
        pl.BlockSpec((None, 3, D), lambda b, l: (l, 0, 0)),         # self qkv b
        pl.BlockSpec((None, D, D), lambda b, l: (l, 0, 0)),         # self out w
        pl.BlockSpec((None, 1, D), lambda b, l: (l, 0, 0)),         # self out b
        pl.BlockSpec((None, 3, D, D), lambda b, l: (l, 0, 0, 0)),   # ctx qkv w
        pl.BlockSpec((None, 3, D), lambda b, l: (l, 0, 0)),         # ctx qkv b
        pl.BlockSpec((None, D, D), lambda b, l: (l, 0, 0)),         # ctx out w
        pl.BlockSpec((None, 1, D), lambda b, l: (l, 0, 0)),         # ctx out b
        pl.BlockSpec((None, D, F), lambda b, l: (l, 0, 0)),         # ff w1
        pl.BlockSpec((None, 1, F), lambda b, l: (l, 0, 0)),         # ff b1
        pl.BlockSpec((None, F, D), lambda b, l: (l, 0, 0)),         # ff w2
        pl.BlockSpec((None, 1, D), lambda b, l: (l, 0, 0)),         # ff b2
        pl.BlockSpec((1, D), lambda b, l: (0, 0)),                  # final gamma
        pl.BlockSpec((1, D), lambda b, l: (0, 0)),                  # final beta
    ]
    out_specs = [
        pl.BlockSpec((bblk, T, D), lambda b, l: (b, 0, 0)),         # dec output
        pl.BlockSpec((bblk, T, S), lambda b, l: (b, 0, 0)),         # last attn
    ]
    out_shape = [jax.ShapeDtypeStruct((B, T, D), jnp.float32),
                 jax.ShapeDtypeStruct((B, T, S), jnp.float32)]

    fn = pl.pallas_call(
        kernel,
        grid=grid,
        in_specs=in_specs,
        out_specs=out_specs,
        out_shape=out_shape,
        compiler_params=pltpu.CompilerParams(
            dimension_semantics=("parallel", "arbitrary"),
            vmem_limit_bytes=_vmem_limit_bytes(bblk, T, S, D, F, heads,
                                               cfg["vmem_cap"])),
        cost_estimate=_cost_estimate(B, T, S, D, F, heads, L),
    )
    args = [x, mem_bf16, tgt_add, src_add,
            lw["ln_gamma"], lw["ln_beta"],
            lw["self_qkv_w"], lw["self_qkv_b"], lw["self_out_w"], lw["self_out_b"],
            lw["ctx_qkv_w"], lw["ctx_qkv_b"], lw["ctx_out_w"], lw["ctx_out_b"],
            lw["ff_w1"], lw["ff_b1"], lw["ff_w2"], lw["ff_b2"],
            fin_gamma, fin_beta]
    out, attn = fn(*args)
    return out, attn


# --------------------------------------------------------------------------
# Full TransformerDecoder forward (embedding / mask glue in plain JAX)
# --------------------------------------------------------------------------
def positional_encoding(max_len, dim):
    position = jnp.arange(max_len, dtype=jnp.float32)[:, None]
    div_term = jnp.exp(jnp.arange(0, dim, 2, dtype=jnp.float32)
                       * -(math.log(10000.0) / dim))
    pe = jnp.zeros((max_len, dim), jnp.float32)
    pe = pe.at[:, 0::2].set(jnp.sin(position * div_term))
    pe = pe.at[:, 1::2].set(jnp.cos(position * div_term))
    return pe


def transformer_decoder_forward(params, tgt, src, memory_bank,
                                heads, pad_idx, copy_attn=False):
    """tgt/src: (len, batch, 1) int32; memory_bank: (src_len, batch, d_model)."""
    d_model = memory_bank.shape[-1]
    tgt_words = tgt[:, :, 0].T            # (B, T)
    src_words = src[:, :, 0].T            # (B, S)

    # Embeddings: word lookup * sqrt(d) + sinusoidal PE (dropout = identity).
    emb = params["embedding"][tgt[:, :, 0]]                       # (T, B, D)
    emb = emb * math.sqrt(d_model)
    emb = emb + positional_encoding(emb.shape[0], d_model)[:, None, :]

    output = jnp.transpose(emb, (1, 0, 2)).astype(jnp.float32)            # (B,T,D)
    # memory_bank is only K/V input -> bf16 halves its per-layer DMA bytes.
    src_memory_bank = jnp.transpose(memory_bank, (1, 0, 2)).astype(jnp.bfloat16)

    # Additive pad masks (causal part is rebuilt inside the kernel).
    src_add = jnp.where(src_words == pad_idx, NEG_INF, 0.0
                        ).astype(jnp.float32)[:, None, :]                 # (B,1,S)
    tgt_add = jnp.where(tgt_words == pad_idx, NEG_INF, 0.0
                        ).astype(jnp.float32)[:, None, :]                 # (B,1,T)

    dec_out, attn = decoder_stack_call(
        output, src_memory_bank, tgt_add, src_add,
        params["layers"], params["ln_gamma"], params["ln_beta"], heads)

    dec_outs = jnp.transpose(dec_out, (1, 0, 2))   # (T, B, D)
    attn = jnp.transpose(attn, (1, 0, 2))          # (T, B, S)
    attns = {"std": attn}
    if copy_attn:
        attns["copy"] = attn
    return dec_outs, attns
    # TODO(synk): incremental decoding cache (step != None), dropout-training
    # path and AverageAttention self-attention are not implemented.


# --------------------------------------------------------------------------
# Deterministic parameter init (per-layer weights stacked along a layer axis;
# matmul weights stored in bf16)
# --------------------------------------------------------------------------
def init_params(key, num_layers, d_model, d_ff, heads, vocab_size):
    L = num_layers

    def nrm(k, shape, scale=0.02, dtype=jnp.float32):
        return (scale * jax.random.normal(k, shape, jnp.float32)).astype(dtype)

    keys = jax.random.split(key, 17)
    layers = {
        "ln_gamma":   1.0 + nrm(keys[0], (L, 3, d_model), 0.01),
        "ln_beta":    nrm(keys[1], (L, 3, d_model), 0.01),
        "self_qkv_w": nrm(keys[2], (L, 3, d_model, d_model), dtype=jnp.bfloat16),
        "self_qkv_b": nrm(keys[3], (L, 3, d_model)),
        "self_out_w": nrm(keys[4], (L, d_model, d_model), dtype=jnp.bfloat16),
        "self_out_b": nrm(keys[5], (L, 1, d_model)),
        "ctx_qkv_w":  nrm(keys[6], (L, 3, d_model, d_model), dtype=jnp.bfloat16),
        "ctx_qkv_b":  nrm(keys[7], (L, 3, d_model)),
        "ctx_out_w":  nrm(keys[8], (L, d_model, d_model), dtype=jnp.bfloat16),
        "ctx_out_b":  nrm(keys[9], (L, 1, d_model)),
        "ff_w1":      nrm(keys[10], (L, d_model, d_ff), dtype=jnp.bfloat16),
        "ff_b1":      nrm(keys[11], (L, 1, d_ff)),
        "ff_w2":      nrm(keys[12], (L, d_ff, d_model), dtype=jnp.bfloat16),
        "ff_b2":      nrm(keys[13], (L, 1, d_model)),
    }
    return {
        "layers": layers,
        "ln_gamma": 1.0 + nrm(keys[14], (1, d_model), 0.01),
        "ln_beta":  nrm(keys[15], (1, d_model), 0.01),
        "embedding": nrm(keys[16], (vocab_size, d_model), 1.0),
    }


# --------------------------------------------------------------------------
if __name__ == "__main__":
    NUM_LAYERS = 2
    D_MODEL = 32
    HEADS = 4
    D_FF = 64
    VOCAB = 16
    PAD_IDX = 1
    BATCH = 2
    TGT_LEN = 8
    SRC_LEN = 8

    key = jax.random.PRNGKey(0)
    k_param, k_tgt, k_src, k_mem = jax.random.split(key, 4)

    params = init_params(k_param, NUM_LAYERS, D_MODEL, D_FF, HEADS, VOCAB)

    tgt = jax.random.randint(k_tgt, (TGT_LEN, BATCH, 1), 0, VOCAB, jnp.int32)
    src = jax.random.randint(k_src, (SRC_LEN, BATCH, 1), 0, VOCAB, jnp.int32)
    # add pad tokens so the masks are exercised
    src = src.at[-1, :, 0].set(PAD_IDX)
    memory_bank = jax.random.normal(k_mem, (SRC_LEN, BATCH, D_MODEL), jnp.float32)

    dec_outs, attns = transformer_decoder_forward(
        params, tgt, src, memory_bank, heads=HEADS, pad_idx=PAD_IDX)

    dec_outs = jax.block_until_ready(dec_outs)
    std_attn = jax.block_until_ready(attns["std"])

    assert dec_outs.shape == (TGT_LEN, BATCH, D_MODEL)
    assert std_attn.shape == (TGT_LEN, BATCH, SRC_LEN)
    assert bool(jnp.all(jnp.isfinite(dec_outs)))
    assert bool(jnp.all(jnp.isfinite(std_attn)))
    print("KERNEL_OK")
</pallas_src>

<mosaic_0001>
module attributes {stable_mosaic.version = 11 : i64} {
  func.func @kernel(%arg0: i32, %arg1: i32, %arg2: memref<2x8x32xf32, #tpu.memory_space<vmem>>, %arg3: memref<2x8x32xbf16, #tpu.memory_space<vmem>>, %arg4: memref<2x1x8xf32, #tpu.memory_space<vmem>>, %arg5: memref<2x1x8xf32, #tpu.memory_space<vmem>>, %arg6: memref<1x3x32xf32, #tpu.memory_space<vmem>>, %arg7: memref<1x3x32xf32, #tpu.memory_space<vmem>>, %arg8: memref<1x3x32x32xbf16, #tpu.memory_space<vmem>>, %arg9: memref<1x3x32xf32, #tpu.memory_space<vmem>>, %arg10: memref<1x32x32xbf16, #tpu.memory_space<vmem>>, %arg11: memref<1x1x32xf32, #tpu.memory_space<vmem>>, %arg12: memref<1x3x32x32xbf16, #tpu.memory_space<vmem>>, %arg13: memref<1x3x32xf32, #tpu.memory_space<vmem>>, %arg14: memref<1x32x32xbf16, #tpu.memory_space<vmem>>, %arg15: memref<1x1x32xf32, #tpu.memory_space<vmem>>, %arg16: memref<1x32x64xbf16, #tpu.memory_space<vmem>>, %arg17: memref<1x1x64xf32, #tpu.memory_space<vmem>>, %arg18: memref<1x64x32xbf16, #tpu.memory_space<vmem>>, %arg19: memref<1x1x32xf32, #tpu.memory_space<vmem>>, %arg20: memref<1x32xf32, #tpu.memory_space<vmem>>, %arg21: memref<1x32xf32, #tpu.memory_space<vmem>>, %arg22: memref<2x8x32xf32, #tpu.memory_space<vmem>>, %arg23: memref<2x8x8xf32, #tpu.memory_space<vmem>>) attributes {dimension_semantics = [#tpu.dimension_semantics<parallel>, #tpu.dimension_semantics<arbitrary>], iteration_bounds = array<i64: 1, 2>, scalar_prefetch = 0 : i64, scratch_operands = 0 : i64, tpu.core_type = #tpu.core_type<tc>, window_params = [{transform_indices = @transform_0, window_bounds = array<i64: 2, 8, 32>}, {transform_indices = @transform_1, window_bounds = array<i64: 2, 8, 32>}, {transform_indices = @transform_2, window_bounds = array<i64: 2, 1, 8>}, {transform_indices = @transform_3, window_bounds = array<i64: 2, 1, 8>}, {transform_indices = @transform_4, window_bounds = array<i64: 1, 3, 32>}, {transform_indices = @transform_5, window_bounds = array<i64: 1, 3, 32>}, {transform_indices = @transform_6, window_bounds = array<i64: 1, 3, 32, 32>}, {transform_indices = @transform_7, window_bounds = array<i64: 1, 3, 32>}, {transform_indices = @transform_8, window_bounds = array<i64: 1, 32, 32>}, {transform_indices = @transform_9, window_bounds = array<i64: 1, 1, 32>}, {transform_indices = @transform_10, window_bounds = array<i64: 1, 3, 32, 32>}, {transform_indices = @transform_11, window_bounds = array<i64: 1, 3, 32>}, {transform_indices = @transform_12, window_bounds = array<i64: 1, 32, 32>}, {transform_indices = @transform_13, window_bounds = array<i64: 1, 1, 32>}, {transform_indices = @transform_14, window_bounds = array<i64: 1, 32, 64>}, {transform_indices = @transform_15, window_bounds = array<i64: 1, 1, 64>}, {transform_indices = @transform_16, window_bounds = array<i64: 1, 64, 32>}, {transform_indices = @transform_17, window_bounds = array<i64: 1, 1, 32>}, {pipeline_mode = #tpu.pipeline_mode<synchronous>, transform_indices = @transform_18, window_bounds = array<i64: 1, 32>}, {pipeline_mode = #tpu.pipeline_mode<synchronous>, transform_indices = @transform_19, window_bounds = array<i64: 1, 32>}, {transform_indices = @transform_20, window_bounds = array<i64: 2, 8, 32>}, {transform_indices = @transform_21, window_bounds = array<i64: 2, 8, 8>}]} {
    %c0_i32 = arith.constant 0 : i32
    %0 = arith.cmpi eq, %arg1, %c0_i32 : i32
    %1 = arith.extui %0 : i1 to i32
    %c0_i32_0 = arith.constant 0 : i32
    %2 = arith.cmpi ne, %1, %c0_i32_0 : i32
    scf.if %2 {
      %c0_134 = arith.constant 0 : index
      %c0_135 = arith.constant 0 : index
      %c0_136 = arith.constant 0 : index
      %317 = vector.load %arg2[%c0_134, %c0_135, %c0_136] : memref<2x8x32xf32, #tpu.memory_space<vmem>>, vector<2x8x32xf32>
      %c0_137 = arith.constant 0 : index
      %c0_138 = arith.constant 0 : index
      %c0_139 = arith.constant 0 : index
      %318 = vector.load %arg22[%c0_137, %c0_138, %c0_139] : memref<2x8x32xf32, #tpu.memory_space<vmem>>, vector<2x8x32xf32>
      tpu.vector_store %arg22[%c0_137, %c0_138, %c0_139], %317 {strides = array<i32>} : memref<2x8x32xf32, #tpu.memory_space<vmem>>, vector<2x8x32xf32>,
    } else {
    }
    %c0 = arith.constant 0 : index
    %c0_1 = arith.constant 0 : index
    %c0_2 = arith.constant 0 : index
    %3 = vector.load %arg22[%c0, %c0_1, %c0_2] : memref<2x8x32xf32, #tpu.memory_space<vmem>>, vector<2x8x32xf32>
    %4 = vector.shape_cast %3 : vector<2x8x32xf32> to vector<16x32xf32>
    %c0_3 = arith.constant 0 : index
    %c0_4 = arith.constant 0 : index
    %c0_5 = arith.constant 0 : index
    %5 = vector.load %arg3[%c0_3, %c0_4, %c0_5] : memref<2x8x32xbf16, #tpu.memory_space<vmem>>, vector<2x8x32xbf16>
    %6 = vector.shape_cast %5 : vector<2x8x32xbf16> to vector<16x32xbf16>
    %7 = tpu.iota {dimensions = array<i32: 0>} : vector<8x8xi32>
    %8 = tpu.iota {dimensions = array<i32: 1>} : vector<8x8xi32>
    %9 = arith.cmpi sgt, %8, %7 : vector<8x8xi32>
    %cst = arith.constant -9.99999984E+17 : f32
    %cst_6 = arith.constant 0.000000e+00 : f32
    %10 = vector.broadcast %cst : f32 to vector<8x8xf32>
    %11 = vector.broadcast %cst_6 : f32 to vector<8x8xf32>
    %12 = arith.select %9, %10, %11 : vector<8x8xi1>, vector<8x8xf32>
    %13 = vector.shape_cast %12 : vector<8x8xf32> to vector<1x8x8xf32>
    %c0_7 = arith.constant 0 : index
    %c0_8 = arith.constant 0 : index
    %c0_9 = arith.constant 0 : index
    %14 = vector.load %arg4[%c0_7, %c0_8, %c0_9] : memref<2x1x8xf32, #tpu.memory_space<vmem>>, vector<2x1x8xf32>
    %15 = vector.broadcast %13 : vector<1x8x8xf32> to vector<2x8x8xf32>
    %16 = vector.broadcast %14 : vector<2x1x8xf32> to vector<2x8x8xf32>
    %17 = arith.addf %15, %16 : vector<2x8x8xf32>
    %c0_10 = arith.constant 0 : index
    %c0_11 = arith.constant 0 : index
    %c0_12 = arith.constant 0 : index
    %18 = vector.load %arg5[%c0_10, %c0_11, %c0_12] : memref<2x1x8xf32, #tpu.memory_space<vmem>>, vector<2x1x8xf32>
    %c0_13 = arith.constant 0 : index
    %c0_14 = arith.constant 0 : index
    %c0_15 = arith.constant 0 : index
    %19 = vector.load %arg6[%c0_13, %c0_14, %c0_15] : memref<1x3x32xf32, #tpu.memory_space<vmem>>, vector<1x1x32xf32>
    %20 = vector.shape_cast %19 : vector<1x1x32xf32> to vector<1x32xf32>
    %c0_16 = arith.constant 0 : index
    %c0_17 = arith.constant 0 : index
    %c0_18 = arith.constant 0 : index
    %21 = vector.load %arg7[%c0_16, %c0_17, %c0_18] : memref<1x3x32xf32, #tpu.memory_space<vmem>>, vector<1x1x32xf32>
    %22 = vector.shape_cast %21 : vector<1x1x32xf32> to vector<1x32xf32>
    %cst_19 = arith.constant dense<0.000000e+00> : vector<16xf32>
    %23 = vector.multi_reduction <add>, %4, %cst_19 [1] : vector<16x32xf32> to vector<16xf32>
    %24 = vector.shape_cast %23 : vector<16xf32> to vector<16x1xf32>
    %cst_20 = arith.constant 3.200000e+01 : f32
    %25 = vector.broadcast %cst_20 : f32 to vector<16x1xf32>
    %26 = arith.divf %24, %25 : vector<16x1xf32>
    %27 = vector.broadcast %26 : vector<16x1xf32> to vector<16x32xf32>
    %28 = arith.subf %4, %27 : vector<16x32xf32>
    %29 = arith.mulf %28, %28 : vector<16x32xf32>
    %cst_21 = arith.constant dense<0.000000e+00> : vector<16xf32>
    %30 = vector.multi_reduction <add>, %29, %cst_21 [1] : vector<16x32xf32> to vector<16xf32>
    %31 = vector.shape_cast %30 : vector<16xf32> to vector<16x1xf32>
    %cst_22 = arith.constant 3.200000e+01 : f32
    %32 = vector.broadcast %cst_22 : f32 to vector<16x1xf32>
    %33 = arith.divf %31, %32 : vector<16x1xf32>
    %34 = vector.broadcast %26 : vector<16x1xf32> to vector<16x32xf32>
    %35 = arith.subf %4, %34 : vector<16x32xf32>
    %cst_23 = arith.constant 9.99999997E-7 : f32
    %36 = vector.broadcast %cst_23 : f32 to vector<16x1xf32>
    %37 = arith.addf %33, %36 : vector<16x1xf32>
    %38 = math.rsqrt %37 : vector<16x1xf32>
    %39 = vector.broadcast %38 : vector<16x1xf32> to vector<16x32xf32>
    %40 = arith.mulf %35, %39 : vector<16x32xf32>
    %41 = vector.broadcast %20 : vector<1x32xf32> to vector<16x32xf32>
    %42 = arith.mulf %40, %41 : vector<16x32xf32>
    %43 = vector.broadcast %22 : vector<1x32xf32> to vector<16x32xf32>
    %44 = arith.addf %42, %43 : vector<16x32xf32>
    %45 = arith.truncf %44 : vector<16x32xf32> to vector<16x32xbf16>
    %c0_24 = arith.constant 0 : index
    %c0_25 = arith.constant 0 : index
    %c0_26 = arith.constant 0 : index
    %c0_27 = arith.constant 0 : index
    %46 = vector.load %arg8[%c0_24, %c0_25, %c0_26, %c0_27] : memref<1x3x32x32xbf16, #tpu.memory_space<vmem>>, vector<1x1x32x32xbf16>
    %47 = vector.shape_cast %46 : vector<1x1x32x32xbf16> to vector<32x32xbf16>
    %c0_28 = arith.constant 0 : index
    %c1 = arith.constant 1 : index
    %c0_29 = arith.constant 0 : index
    %c0_30 = arith.constant 0 : index
    %48 = vector.load %arg8[%c0_28, %c1, %c0_29, %c0_30] : memref<1x3x32x32xbf16, #tpu.memory_space<vmem>>, vector<1x1x32x32xbf16>
    %49 = vector.shape_cast %48 : vector<1x1x32x32xbf16> to vector<32x32xbf16>
    %c0_31 = arith.constant 0 : index
    %c2 = arith.constant 2 : index
    %c0_32 = arith.constant 0 : index
    %c0_33 = arith.constant 0 : index
    %50 = vector.load %arg8[%c0_31, %c2, %c0_32, %c0_33] : memref<1x3x32x32xbf16, #tpu.memory_space<vmem>>, vector<1x1x32x32xbf16>
    %51 = vector.shape_cast %50 : vector<1x1x32x32xbf16> to vector<32x32xbf16>
    %c0_34 = arith.constant 0 : index
    %c0_35 = arith.constant 0 : index
    %c0_36 = arith.constant 0 : index
    %52 = vector.load %arg9[%c0_34, %c0_35, %c0_36] : memref<1x3x32xf32, #tpu.memory_space<vmem>>, vector<1x1x32xf32>
    %53 = vector.shape_cast %52 : vector<1x1x32xf32> to vector<1x32xf32>
    %c0_37 = arith.constant 0 : index
    %c1_38 = arith.constant 1 : index
    %c0_39 = arith.constant 0 : index
    %54 = vector.load %arg9[%c0_37, %c1_38, %c0_39] : memref<1x3x32xf32, #tpu.memory_space<vmem>>, vector<1x1x32xf32>
    %55 = vector.shape_cast %54 : vector<1x1x32xf32> to vector<1x32xf32>
    %c0_40 = arith.constant 0 : index
    %c2_41 = arith.constant 2 : index
    %c0_42 = arith.constant 0 : index
    %56 = vector.load %arg9[%c0_40, %c2_41, %c0_42] : memref<1x3x32xf32, #tpu.memory_space<vmem>>, vector<1x1x32xf32>
    %57 = vector.shape_cast %56 : vector<1x1x32xf32> to vector<1x32xf32>
    %cst_43 = arith.constant dense<0.000000e+00> : vector<16x32xf32>
    %58 = tpu.matmul %45, %47, %cst_43 {dimension_numbers = #tpu.dot_dimension_numbers<[1], [0], [0], [1], [0, 0, 1, 1], [], []>} : vector<16x32xbf16>, vector<32x32xbf16>, vector<16x32xf32> -> vector<16x32xf32>
    %59 = vector.broadcast %53 : vector<1x32xf32> to vector<16x32xf32>
    %60 = arith.addf %58, %59 : vector<16x32xf32>
    %cst_44 = arith.constant 0.353553385 : f32
    %61 = vector.broadcast %cst_44 : f32 to vector<16x32xf32>
    %62 = arith.mulf %60, %61 : vector<16x32xf32>
    %cst_45 = arith.constant dense<0.000000e+00> : vector<16x32xf32>
    %63 = tpu.matmul %45, %49, %cst_45 {dimension_numbers = #tpu.dot_dimension_numbers<[1], [0], [0], [1], [0, 0, 1, 1], [], []>} : vector<16x32xbf16>, vector<32x32xbf16>, vector<16x32xf32> -> vector<16x32xf32>
    %64 = vector.broadcast %55 : vector<1x32xf32> to vector<16x32xf32>
    %65 = arith.addf %63, %64 : vector<16x32xf32>
    %cst_46 = arith.constant dense<0.000000e+00> : vector<16x32xf32>
    %66 = tpu.matmul %45, %51, %cst_46 {dimension_numbers = #tpu.dot_dimension_numbers<[1], [0], [0], [1], [0, 0, 1, 1], [], []>} : vector<16x32xbf16>, vector<32x32xbf16>, vector<16x32xf32> -> vector<16x32xf32>
    %67 = vector.broadcast %57 : vector<1x32xf32> to vector<16x32xf32>
    %68 = arith.addf %66, %67 : vector<16x32xf32>
    %69 = vector.shape_cast %62 : vector<16x32xf32> to vector<2x8x32xf32>
    %70 = vector.extract_strided_slice %69 {offsets = [0, 0, 0], sizes = [2, 8, 8], strides = [1, 1, 1]} : vector<2x8x32xf32> to vector<2x8x8xf32>
    %71 = vector.extract_strided_slice %69 {offsets = [0, 0, 8], sizes = [2, 8, 8], strides = [1, 1, 1]} : vector<2x8x32xf32> to vector<2x8x8xf32>
    %72 = vector.extract_strided_slice %69 {offsets = [0, 0, 16], sizes = [2, 8, 8], strides = [1, 1, 1]} : vector<2x8x32xf32> to vector<2x8x8xf32>
    %73 = vector.extract_strided_slice %69 {offsets = [0, 0, 24], sizes = [2, 8, 8], strides = [1, 1, 1]} : vector<2x8x32xf32> to vector<2x8x8xf32>
    %74 = vector.shape_cast %70 : vector<2x8x8xf32> to vector<2x1x8x8xf32>
    %75 = vector.shape_cast %71 : vector<2x8x8xf32> to vector<2x1x8x8xf32>
    %76 = vector.shape_cast %72 : vector<2x8x8xf32> to vector<2x1x8x8xf32>
    %77 = vector.shape_cast %73 : vector<2x8x8xf32> to vector<2x1x8x8xf32>
    %78 = tpu.concatenate %74, %75, %76, %77 in 1 : vector<2x1x8x8xf32>, vector<2x1x8x8xf32>, vector<2x1x8x8xf32>, vector<2x1x8x8xf32> -> vector<2x4x8x8xf32>
    %79 = vector.shape_cast %78 : vector<2x4x8x8xf32> to vector<8x8x8xf32>
    %80 = arith.truncf %79 : vector<8x8x8xf32> to vector<8x8x8xbf16>
    %81 = vector.shape_cast %65 : vector<16x32xf32> to vector<2x8x32xf32>
    %82 = vector.extract_strided_slice %81 {offsets = [0, 0, 0], sizes = [2, 8, 8], strides = [1, 1, 1]} : vector<2x8x32xf32> to vector<2x8x8xf32>
    %83 = vector.extract_strided_slice %81 {offsets = [0, 0, 8], sizes = [2, 8, 8], strides = [1, 1, 1]} : vector<2x8x32xf32> to vector<2x8x8xf32>
    %84 = vector.extract_strided_slice %81 {offsets = [0, 0, 16], sizes = [2, 8, 8], strides = [1, 1, 1]} : vector<2x8x32xf32> to vector<2x8x8xf32>
    %85 = vector.extract_strided_slice %81 {offsets = [0, 0, 24], sizes = [2, 8, 8], strides = [1, 1, 1]} : vector<2x8x32xf32> to vector<2x8x8xf32>
    %86 = vector.shape_cast %82 : vector<2x8x8xf32> to vector<2x1x8x8xf32>
    %87 = vector.shape_cast %83 : vector<2x8x8xf32> to vector<2x1x8x8xf32>
    %88 = vector.shape_cast %84 : vector<2x8x8xf32> to vector<2x1x8x8xf32>
    %89 = vector.shape_cast %85 : vector<2x8x8xf32> to vector<2x1x8x8xf32>
    %90 = tpu.concatenate %86, %87, %88, %89 in 1 : vector<2x1x8x8xf32>, vector<2x1x8x8xf32>, vector<2x1x8x8xf32>, vector<2x1x8x8xf32> -> vector<2x4x8x8xf32>
    %91 = vector.shape_cast %90 : vector<2x4x8x8xf32> to vector<8x8x8xf32>
    %92 = arith.truncf %91 : vector<8x8x8xf32> to vector<8x8x8xbf16>
    %93 = vector.shape_cast %68 : vector<16x32xf32> to vector<2x8x32xf32>
    %94 = vector.extract_strided_slice %93 {offsets = [0, 0, 0], sizes = [2, 8, 8], strides = [1, 1, 1]} : vector<2x8x32xf32> to vector<2x8x8xf32>
    %95 = vector.extract_strided_slice %93 {offsets = [0, 0, 8], sizes = [2, 8, 8], strides = [1, 1, 1]} : vector<2x8x32xf32> to vector<2x8x8xf32>
    %96 = vector.extract_strided_slice %93 {offsets = [0, 0, 16], sizes = [2, 8, 8], strides = [1, 1, 1]} : vector<2x8x32xf32> to vector<2x8x8xf32>
    %97 = vector.extract_strided_slice %93 {offsets = [0, 0, 24], sizes = [2, 8, 8], strides = [1, 1, 1]} : vector<2x8x32xf32> to vector<2x8x8xf32>
    %98 = vector.shape_cast %94 : vector<2x8x8xf32> to vector<2x1x8x8xf32>
    %99 = vector.shape_cast %95 : vector<2x8x8xf32> to vector<2x1x8x8xf32>
    %100 = vector.shape_cast %96 : vector<2x8x8xf32> to vector<2x1x8x8xf32>
    %101 = vector.shape_cast %97 : vector<2x8x8xf32> to vector<2x1x8x8xf32>
    %102 = tpu.concatenate %98, %99, %100, %101 in 1 : vector<2x1x8x8xf32>, vector<2x1x8x8xf32>, vector<2x1x8x8xf32>, vector<2x1x8x8xf32> -> vector<2x4x8x8xf32>
    %103 = vector.shape_cast %102 : vector<2x4x8x8xf32> to vector<8x8x8xf32>
    %104 = arith.truncf %103 : vector<8x8x8xf32> to vector<8x8x8xbf16>
    "tpu.trace_start"() <{level = 10 : i32, message = "btd,bld->btl"}> : () -> ()
    %cst_47 = arith.constant dense<0.000000e+00> : vector<8x8x8xf32>
    %105 = tpu.matmul %80, %92, %cst_47 {dimension_numbers = #tpu.dot_dimension_numbers<[2], [2], [1], [1], [0, 0, 0, 1, 1, 1], [0], [0]>} : vector<8x8x8xbf16>, vector<8x8x8xbf16>, vector<8x8x8xf32> -> vector<8x8x8xf32>
    "tpu.trace_stop"() : () -> ()
    %106 = vector.shape_cast %105 : vector<8x8x8xf32> to vector<2x4x8x8xf32>
    %107 = vector.shape_cast %17 : vector<2x8x8xf32> to vector<2x1x8x8xf32>
    %108 = vector.broadcast %107 : vector<2x1x8x8xf32> to vector<2x4x8x8xf32>
    %109 = arith.addf %106, %108 : vector<2x4x8x8xf32>
    %cst_48 = arith.constant dense<0xFF800000> : vector<2x4x8xf32>
    %110 = vector.multi_reduction <maximumf>, %109, %cst_48 [3] : vector<2x4x8x8xf32> to vector<2x4x8xf32>
    %111 = vector.shape_cast %110 : vector<2x4x8xf32> to vector<2x4x8x1xf32>
    %112 = vector.broadcast %111 : vector<2x4x8x1xf32> to vector<2x4x8x8xf32>
    %113 = arith.subf %109, %112 : vector<2x4x8x8xf32>
    %114 = math.exp %113 : vector<2x4x8x8xf32>
    %cst_49 = arith.constant dense<0.000000e+00> : vector<2x4x8xf32>
    %115 = vector.multi_reduction <add>, %114, %cst_49 [3] : vector<2x4x8x8xf32> to vector<2x4x8xf32>
    %116 = vector.shape_cast %115 : vector<2x4x8xf32> to vector<2x4x8x1xf32>
    %117 = tpu.reciprocal %116 {approx = true} : vector<2x4x8x1xf32> -> vector<2x4x8x1xf32>
    %118 = vector.broadcast %117 : vector<2x4x8x1xf32> to vector<2x4x8x8xf32>
    %119 = arith.mulf %114, %118 : vector<2x4x8x8xf32>
    %120 = vector.shape_cast %119 : vector<2x4x8x8xf32> to vector<8x8x8xf32>
    %121 = arith.truncf %120 : vector<8x8x8xf32> to vector<8x8x8xbf16>
    "tpu.trace_start"() <{level = 10 : i32, message = "btl,bld->btd"}> : () -> ()
    %cst_50 = arith.constant dense<0.000000e+00> : vector<8x8x8xf32>
    %122 = tpu.matmul %121, %104, %cst_50 {dimension_numbers = #tpu.dot_dimension_numbers<[2], [1], [1], [2], [0, 0, 0, 1, 1, 2], [0], [0]>} : vector<8x8x8xbf16>, vector<8x8x8xbf16>, vector<8x8x8xf32> -> vector<8x8x8xf32>
    "tpu.trace_stop"() : () -> ()
    %123 = vector.shape_cast %122 : vector<8x8x8xf32> to vector<2x4x8x8xf32>
    %124 = vector.extract_strided_slice %123 {offsets = [0, 0, 0, 0], sizes = [2, 1, 8, 8], strides = [1, 1, 1, 1]} : vector<2x4x8x8xf32> to vector<2x1x8x8xf32>
    %125 = vector.shape_cast %124 : vector<2x1x8x8xf32> to vector<2x8x8xf32>
    %126 = vector.extract_strided_slice %123 {offsets = [0, 1, 0, 0], sizes = [2, 1, 8, 8], strides = [1, 1, 1, 1]} : vector<2x4x8x8xf32> to vector<2x1x8x8xf32>
    %127 = vector.shape_cast %126 : vector<2x1x8x8xf32> to vector<2x8x8xf32>
    %128 = vector.extract_strided_slice %123 {offsets = [0, 2, 0, 0], sizes = [2, 1, 8, 8], strides = [1, 1, 1, 1]} : vector<2x4x8x8xf32> to vector<2x1x8x8xf32>
    %129 = vector.shape_cast %128 : vector<2x1x8x8xf32> to vector<2x8x8xf32>
    %130 = vector.extract_strided_slice %123 {offsets = [0, 3, 0, 0], sizes = [2, 1, 8, 8], strides = [1, 1, 1, 1]} : vector<2x4x8x8xf32> to vector<2x1x8x8xf32>
    %131 = vector.shape_cast %130 : vector<2x1x8x8xf32> to vector<2x8x8xf32>
    %132 = tpu.concatenate %125, %127, %129, %131 in 2 : vector<2x8x8xf32>, vector<2x8x8xf32>, vector<2x8x8xf32>, vector<2x8x8xf32> -> vector<2x8x32xf32>
    %133 = vector.shape_cast %132 : vector<2x8x32xf32> to vector<16x32xf32>
    %134 = arith.truncf %133 : vector<16x32xf32> to vector<16x32xbf16>
    %c0_51 = arith.constant 0 : index
    %c0_52 = arith.constant 0 : index
    %c0_53 = arith.constant 0 : index
    %135 = vector.load %arg10[%c0_51, %c0_52, %c0_53] : memref<1x32x32xbf16, #tpu.memory_space<vmem>>, vector<1x32x32xbf16>
    %136 = vector.shape_cast %135 : vector<1x32x32xbf16> to vector<32x32xbf16>
    %cst_54 = arith.constant dense<0.000000e+00> : vector<16x32xf32>
    %137 = tpu.matmul %134, %136, %cst_54 {dimension_numbers = #tpu.dot_dimension_numbers<[1], [0], [0], [1], [0, 0, 1, 1], [], []>} : vector<16x32xbf16>, vector<32x32xbf16>, vector<16x32xf32> -> vector<16x32xf32>
    %c0_55 = arith.constant 0 : index
    %c0_56 = arith.constant 0 : index
    %c0_57 = arith.constant 0 : index
    %138 = vector.load %arg11[%c0_55, %c0_56, %c0_57] : memref<1x1x32xf32, #tpu.memory_space<vmem>>, vector<1x1x32xf32>
    %139 = vector.shape_cast %138 : vector<1x1x32xf32> to vector<1x32xf32>
    %140 = vector.broadcast %139 : vector<1x32xf32> to vector<16x32xf32>
    %141 = arith.addf %137, %140 : vector<16x32xf32>
    %142 = arith.addf %141, %4 : vector<16x32xf32>
    %c0_58 = arith.constant 0 : index
    %c1_59 = arith.constant 1 : index
    %c0_60 = arith.constant 0 : index
    %143 = vector.load %arg6[%c0_58, %c1_59, %c0_60] : memref<1x3x32xf32, #tpu.memory_space<vmem>>, vector<1x1x32xf32>
    %144 = vector.shape_cast %143 : vector<1x1x32xf32> to vector<1x32xf32>
    %c0_61 = arith.constant 0 : index
    %c1_62 = arith.constant 1 : index
    %c0_63 = arith.constant 0 : index
    %145 = vector.load %arg7[%c0_61, %c1_62, %c0_63] : memref<1x3x32xf32, #tpu.memory_space<vmem>>, vector<1x1x32xf32>
    %146 = vector.shape_cast %145 : vector<1x1x32xf32> to vector<1x32xf32>
    %cst_64 = arith.constant dense<0.000000e+00> : vector<16xf32>
    %147 = vector.multi_reduction <add>, %142, %cst_64 [1] : vector<16x32xf32> to vector<16xf32>
    %148 = vector.shape_cast %147 : vector<16xf32> to vector<16x1xf32>
    %cst_65 = arith.constant 3.200000e+01 : f32
    %149 = vector.broadcast %cst_65 : f32 to vector<16x1xf32>
    %150 = arith.divf %148, %149 : vector<16x1xf32>
    %151 = vector.broadcast %150 : vector<16x1xf32> to vector<16x32xf32>
    %152 = arith.subf %142, %151 : vector<16x32xf32>
    %153 = arith.mulf %152, %152 : vector<16x32xf32>
    %cst_66 = arith.constant dense<0.000000e+00> : vector<16xf32>
    %154 = vector.multi_reduction <add>, %153, %cst_66 [1] : vector<16x32xf32> to vector<16xf32>
    %155 = vector.shape_cast %154 : vector<16xf32> to vector<16x1xf32>
    %cst_67 = arith.constant 3.200000e+01 : f32
    %156 = vector.broadcast %cst_67 : f32 to vector<16x1xf32>
    %157 = arith.divf %155, %156 : vector<16x1xf32>
    %158 = vector.broadcast %150 : vector<16x1xf32> to vector<16x32xf32>
    %159 = arith.subf %142, %158 : vector<16x32xf32>
    %cst_68 = arith.constant 9.99999997E-7 : f32
    %160 = vector.broadcast %cst_68 : f32 to vector<16x1xf32>
    %161 = arith.addf %157, %160 : vector<16x1xf32>
    %162 = math.rsqrt %161 : vector<16x1xf32>
    %163 = vector.broadcast %162 : vector<16x1xf32> to vector<16x32xf32>
    %164 = arith.mulf %159, %163 : vector<16x32xf32>
    %165 = vector.broadcast %144 : vector<1x32xf32> to vector<16x32xf32>
    %166 = arith.mulf %164, %165 : vector<16x32xf32>
    %167 = vector.broadcast %146 : vector<1x32xf32> to vector<16x32xf32>
    %168 = arith.addf %166, %167 : vector<16x32xf32>
    %169 = arith.truncf %168 : vector<16x32xf32> to vector<16x32xbf16>
    %c0_69 = arith.constant 0 : index
    %c0_70 = arith.constant 0 : index
    %c0_71 = arith.constant 0 : index
    %c0_72 = arith.constant 0 : index
    %170 = vector.load %arg12[%c0_69, %c0_70, %c0_71, %c0_72] : memref<1x3x32x32xbf16, #tpu.memory_space<vmem>>, vector<1x1x32x32xbf16>
    %171 = vector.shape_cast %170 : vector<1x1x32x32xbf16> to vector<32x32xbf16>
    %c0_73 = arith.constant 0 : index
    %c1_74 = arith.constant 1 : index
    %c0_75 = arith.constant 0 : index
    %c0_76 = arith.constant 0 : index
    %172 = vector.load %arg12[%c0_73, %c1_74, %c0_75, %c0_76] : memref<1x3x32x32xbf16, #tpu.memory_space<vmem>>, vector<1x1x32x32xbf16>
    %173 = vector.shape_cast %172 : vector<1x1x32x32xbf16> to vector<32x32xbf16>
    %c0_77 = arith.constant 0 : index
    %c2_78 = arith.constant 2 : index
    %c0_79 = arith.constant 0 : index
    %c0_80 = arith.constant 0 : index
    %174 = vector.load %arg12[%c0_77, %c2_78, %c0_79, %c0_80] : memref<1x3x32x32xbf16, #tpu.memory_space<vmem>>, vector<1x1x32x32xbf16>
    %175 = vector.shape_cast %174 : vector<1x1x32x32xbf16> to vector<32x32xbf16>
    %c0_81 = arith.constant 0 : index
    %c0_82 = arith.constant 0 : index
    %c0_83 = arith.constant 0 : index
    %176 = vector.load %arg13[%c0_81, %c0_82, %c0_83] : memref<1x3x32xf32, #tpu.memory_space<vmem>>, vector<1x1x32xf32>
    %177 = vector.shape_cast %176 : vector<1x1x32xf32> to vector<1x32xf32>
    %c0_84 = arith.constant 0 : index
    %c1_85 = arith.constant 1 : index
    %c0_86 = arith.constant 0 : index
    %178 = vector.load %arg13[%c0_84, %c1_85, %c0_86] : memref<1x3x32xf32, #tpu.memory_space<vmem>>, vector<1x1x32xf32>
    %179 = vector.shape_cast %178 : vector<1x1x32xf32> to vector<1x32xf32>
    %c0_87 = arith.constant 0 : index
    %c2_88 = arith.constant 2 : index
    %c0_89 = arith.constant 0 : index
    %180 = vector.load %arg13[%c0_87, %c2_88, %c0_89] : memref<1x3x32xf32, #tpu.memory_space<vmem>>, vector<1x1x32xf32>
    %181 = vector.shape_cast %180 : vector<1x1x32xf32> to vector<1x32xf32>
    %cst_90 = arith.constant dense<0.000000e+00> : vector<16x32xf32>
    %182 = tpu.matmul %169, %171, %cst_90 {dimension_numbers = #tpu.dot_dimension_numbers<[1], [0], [0], [1], [0, 0, 1, 1], [], []>} : vector<16x32xbf16>, vector<32x32xbf16>, vector<16x32xf32> -> vector<16x32xf32>
    %183 = vector.broadcast %177 : vector<1x32xf32> to vector<16x32xf32>
    %184 = arith.addf %182, %183 : vector<16x32xf32>
    %cst_91 = arith.constant 0.353553385 : f32
    %185 = vector.broadcast %cst_91 : f32 to vector<16x32xf32>
    %186 = arith.mulf %184, %185 : vector<16x32xf32>
    %cst_92 = arith.constant dense<0.000000e+00> : vector<16x32xf32>
    %187 = tpu.matmul %6, %173, %cst_92 {dimension_numbers = #tpu.dot_dimension_numbers<[1], [0], [0], [1], [0, 0, 1, 1], [], []>} : vector<16x32xbf16>, vector<32x32xbf16>, vector<16x32xf32> -> vector<16x32xf32>
    %188 = vector.broadcast %179 : vector<1x32xf32> to vector<16x32xf32>
    %189 = arith.addf %187, %188 : vector<16x32xf32>
    %cst_93 = arith.constant dense<0.000000e+00> : vector<16x32xf32>
    %190 = tpu.matmul %6, %175, %cst_93 {dimension_numbers = #tpu.dot_dimension_numbers<[1], [0], [0], [1], [0, 0, 1, 1], [], []>} : vector<16x32xbf16>, vector<32x32xbf16>, vector<16x32xf32> -> vector<16x32xf32>
    %191 = vector.broadcast %181 : vector<1x32xf32> to vector<16x32xf32>
    %192 = arith.addf %190, %191 : vector<16x32xf32>
    %193 = vector.shape_cast %186 : vector<16x32xf32> to vector<2x8x32xf32>
    %194 = vector.extract_strided_slice %193 {offsets = [0, 0, 0], sizes = [2, 8, 8], strides = [1, 1, 1]} : vector<2x8x32xf32> to vector<2x8x8xf32>
    %195 = vector.extract_strided_slice %193 {offsets = [0, 0, 8], sizes = [2, 8, 8], strides = [1, 1, 1]} : vector<2x8x32xf32> to vector<2x8x8xf32>
    %196 = vector.extract_strided_slice %193 {offsets = [0, 0, 16], sizes = [2, 8, 8], strides = [1, 1, 1]} : vector<2x8x32xf32> to vector<2x8x8xf32>
    %197 = vector.extract_strided_slice %193 {offsets = [0, 0, 24], sizes = [2, 8, 8], strides = [1, 1, 1]} : vector<2x8x32xf32> to vector<2x8x8xf32>
    %198 = vector.shape_cast %194 : vector<2x8x8xf32> to vector<2x1x8x8xf32>
    %199 = vector.shape_cast %195 : vector<2x8x8xf32> to vector<2x1x8x8xf32>
    %200 = vector.shape_cast %196 : vector<2x8x8xf32> to vector<2x1x8x8xf32>
    %201 = vector.shape_cast %197 : vector<2x8x8xf32> to vector<2x1x8x8xf32>
    %202 = tpu.concatenate %198, %199, %200, %201 in 1 : vector<2x1x8x8xf32>, vector<2x1x8x8xf32>, vector<2x1x8x8xf32>, vector<2x1x8x8xf32> -> vector<2x4x8x8xf32>
    %203 = vector.shape_cast %202 : vector<2x4x8x8xf32> to vector<8x8x8xf32>
    %204 = arith.truncf %203 : vector<8x8x8xf32> to vector<8x8x8xbf16>
    %205 = vector.shape_cast %189 : vector<16x32xf32> to vector<2x8x32xf32>
    %206 = vector.extract_strided_slice %205 {offsets = [0, 0, 0], sizes = [2, 8, 8], strides = [1, 1, 1]} : vector<2x8x32xf32> to vector<2x8x8xf32>
    %207 = vector.extract_strided_slice %205 {offsets = [0, 0, 8], sizes = [2, 8, 8], strides = [1, 1, 1]} : vector<2x8x32xf32> to vector<2x8x8xf32>
    %208 = vector.extract_strided_slice %205 {offsets = [0, 0, 16], sizes = [2, 8, 8], strides = [1, 1, 1]} : vector<2x8x32xf32> to vector<2x8x8xf32>
    %209 = vector.extract_strided_slice %205 {offsets = [0, 0, 24], sizes = [2, 8, 8], strides = [1, 1, 1]} : vector<2x8x32xf32> to vector<2x8x8xf32>
    %210 = vector.shape_cast %206 : vector<2x8x8xf32> to vector<2x1x8x8xf32>
    %211 = vector.shape_cast %207 : vector<2x8x8xf32> to vector<2x1x8x8xf32>
    %212 = vector.shape_cast %208 : vector<2x8x8xf32> to vector<2x1x8x8xf32>
    %213 = vector.shape_cast %209 : vector<2x8x8xf32> to vector<2x1x8x8xf32>
    %214 = tpu.concatenate %210, %211, %212, %213 in 1 : vector<2x1x8x8xf32>, vector<2x1x8x8xf32>, vector<2x1x8x8xf32>, vector<2x1x8x8xf32> -> vector<2x4x8x8xf32>
    %215 = vector.shape_cast %214 : vector<2x4x8x8xf32> to vector<8x8x8xf32>
    %216 = arith.truncf %215 : vector<8x8x8xf32> to vector<8x8x8xbf16>
    %217 = vector.shape_cast %192 : vector<16x32xf32> to vector<2x8x32xf32>
    %218 = vector.extract_strided_slice %217 {offsets = [0, 0, 0], sizes = [2, 8, 8], strides = [1, 1, 1]} : vector<2x8x32xf32> to vector<2x8x8xf32>
    %219 = vector.extract_strided_slice %217 {offsets = [0, 0, 8], sizes = [2, 8, 8], strides = [1, 1, 1]} : vector<2x8x32xf32> to vector<2x8x8xf32>
    %220 = vector.extract_strided_slice %217 {offsets = [0, 0, 16], sizes = [2, 8, 8], strides = [1, 1, 1]} : vector<2x8x32xf32> to vector<2x8x8xf32>
    %221 = vector.extract_strided_slice %217 {offsets = [0, 0, 24], sizes = [2, 8, 8], strides = [1, 1, 1]} : vector<2x8x32xf32> to vector<2x8x8xf32>
    %222 = vector.shape_cast %218 : vector<2x8x8xf32> to vector<2x1x8x8xf32>
    %223 = vector.shape_cast %219 : vector<2x8x8xf32> to vector<2x1x8x8xf32>
    %224 = vector.shape_cast %220 : vector<2x8x8xf32> to vector<2x1x8x8xf32>
    %225 = vector.shape_cast %221 : vector<2x8x8xf32> to vector<2x1x8x8xf32>
    %226 = tpu.concatenate %222, %223, %224, %225 in 1 : vector<2x1x8x8xf32>, vector<2x1x8x8xf32>, vector<2x1x8x8xf32>, vector<2x1x8x8xf32> -> vector<2x4x8x8xf32>
    %227 = vector.shape_cast %226 : vector<2x4x8x8xf32> to vector<8x8x8xf32>
    %228 = arith.truncf %227 : vector<8x8x8xf32> to vector<8x8x8xbf16>
    "tpu.trace_start"() <{level = 10 : i32, message = "btd,bld->btl"}> : () -> ()
    %cst_94 = arith.constant dense<0.000000e+00> : vector<8x8x8xf32>
    %229 = tpu.matmul %204, %216, %cst_94 {dimension_numbers = #tpu.dot_dimension_numbers<[2], [2], [1], [1], [0, 0, 0, 1, 1, 1], [0], [0]>} : vector<8x8x8xbf16>, vector<8x8x8xbf16>, vector<8x8x8xf32> -> vector<8x8x8xf32>
    "tpu.trace_stop"() : () -> ()
    %230 = vector.shape_cast %229 : vector<8x8x8xf32> to vector<2x4x8x8xf32>
    %231 = vector.shape_cast %18 : vector<2x1x8xf32> to vector<2x1x1x8xf32>
    %232 = vector.broadcast %231 : vector<2x1x1x8xf32> to vector<2x4x8x8xf32>
    %233 = arith.addf %230, %232 : vector<2x4x8x8xf32>
    %cst_95 = arith.constant dense<0xFF800000> : vector<2x4x8xf32>
    %234 = vector.multi_reduction <maximumf>, %233, %cst_95 [3] : vector<2x4x8x8xf32> to vector<2x4x8xf32>
    %235 = vector.shape_cast %234 : vector<2x4x8xf32> to vector<2x4x8x1xf32>
    %236 = vector.broadcast %235 : vector<2x4x8x1xf32> to vector<2x4x8x8xf32>
    %237 = arith.subf %233, %236 : vector<2x4x8x8xf32>
    %238 = math.exp %237 : vector<2x4x8x8xf32>
    %cst_96 = arith.constant dense<0.000000e+00> : vector<2x4x8xf32>
    %239 = vector.multi_reduction <add>, %238, %cst_96 [3] : vector<2x4x8x8xf32> to vector<2x4x8xf32>
    %240 = vector.shape_cast %239 : vector<2x4x8xf32> to vector<2x4x8x1xf32>
    %241 = vector.broadcast %240 : vector<2x4x8x1xf32> to vector<2x4x8x8xf32>
    %242 = arith.divf %238, %241 : vector<2x4x8x8xf32>
    %243 = vector.shape_cast %242 : vector<2x4x8x8xf32> to vector<8x8x8xf32>
    %244 = arith.truncf %243 : vector<8x8x8xf32> to vector<8x8x8xbf16>
    "tpu.trace_start"() <{level = 10 : i32, message = "btl,bld->btd"}> : () -> ()
    %cst_97 = arith.constant dense<0.000000e+00> : vector<8x8x8xf32>
    %245 = tpu.matmul %244, %228, %cst_97 {dimension_numbers = #tpu.dot_dimension_numbers<[2], [1], [1], [2], [0, 0, 0, 1, 1, 2], [0], [0]>} : vector<8x8x8xbf16>, vector<8x8x8xbf16>, vector<8x8x8xf32> -> vector<8x8x8xf32>
    "tpu.trace_stop"() : () -> ()
    %246 = vector.shape_cast %245 : vector<8x8x8xf32> to vector<2x4x8x8xf32>
    %247 = vector.extract_strided_slice %246 {offsets = [0, 0, 0, 0], sizes = [2, 1, 8, 8], strides = [1, 1, 1, 1]} : vector<2x4x8x8xf32> to vector<2x1x8x8xf32>
    %248 = vector.shape_cast %247 : vector<2x1x8x8xf32> to vector<2x8x8xf32>
    %249 = vector.extract_strided_slice %246 {offsets = [0, 1, 0, 0], sizes = [2, 1, 8, 8], strides = [1, 1, 1, 1]} : vector<2x4x8x8xf32> to vector<2x1x8x8xf32>
    %250 = vector.shape_cast %249 : vector<2x1x8x8xf32> to vector<2x8x8xf32>
    %251 = vector.extract_strided_slice %246 {offsets = [0, 2, 0, 0], sizes = [2, 1, 8, 8], strides = [1, 1, 1, 1]} : vector<2x4x8x8xf32> to vector<2x1x8x8xf32>
    %252 = vector.shape_cast %251 : vector<2x1x8x8xf32> to vector<2x8x8xf32>
    %253 = vector.extract_strided_slice %246 {offsets = [0, 3, 0, 0], sizes = [2, 1, 8, 8], strides = [1, 1, 1, 1]} : vector<2x4x8x8xf32> to vector<2x1x8x8xf32>
    %254 = vector.shape_cast %253 : vector<2x1x8x8xf32> to vector<2x8x8xf32>
    %255 = tpu.concatenate %248, %250, %252, %254 in 2 : vector<2x8x8xf32>, vector<2x8x8xf32>, vector<2x8x8xf32>, vector<2x8x8xf32> -> vector<2x8x32xf32>
    %256 = vector.shape_cast %255 : vector<2x8x32xf32> to vector<16x32xf32>
    %257 = arith.truncf %256 : vector<16x32xf32> to vector<16x32xbf16>
    %c0_98 = arith.constant 0 : index
    %c0_99 = arith.constant 0 : index
    %c0_100 = arith.constant 0 : index
    %258 = vector.load %arg14[%c0_98, %c0_99, %c0_100] : memref<1x32x32xbf16, #tpu.memory_space<vmem>>, vector<1x32x32xbf16>
    %259 = vector.shape_cast %258 : vector<1x32x32xbf16> to vector<32x32xbf16>
    %cst_101 = arith.constant dense<0.000000e+00> : vector<16x32xf32>
    %260 = tpu.matmul %257, %259, %cst_101 {dimension_numbers = #tpu.dot_dimension_numbers<[1], [0], [0], [1], [0, 0, 1, 1], [], []>} : vector<16x32xbf16>, vector<32x32xbf16>, vector<16x32xf32> -> vector<16x32xf32>
    %c0_102 = arith.constant 0 : index
    %c0_103 = arith.constant 0 : index
    %c0_104 = arith.constant 0 : index
    %261 = vector.load %arg15[%c0_102, %c0_103, %c0_104] : memref<1x1x32xf32, #tpu.memory_space<vmem>>, vector<1x1x32xf32>
    %262 = vector.shape_cast %261 : vector<1x1x32xf32> to vector<1x32xf32>
    %263 = vector.broadcast %262 : vector<1x32xf32> to vector<16x32xf32>
    %264 = arith.addf %260, %263 : vector<16x32xf32>
    %265 = arith.addf %264, %142 : vector<16x32xf32>
    %c0_105 = arith.constant 0 : index
    %c2_106 = arith.constant 2 : index
    %c0_107 = arith.constant 0 : index
    %266 = vector.load %arg6[%c0_105, %c2_106, %c0_107] : memref<1x3x32xf32, #tpu.memory_space<vmem>>, vector<1x1x32xf32>
    %267 = vector.shape_cast %266 : vector<1x1x32xf32> to vector<1x32xf32>
    %c0_108 = arith.constant 0 : index
    %c2_109 = arith.constant 2 : index
    %c0_110 = arith.constant 0 : index
    %268 = vector.load %arg7[%c0_108, %c2_109, %c0_110] : memref<1x3x32xf32, #tpu.memory_space<vmem>>, vector<1x1x32xf32>
    %269 = vector.shape_cast %268 : vector<1x1x32xf32> to vector<1x32xf32>
    %cst_111 = arith.constant dense<0.000000e+00> : vector<16xf32>
    %270 = vector.multi_reduction <add>, %265, %cst_111 [1] : vector<16x32xf32> to vector<16xf32>
    %271 = vector.shape_cast %270 : vector<16xf32> to vector<16x1xf32>
    %cst_112 = arith.constant 3.200000e+01 : f32
    %272 = vector.broadcast %cst_112 : f32 to vector<16x1xf32>
    %273 = arith.divf %271, %272 : vector<16x1xf32>
    %274 = vector.broadcast %273 : vector<16x1xf32> to vector<16x32xf32>
    %275 = arith.subf %265, %274 : vector<16x32xf32>
    %276 = arith.mulf %275, %275 : vector<16x32xf32>
    %cst_113 = arith.constant dense<0.000000e+00> : vector<16xf32>
    %277 = vector.multi_reduction <add>, %276, %cst_113 [1] : vector<16x32xf32> to vector<16xf32>
    %278 = vector.shape_cast %277 : vector<16xf32> to vector<16x1xf32>
    %cst_114 = arith.constant 3.200000e+01 : f32
    %279 = vector.broadcast %cst_114 : f32 to vector<16x1xf32>
    %280 = arith.divf %278, %279 : vector<16x1xf32>
    %281 = vector.broadcast %273 : vector<16x1xf32> to vector<16x32xf32>
    %282 = arith.subf %265, %281 : vector<16x32xf32>
    %cst_115 = arith.constant 9.99999997E-7 : f32
    %283 = vector.broadcast %cst_115 : f32 to vector<16x1xf32>
    %284 = arith.addf %280, %283 : vector<16x1xf32>
    %285 = math.rsqrt %284 : vector<16x1xf32>
    %286 = vector.broadcast %285 : vector<16x1xf32> to vector<16x32xf32>
    %287 = arith.mulf %282, %286 : vector<16x32xf32>
    %288 = vector.broadcast %267 : vector<1x32xf32> to vector<16x32xf32>
    %289 = arith.mulf %287, %288 : vector<16x32xf32>
    %290 = vector.broadcast %269 : vector<1x32xf32> to vector<16x32xf32>
    %291 = arith.addf %289, %290 : vector<16x32xf32>
    %292 = arith.truncf %291 : vector<16x32xf32> to vector<16x32xbf16>
    %c0_116 = arith.constant 0 : index
    %c0_117 = arith.constant 0 : index
    %c0_118 = arith.constant 0 : index
    %293 = vector.load %arg16[%c0_116, %c0_117, %c0_118] : memref<1x32x64xbf16, #tpu.memory_space<vmem>>, vector<1x32x64xbf16>
    %294 = vector.shape_cast %293 : vector<1x32x64xbf16> to vector<32x64xbf16>
    %cst_119 = arith.constant dense<0.000000e+00> : vector<16x64xf32>
    %295 = tpu.matmul %292, %294, %cst_119 {dimension_numbers = #tpu.dot_dimension_numbers<[1], [0], [0], [1], [0, 0, 1, 1], [], []>} : vector<16x32xbf16>, vector<32x64xbf16>, vector<16x64xf32> -> vector<16x64xf32>
    %c0_120 = arith.constant 0 : index
    %c0_121 = arith.constant 0 : index
    %c0_122 = arith.constant 0 : index
    %296 = vector.load %arg17[%c0_120, %c0_121, %c0_122] : memref<1x1x64xf32, #tpu.memory_space<vmem>>, vector<1x1x64xf32>
    %297 = vector.shape_cast %296 : vector<1x1x64xf32> to vector<1x64xf32>
    %298 = vector.broadcast %297 : vector<1x64xf32> to vector<16x64xf32>
    %299 = arith.addf %295, %298 : vector<16x64xf32>
    %cst_123 = arith.constant 0.000000e+00 : f32
    %300 = vector.broadcast %cst_123 : f32 to vector<16x64xf32>
    %301 = arith.maximumf %299, %300 : vector<16x64xf32>
    %302 = arith.truncf %301 : vector<16x64xf32> to vector<16x64xbf16>
    %c0_124 = arith.constant 0 : index
    %c0_125 = arith.constant 0 : index
    %c0_126 = arith.constant 0 : index
    %303 = vector.load %arg18[%c0_124, %c0_125, %c0_126] : memref<1x64x32xbf16, #tpu.memory_space<vmem>>, vector<1x64x32xbf16>
    %304 = vector.shape_cast %303 : vector<1x64x32xbf16> to vector<64x32xbf16>
    %cst_127 = arith.constant dense<0.000000e+00> : vector<16x32xf32>
    %305 = tpu.matmul %302, %304, %cst_127 {dimension_numbers = #tpu.dot_dimension_numbers<[1], [0], [0], [1], [0, 0, 1, 1], [], []>} : vector<16x64xbf16>, vector<64x32xbf16>, vector<16x32xf32> -> vector<16x32xf32>
    %c0_128 = arith.constant 0 : index
    %c0_129 = arith.constant 0 : index
    %c0_130 = arith.constant 0 : index
    %306 = vector.load %arg19[%c0_128, %c0_129, %c0_130] : memref<1x1x32xf32, #tpu.memory_space<vmem>>, vector<1x1x32xf32>
    %307 = vector.shape_cast %306 : vector<1x1x32xf32> to vector<1x32xf32>
    %308 = vector.broadcast %307 : vector<1x32xf32> to vector<16x32xf32>
    %309 = arith.addf %305, %308 : vector<16x32xf32>
    %310 = arith.addf %309, %265 : vector<16x32xf32>
    %c1_i32 = arith.constant 1 : i32
    %311 = arith.cmpi ne, %arg1, %c1_i32 : i32
    %312 = arith.extui %311 : i1 to i32
    %c0_i32_131 = arith.constant 0 : i32
    %313 = arith.cmpi ne, %312, %c0_i32_131 : i32
    scf.if %313 {
      %317 = vector.shape_cast %310 : vector<16x32xf32> to vector<2x8x32xf32>
      %c0_134 = arith.constant 0 : index
      %c0_135 = arith.constant 0 : index
      %c0_136 = arith.constant 0 : index
      %318 = vector.load %arg22[%c0_134, %c0_135, %c0_136] : memref<2x8x32xf32, #tpu.memory_space<vmem>>, vector<2x8x32xf32>
      tpu.vector_store %arg22[%c0_134, %c0_135, %c0_136], %317 {strides = array<i32>} : memref<2x8x32xf32, #tpu.memory_space<vmem>>, vector<2x8x32xf32>,
    } else {
    }
    %c1_i32_132 = arith.constant 1 : i32
    %314 = arith.cmpi eq, %arg1, %c1_i32_132 : i32
    %315 = arith.extui %314 : i1 to i32
    %c0_i32_133 = arith.constant 0 : i32
    %316 = arith.cmpi ne, %315, %c0_i32_133 : i32
    scf.if %316 {
      %c0_134 = arith.constant 0 : index
      %c0_135 = arith.constant 0 : index
      %317 = vector.load %arg20[%c0_134, %c0_135] : memref<1x32xf32, #tpu.memory_space<vmem>>, vector<1x32xf32>
      %c0_136 = arith.constant 0 : index
      %c0_137 = arith.constant 0 : index
      %318 = vector.load %arg21[%c0_136, %c0_137] : memref<1x32xf32, #tpu.memory_space<vmem>>, vector<1x32xf32>
      %cst_138 = arith.constant dense<0.000000e+00> : vector<16xf32>
      %319 = vector.multi_reduction <add>, %310, %cst_138 [1] : vector<16x32xf32> to vector<16xf32>
      %320 = vector.shape_cast %319 : vector<16xf32> to vector<16x1xf32>
      %cst_139 = arith.constant 3.200000e+01 : f32
      %321 = vector.broadcast %cst_139 : f32 to vector<16x1xf32>
      %322 = arith.divf %320, %321 : vector<16x1xf32>
      %323 = vector.broadcast %322 : vector<16x1xf32> to vector<16x32xf32>
      %324 = arith.subf %310, %323 : vector<16x32xf32>
      %325 = arith.mulf %324, %324 : vector<16x32xf32>
      %cst_140 = arith.constant dense<0.000000e+00> : vector<16xf32>
      %326 = vector.multi_reduction <add>, %325, %cst_140 [1] : vector<16x32xf32> to vector<16xf32>
      %327 = vector.shape_cast %326 : vector<16xf32> to vector<16x1xf32>
      %cst_141 = arith.constant 3.200000e+01 : f32
      %328 = vector.broadcast %cst_141 : f32 to vector<16x1xf32>
      %329 = arith.divf %327, %328 : vector<16x1xf32>
      %330 = vector.broadcast %322 : vector<16x1xf32> to vector<16x32xf32>
      %331 = arith.subf %310, %330 : vector<16x32xf32>
      %cst_142 = arith.constant 9.99999997E-7 : f32
      %332 = vector.broadcast %cst_142 : f32 to vector<16x1xf32>
      %333 = arith.addf %329, %332 : vector<16x1xf32>
      %334 = math.rsqrt %333 : vector<16x1xf32>
      %335 = vector.broadcast %334 : vector<16x1xf32> to vector<16x32xf32>
      %336 = arith.mulf %331, %335 : vector<16x32xf32>
      %337 = vector.broadcast %317 : vector<1x32xf32> to vector<16x32xf32>
      %338 = arith.mulf %336, %337 : vector<16x32xf32>
      %339 = vector.broadcast %318 : vector<1x32xf32> to vector<16x32xf32>
      %340 = arith.addf %338, %339 : vector<16x32xf32>
      %341 = vector.shape_cast %340 : vector<16x32xf32> to vector<2x8x32xf32>
      %c0_143 = arith.constant 0 : index
      %c0_144 = arith.constant 0 : index
      %c0_145 = arith.constant 0 : index
      %342 = vector.load %arg22[%c0_143, %c0_144, %c0_145] : memref<2x8x32xf32, #tpu.memory_space<vmem>>, vector<2x8x32xf32>
      tpu.vector_store %arg22[%c0_143, %c0_144, %c0_145], %341 {strides = array<i32>} : memref<2x8x32xf32, #tpu.memory_space<vmem>>, vector<2x8x32xf32>,
      %343 = vector.extract_strided_slice %242 {offsets = [0, 0, 0, 0], sizes = [2, 1, 8, 8], strides = [1, 1, 1, 1]} : vector<2x4x8x8xf32> to vector<2x1x8x8xf32>
      %344 = vector.shape_cast %343 : vector<2x1x8x8xf32> to vector<2x8x8xf32>
      %c0_146 = arith.constant 0 : index
      %c0_147 = arith.constant 0 : index
      %c0_148 = arith.constant 0 : index
      %345 = vector.load %arg23[%c0_146, %c0_147, %c0_148] : memref<2x8x8xf32, #tpu.memory_space<vmem>>, vector<2x8x8xf32>
      tpu.vector_store %arg23[%c0_146, %c0_147, %c0_148], %344 {strides = array<i32>} : memref<2x8x8xf32, #tpu.memory_space<vmem>>, vector<2x8x8xf32>,
    } else {
    }
    return
  }
  func.func @transform_0(%arg0: i32, %arg1: i32) -> (i32, i32, i32) {
    %c0_i32 = arith.constant 0 : i32
    %c0_i32_0 = arith.constant 0 : i32
    %c0_i32_1 = arith.constant 0 : i32
    return %arg0, %c0_i32, %c0_i32_0 : i32, i32, i32
  }
  func.func @transform_1(%arg0: i32, %arg1: i32) -> (i32, i32, i32) {
    %c0_i32 = arith.constant 0 : i32
    %c0_i32_0 = arith.constant 0 : i32
    %c0_i32_1 = arith.constant 0 : i32
    return %arg0, %c0_i32, %c0_i32_0 : i32, i32, i32
  }
  func.func @transform_2(%arg0: i32, %arg1: i32) -> (i32, i32, i32) {
    %c0_i32 = arith.constant 0 : i32
    %c0_i32_0 = arith.constant 0 : i32
    %c0_i32_1 = arith.constant 0 : i32
    return %arg0, %c0_i32, %c0_i32_0 : i32, i32, i32
  }
  func.func @transform_3(%arg0: i32, %arg1: i32) -> (i32, i32, i32) {
    %c0_i32 = arith.constant 0 : i32
    %c0_i32_0 = arith.constant 0 : i32
    %c0_i32_1 = arith.constant 0 : i32
    return %arg0, %c0_i32, %c0_i32_0 : i32, i32, i32
  }
  func.func @transform_4(%arg0: i32, %arg1: i32) -> (i32, i32, i32) {
    %c0_i32 = arith.constant 0 : i32
    %c0_i32_0 = arith.constant 0 : i32
    %c0_i32_1 = arith.constant 0 : i32
    return %arg1, %c0_i32, %c0_i32_0 : i32, i32, i32
  }
  func.func @transform_5(%arg0: i32, %arg1: i32) -> (i32, i32, i32) {
    %c0_i32 = arith.constant 0 : i32
    %c0_i32_0 = arith.constant 0 : i32
    %c0_i32_1 = arith.constant 0 : i32
    return %arg1, %c0_i32, %c0_i32_0 : i32, i32, i32
  }
  func.func @transform_6(%arg0: i32, %arg1: i32) -> (i32, i32, i32, i32) {
    %c0_i32 = arith.constant 0 : i32
    %c0_i32_0 = arith.constant 0 : i32
    %c0_i32_1 = arith.constant 0 : i32
    %c0_i32_2 = arith.constant 0 : i32
    return %arg1, %c0_i32, %c0_i32_0, %c0_i32_1 : i32, i32, i32, i32
  }
  func.func @transform_7(%arg0: i32, %arg1: i32) -> (i32, i32, i32) {
    %c0_i32 = arith.constant 0 : i32
    %c0_i32_0 = arith.constant 0 : i32
    %c0_i32_1 = arith.constant 0 : i32
    return %arg1, %c0_i32, %c0_i32_0 : i32, i32, i32
  }
  func.func @transform_8(%arg0: i32, %arg1: i32) -> (i32, i32, i32) {
    %c0_i32 = arith.constant 0 : i32
    %c0_i32_0 = arith.constant 0 : i32
    %c0_i32_1 = arith.constant 0 : i32
    return %arg1, %c0_i32, %c0_i32_0 : i32, i32, i32
  }
  func.func @transform_9(%arg0: i32, %arg1: i32) -> (i32, i32, i32) {
    %c0_i32 = arith.constant 0 : i32
    %c0_i32_0 = arith.constant 0 : i32
    %c0_i32_1 = arith.constant 0 : i32
    return %arg1, %c0_i32, %c0_i32_0 : i32, i32, i32
  }
  func.func @transform_10(%arg0: i32, %arg1: i32) -> (i32, i32, i32, i32) {
    %c0_i32 = arith.constant 0 : i32
    %c0_i32_0 = arith.constant 0 : i32
    %c0_i32_1 = arith.constant 0 : i32
    %c0_i32_2 = arith.constant 0 : i32
    return %arg1, %c0_i32, %c0_i32_0, %c0_i32_1 : i32, i32, i32, i32
  }
  func.func @transform_11(%arg0: i32, %arg1: i32) -> (i32, i32, i32) {
    %c0_i32 = arith.constant 0 : i32
    %c0_i32_0 = arith.constant 0 : i32
    %c0_i32_1 = arith.constant 0 : i32
    return %arg1, %c0_i32, %c0_i32_0 : i32, i32, i32
  }
  func.func @transform_12(%arg0: i32, %arg1: i32) -> (i32, i32, i32) {
    %c0_i32 = arith.constant 0 : i32
    %c0_i32_0 = arith.constant 0 : i32
    %c0_i32_1 = arith.constant 0 : i32
    return %arg1, %c0_i32, %c0_i32_0 : i32, i32, i32
  }
  func.func @transform_13(%arg0: i32, %arg1: i32) -> (i32, i32, i32) {
    %c0_i32 = arith.constant 0 : i32
    %c0_i32_0 = arith.constant 0 : i32
    %c0_i32_1 = arith.constant 0 : i32
    return %arg1, %c0_i32, %c0_i32_0 : i32, i32, i32
  }
  func.func @transform_14(%arg0: i32, %arg1: i32) -> (i32, i32, i32) {
    %c0_i32 = arith.constant 0 : i32
    %c0_i32_0 = arith.constant 0 : i32
    %c0_i32_1 = arith.constant 0 : i32
    return %arg1, %c0_i32, %c0_i32_0 : i32, i32, i32
  }
  func.func @transform_15(%arg0: i32, %arg1: i32) -> (i32, i32, i32) {
    %c0_i32 = arith.constant 0 : i32
    %c0_i32_0 = arith.constant 0 : i32
    %c0_i32_1 = arith.constant 0 : i32
    return %arg1, %c0_i32, %c0_i32_0 : i32, i32, i32
  }
  func.func @transform_16(%arg0: i32, %arg1: i32) -> (i32, i32, i32) {
    %c0_i32 = arith.constant 0 : i32
    %c0_i32_0 = arith.constant 0 : i32
    %c0_i32_1 = arith.constant 0 : i32
    return %arg1, %c0_i32, %c0_i32_0 : i32, i32, i32
  }
  func.func @transform_17(%arg0: i32, %arg1: i32) -> (i32, i32, i32) {
    %c0_i32 = arith.constant 0 : i32
    %c0_i32_0 = arith.constant 0 : i32
    %c0_i32_1 = arith.constant 0 : i32
    return %arg1, %c0_i32, %c0_i32_0 : i32, i32, i32
  }
  func.func @transform_18(%arg0: i32, %arg1: i32) -> (i32, i32) {
    %c0_i32 = arith.constant 0 : i32
    %c0_i32_0 = arith.constant 0 : i32
    %c0_i32_1 = arith.constant 0 : i32
    return %c0_i32, %c0_i32_0 : i32, i32
  }
  func.func @transform_19(%arg0: i32, %arg1: i32) -> (i32, i32) {
    %c0_i32 = arith.constant 0 : i32
    %c0_i32_0 = arith.constant 0 : i32
    %c0_i32_1 = arith.constant 0 : i32
    return %c0_i32, %c0_i32_0 : i32, i32
  }
  func.func @transform_20(%arg0: i32, %arg1: i32) -> (i32, i32, i32) {
    %c0_i32 = arith.constant 0 : i32
    %c0_i32_0 = arith.constant 0 : i32
    %c0_i32_1 = arith.constant 0 : i32
    return %arg0, %c0_i32, %c0_i32_0 : i32, i32, i32
  }
  func.func @transform_21(%arg0: i32, %arg1: i32) -> (i32, i32, i32) {
    %c0_i32 = arith.constant 0 : i32
    %c0_i32_0 = arith.constant 0 : i32
    %c0_i32_1 = arith.constant 0 : i32
    return %arg0, %c0_i32, %c0_i32_0 : i32, i32, i32
  }
}

</mosaic_0001>

<llo_original>
// kernel: tpu_custom_call.1
$region0: #{tpu_custom_call.1}
  #allocation0 [shape = 'u32[]', space=smem, size = 0x4, offset = 0x4, fixed_abs, tag = 'smem constant byte address 0x4 - core index']
  #allocation1 [shape = 'u32[144,128]{1,0:T(1,128)}', space=vmem, size = 0x12000, scoped, tag = 'internal scratch']
  %s0 = inlined_call_operand.hbm [shape: f32[2,8,32], index: 0, kind: input, shape index: {}]
  %s1 = inlined_call_operand.hbm [shape: bf16[2,8,32], index: 1, kind: input, shape index: {}]
  %s2 = inlined_call_operand.hbm [shape: f32[2,1,8], index: 2, kind: input, shape index: {}]
  %s3 = inlined_call_operand.hbm [shape: f32[2,1,8], index: 3, kind: input, shape index: {}]
  %s4 = inlined_call_operand.vmem [shape: f32[2,3,32], index: 4, kind: input, shape index: {}]
  %s5 = inlined_call_operand.vmem [shape: f32[2,3,32], index: 5, kind: input, shape index: {}]
  %s6 = inlined_call_operand.vmem [shape: bf16[2,3,32,32], index: 6, kind: input, shape index: {}]
  %s7 = inlined_call_operand.vmem [shape: f32[2,3,32], index: 7, kind: input, shape index: {}]
  %s8 = inlined_call_operand.vmem [shape: bf16[2,32,32], index: 8, kind: input, shape index: {}]
  %s9 = inlined_call_operand.hbm [shape: f32[2,1,32], index: 9, kind: input, shape index: {}]
  %s10 = inlined_call_operand.hbm [shape: bf16[2,3,32,32], index: 10, kind: input, shape index: {}]
  %s11 = inlined_call_operand.vmem [shape: f32[2,3,32], index: 11, kind: input, shape index: {}]
  %s12 = inlined_call_operand.vmem [shape: bf16[2,32,32], index: 12, kind: input, shape index: {}]
  %s13 = inlined_call_operand.vmem [shape: f32[2,1,32], index: 13, kind: input, shape index: {}]
  %s14 = inlined_call_operand.hbm [shape: bf16[2,32,64], index: 14, kind: input, shape index: {}]
  %s15 = inlined_call_operand.vmem [shape: f32[2,1,64], index: 15, kind: input, shape index: {}]
  %s16 = inlined_call_operand.vmem [shape: bf16[2,64,32], index: 16, kind: input, shape index: {}]
  %s17 = inlined_call_operand.vmem [shape: f32[2,1,32], index: 17, kind: input, shape index: {}]
  %s18 = inlined_call_operand.vmem [shape: f32[1,32], index: 18, kind: input, shape index: {}]
  %s19 = inlined_call_operand.vmem [shape: f32[1,32], index: 19, kind: input, shape index: {}]
  %s20 = inlined_call_operand.hbm [shape: f32[2,8,32], index: 20, kind: output, shape index: {0}]
  %s21 = inlined_call_operand.hbm [shape: f32[2,8,8], index: 21, kind: output, shape index: {1}]
  %22 = xla_tuple %s20, %s21
  %s23 = sld [smem:[#allocation0]]
  $region161: #{tpu_custom_call.1} parent=0
    _
  %s25 = ssub.s32 1, %s23
  %s26 = scalar_select 0, %s25, %s23
  $region1: #{tpu_custom_call.1} parent=0
    #allocation2 [shape = 'u8[8192]{0}', space=vmem, size = 0x2000, scoped, tag = 'input window, operand 0, single buffered']
    #allocation3 [shape = 's32[2]{0}', space=sflag, size = 0x8, scoped, tag = 'scoped memory for tpu_custom_call.1']
    #allocation4 [shape = 's32[2]{0}', space=sflag, size = 0x8, scoped, tag = 'scoped memory for tpu_custom_call.1']
    #allocation5 [shape = 'u8[4096]{0}', space=vmem, size = 0x1000, scoped, tag = 'input window, operand 1, single buffered']
    #allocation6 [shape = 's32[1]{0}', space=sflag, size = 0x4, scoped, tag = 'scoped memory for tpu_custom_call.1']
    #allocation7 [shape = 'u8[1024]{0}', space=vmem, size = 0x400, scoped, tag = 'input window, operand 2, single buffered']
    #allocation8 [shape = 'u8[1024]{0}', space=vmem, size = 0x400, scoped, tag = 'input window, operand 3, single buffered']
    #allocation9 [shape = 's32[1]{0}', space=sflag, size = 0x4, scoped, tag = 'scoped memory for tpu_custom_call.1']
    #allocation10 [shape = 'u8[1024]{0}', space=vmem, size = 0x400, scoped, tag = 'input window, operand 9']
    #allocation11 [shape = 'u8[49152]{0}', space=vmem, size = 0xc000, scoped, tag = 'input window, operand 10']
    #allocation12 [shape = 'u8[16384]{0}', space=vmem, size = 0x4000, scoped, tag = 'input window, operand 14']
    #allocation13 [shape = 'u8[8192]{0}', space=vmem, size = 0x2000, scoped, tag = 'output window, operand 0, single buffered']
    #allocation14 [shape = 'u8[8192]{0}', space=vmem, size = 0x2000, scoped, tag = 'output window, operand 1, single buffered']
    #allocation15 [shape = 's32[1]{0}', space=sflag, size = 0x4, scoped, tag = 'scoped memory for tpu_custom_call.1']
    %27 = vsyncpa [#allocation3], 0
    %28 = vsyncpa [#allocation6], 0
    %29 = vsyncpa [#allocation9], 0
    %30 = vsyncpa [#allocation4], 0
    %31 = vsyncpa [#allocation15], 0
    loop: start=0, step=1, limit=4
    $region2: #{tpu_custom_call.1} parent=1 // loop_pre_header
      _
    $region3: #{tpu_custom_call.1} parent=1 // loop_header
      %s33 = sphi 0, %s37
      %p34 = scmp.ge.s32.totalorder %s33, 4
      %s40 = sphi 0, %s52
      %s41 = sphi 0, %s48
      %s42 = sphi 0, %s40
      %s43 = sphi 0, %s41
      %s44 = sphi 0, %s42
      %s45 = sphi 0, %s43
      %s55 = sphi 0, %s57
      %s58 = sphi 0, %s55
      %s59 = sphi 0, %s58
      %s75 = sphi 0, %s59
      %s81 = sphi 0, %s83
      %s84 = sphi 0, %s81
      %s85 = sphi 0, %s84
      %s101 = sphi 0, %s85
      %s107 = sphi 0, %s109
      %s110 = sphi 0, %s107
      %s111 = sphi 0, %s110
      %s127 = sphi 0, %s111
      %s133 = sphi 0, %s135
      %s136 = sphi 0, %s133
      %s137 = sphi 0, %s136
      %s153 = sphi 0, %s137
      %s159 = sphi 0, %s161
      %s162 = sphi 0, %s159
      %s163 = sphi 0, %s162
      %s179 = sphi 0, %s163
      %s185 = sphi 0, %s187
      %s188 = sphi 0, %s185
      %s189 = sphi 0, %s188
      %s205 = sphi 0, %s189
      %s211 = sphi 0, %s213
      %s214 = sphi 0, %s211
      %s215 = sphi 0, %s214
      %s231 = sphi 0, %s215
      %s237 = sphi 0, %s239
      %s240 = sphi 0, %s237
      %s241 = sphi 0, %s240
      %s257 = sphi 0, %s241
      %s263 = sphi 0, %s265
      %s266 = sphi 0, %s263
      %s267 = sphi 0, %s266
      %s283 = sphi 0, %s267
      %s289 = sphi 0, %s291
      %s292 = sphi 0, %s289
      %s293 = sphi 0, %s292
      %s309 = sphi 0, %s293
      %s315 = sphi 0, %s317
      %s318 = sphi 0, %s315
      %s319 = sphi 0, %s318
      %s335 = sphi 0, %s319
      %s341 = sphi 0, %s343
      %s344 = sphi 0, %s341
      %s345 = sphi 0, %s344
      %s361 = sphi 0, %s345
      %s367 = sphi 0, %s369
      %s370 = sphi 0, %s367
      %s371 = sphi 0, %s370
      %s387 = sphi 0, %s371
      %s393 = sphi 0, %s395
      %s396 = sphi 0, %s393
      %s397 = sphi 0, %s396
      %s413 = sphi 0, %s397
      %s419 = sphi 0, %s421
      %s422 = sphi 0, %s419
      %s423 = sphi 0, %s422
      %s439 = sphi 0, %s423
      %s445 = sphi 0, %s447
      %s448 = sphi 0, %s445
      %s449 = sphi 0, %s448
      %s465 = sphi 0, %s449
      %s471 = sphi 0, %s473
      %s474 = sphi 0, %s471
      %s475 = sphi 0, %s474
      %s491 = sphi 0, %s475
      %s497 = sphi 0, %s499
      %s500 = sphi 0, %s497
      %s501 = sphi 0, %s500
      %s517 = sphi 0, %s501
      %s521 = sphi 0, %s521
      %s523 = sphi 0, %s521
      %s524 = sphi 0, %s523
      %s538 = sphi 0, %s524
      %s542 = sphi 0, %s542
      %s544 = sphi 0, %s542
      %s545 = sphi 0, %s544
      %s559 = sphi 0, %s545
      %s565 = sphi 0, %s567
      %s568 = sphi 0, %s565
      %s569 = sphi 0, %s568
      %s585 = sphi 0, %s569
      %s591 = sphi 0, %s593
      %s594 = sphi 0, %s591
      %s595 = sphi 0, %s594
      %s611 = sphi 0, %s595
    $region4: #{tpu_custom_call.1} parent=1 // loop_header_branch
      %36 = sbr.rel (%p34) target = $region8
    $region5: #{tpu_custom_call.1} parent=1 // loop_body
      %s38 = ssub.s32 %s33, 1
      %s39 = ssub.s32 %s33, 2
      %s46 = sadd.s32 1, %s41
      %p47 = scmp.ge.s32.totalorder %s46, 2
      %s48 = scalar_select %p47, 0, %s46
      %s49 = sadd.s32 1, %s40
      %s50 = scalar_select %p47, %s49, %s40
      %p51 = scmp.ge.s32.totalorder %s50, 1
      %s52 = scalar_select %p51, 0, %s50
      %s53 = ssub.s32 %s40, %s52
      %p54 = scmp.eq.s32.totalorder %s53, 0
      %s56 = sadd.s32 %s55, 1
      %s57 = scalar_select %p54, %s55, %s56
      %p60 = pneg %p54
      %p61 = scmp.eq.s32.totalorder %s33, 1
      %p62 = por %p60, %p61
      %p63 = scmp.ne.s32.totalorder %s55, %s58
      %p64 = scmp.eq.s32.totalorder %s33, 0
      %p65 = por %p63, %p64
      %p66 = scmp.ne.s32.totalorder %s55, %s58
      %p67 = scmp.eq.s32.totalorder %s38, 1
      %p68 = por %p66, %p67
      %p69 = scmp.ne.s32.totalorder %s58, %s59
      %p70 = scmp.eq.s32.totalorder %s38, 0
      %p71 = por %p69, %p70
      %p72 = scmp.ne.s32.totalorder %s58, %s59
      %p73 = scmp.eq.s32.totalorder %s39, 1
      %p74 = por %p72, %p73
      %p76 = scmp.ne.s32.totalorder %s59, %s75
      %p77 = scmp.eq.s32.totalorder %s39, 0
      %p78 = por %p76, %p77
      %s79 = ssub.s32 %s40, %s52
      %p80 = scmp.eq.s32.totalorder %s79, 0
      %s82 = sadd.s32 %s81, 1
      %s83 = scalar_select %p80, %s81, %s82
      %p86 = pneg %p80
      %p87 = scmp.eq.s32.totalorder %s33, 1
      %p88 = por %p86, %p87
      %p89 = scmp.ne.s32.totalorder %s81, %s84
      %p90 = scmp.eq.s32.totalorder %s33, 0
      %p91 = por %p89, %p90
      %p92 = scmp.ne.s32.totalorder %s81, %s84
      %p93 = scmp.eq.s32.totalorder %s38, 1
      %p94 = por %p92, %p93
      %p95 = scmp.ne.s32.totalorder %s84, %s85
      %p96 = scmp.eq.s32.totalorder %s38, 0
      %p97 = por %p95, %p96
      %p98 = scmp.ne.s32.totalorder %s84, %s85
      %p99 = scmp.eq.s32.totalorder %s39, 1
      %p100 = por %p98, %p99
      %p102 = scmp.ne.s32.totalorder %s85, %s101
      %p103 = scmp.eq.s32.totalorder %s39, 0
      %p104 = por %p102, %p103
      %s105 = ssub.s32 %s40, %s52
      %p106 = scmp.eq.s32.totalorder %s105, 0
      %s108 = sadd.s32 %s107, 1
      %s109 = scalar_select %p106, %s107, %s108
      %p112 = pneg %p106
      %p113 = scmp.eq.s32.totalorder %s33, 1
      %p114 = por %p112, %p113
      %p115 = scmp.ne.s32.totalorder %s107, %s110
      %p116 = scmp.eq.s32.totalorder %s33, 0
      %p117 = por %p115, %p116
      %p118 = scmp.ne.s32.totalorder %s107, %s110
      %p119 = scmp.eq.s32.totalorder %s38, 1
      %p120 = por %p118, %p119
      %p121 = scmp.ne.s32.totalorder %s110, %s111
      %p122 = scmp.eq.s32.totalorder %s38, 0
      %p123 = por %p121, %p122
      %p124 = scmp.ne.s32.totalorder %s110, %s111
      %p125 = scmp.eq.s32.totalorder %s39, 1
      %p126 = por %p124, %p125
      %p128 = scmp.ne.s32.totalorder %s111, %s127
      %p129 = scmp.eq.s32.totalorder %s39, 0
      %p130 = por %p128, %p129
      %s131 = ssub.s32 %s40, %s52
      %p132 = scmp.eq.s32.totalorder %s131, 0
      %s134 = sadd.s32 %s133, 1
      %s135 = scalar_select %p132, %s133, %s134
      %p138 = pneg %p132
      %p139 = scmp.eq.s32.totalorder %s33, 1
      %p140 = por %p138, %p139
      %p141 = scmp.ne.s32.totalorder %s133, %s136
      %p142 = scmp.eq.s32.totalorder %s33, 0
      %p143 = por %p141, %p142
      %p144 = scmp.ne.s32.totalorder %s133, %s136
      %p145 = scmp.eq.s32.totalorder %s38, 1
      %p146 = por %p144, %p145
      %p147 = scmp.ne.s32.totalorder %s136, %s137
      %p148 = scmp.eq.s32.totalorder %s38, 0
      %p149 = por %p147, %p148
      %p150 = scmp.ne.s32.totalorder %s136, %s137
      %p151 = scmp.eq.s32.totalorder %s39, 1
      %p152 = por %p150, %p151
      %p154 = scmp.ne.s32.totalorder %s137, %s153
      %p155 = scmp.eq.s32.totalorder %s39, 0
      %p156 = por %p154, %p155
      %s157 = ssub.s32 %s41, %s48
      %p158 = scmp.eq.s32.totalorder %s157, 0
      %s160 = sadd.s32 %s159, 1
      %s161 = scalar_select %p158, %s159, %s160
      %p164 = pneg %p158
      %p165 = scmp.eq.s32.totalorder %s33, 1
      %p166 = por %p164, %p165
      %p167 = scmp.ne.s32.totalorder %s159, %s162
      %p168 = scmp.eq.s32.totalorder %s33, 0
      %p169 = por %p167, %p168
      %p170 = scmp.ne.s32.totalorder %s159, %s162
      %p171 = scmp.eq.s32.totalorder %s38, 1
      %p172 = por %p170, %p171
      %p173 = scmp.ne.s32.totalorder %s162, %s163
      %p174 = scmp.eq.s32.totalorder %s38, 0
      %p175 = por %p173, %p174
      %p176 = scmp.ne.s32.totalorder %s162, %s163
      %p177 = scmp.eq.s32.totalorder %s39, 1
      %p178 = por %p176, %p177
      %p180 = scmp.ne.s32.totalorder %s163, %s179
      %p181 = scmp.eq.s32.totalorder %s39, 0
      %p182 = por %p180, %p181
      %s183 = ssub.s32 %s41, %s48
      %p184 = scmp.eq.s32.totalorder %s183, 0
      %s186 = sadd.s32 %s185, 1
      %s187 = scalar_select %p184, %s185, %s186
      %p190 = pneg %p184
      %p191 = scmp.eq.s32.totalorder %s33, 1
      %p192 = por %p190, %p191
      %p193 = scmp.ne.s32.totalorder %s185, %s188
      %p194 = scmp.eq.s32.totalorder %s33, 0
      %p195 = por %p193, %p194
      %p196 = scmp.ne.s32.totalorder %s185, %s188
      %p197 = scmp.eq.s32.totalorder %s38, 1
      %p198 = por %p196, %p197
      %p199 = scmp.ne.s32.totalorder %s188, %s189
      %p200 = scmp.eq.s32.totalorder %s38, 0
      %p201 = por %p199, %p200
      %p202 = scmp.ne.s32.totalorder %s188, %s189
      %p203 = scmp.eq.s32.totalorder %s39, 1
      %p204 = por %p202, %p203
      %p206 = scmp.ne.s32.totalorder %s189, %s205
      %p207 = scmp.eq.s32.totalorder %s39, 0
      %p208 = por %p206, %p207
      %s209 = ssub.s32 %s41, %s48
      %p210 = scmp.eq.s32.totalorder %s209, 0
      %s212 = sadd.s32 %s211, 1
      %s213 = scalar_select %p210, %s211, %s212
      %p216 = pneg %p210
      %p217 = scmp.eq.s32.totalorder %s33, 1
      %p218 = por %p216, %p217
      %p219 = scmp.ne.s32.totalorder %s211, %s214
      %p220 = scmp.eq.s32.totalorder %s33, 0
      %p221 = por %p219, %p220
      %p222 = scmp.ne.s32.totalorder %s211, %s214
      %p223 = scmp.eq.s32.totalorder %s38, 1
      %p224 = por %p222, %p223
      %p225 = scmp.ne.s32.totalorder %s214, %s215
      %p226 = scmp.eq.s32.totalorder %s38, 0
      %p227 = por %p225, %p226
      %p228 = scmp.ne.s32.totalorder %s214, %s215
      %p229 = scmp.eq.s32.totalorder %s39, 1
      %p230 = por %p228, %p229
      %p232 = scmp.ne.s32.totalorder %s215, %s231
      %p233 = scmp.eq.s32.totalorder %s39, 0
      %p234 = por %p232, %p233
      %s235 = ssub.s32 %s41, %s48
      %p236 = scmp.eq.s32.totalorder %s235, 0
      %s238 = sadd.s32 %s237, 1
      %s239 = scalar_select %p236, %s237, %s238
      %p242 = pneg %p236
      %p243 = scmp.eq.s32.totalorder %s33, 1
      %p244 = por %p242, %p243
      %p245 = scmp.ne.s32.totalorder %s237, %s240
      %p246 = scmp.eq.s32.totalorder %s33, 0
      %p247 = por %p245, %p246
      %p248 = scmp.ne.s32.totalorder %s237, %s240
      %p249 = scmp.eq.s32.totalorder %s38, 1
      %p250 = por %p248, %p249
      %p251 = scmp.ne.s32.totalorder %s240, %s241
      %p252 = scmp.eq.s32.totalorder %s38, 0
      %p253 = por %p251, %p252
      %p254 = scmp.ne.s32.totalorder %s240, %s241
      %p255 = scmp.eq.s32.totalorder %s39, 1
      %p256 = por %p254, %p255
      %p258 = scmp.ne.s32.totalorder %s241, %s257
      %p259 = scmp.eq.s32.totalorder %s39, 0
      %p260 = por %p258, %p259
      %s261 = ssub.s32 %s41, %s48
      %p262 = scmp.eq.s32.totalorder %s261, 0
      %s264 = sadd.s32 %s263, 1
      %s265 = scalar_select %p262, %s263, %s264
      %p268 = pneg %p262
      %p269 = scmp.eq.s32.totalorder %s33, 1
      %p270 = por %p268, %p269
      %p271 = scmp.ne.s32.totalorder %s263, %s266
      %p272 = scmp.eq.s32.totalorder %s33, 0
      %p273 = por %p271, %p272
      %p274 = scmp.ne.s32.totalorder %s263, %s266
      %p275 = scmp.eq.s32.totalorder %s38, 1
      %p276 = por %p274, %p275
      %p277 = scmp.ne.s32.totalorder %s266, %s267
      %p278 = scmp.eq.s32.totalorder %s38, 0
      %p279 = por %p277, %p278
      %p280 = scmp.ne.s32.totalorder %s266, %s267
      %p281 = scmp.eq.s32.totalorder %s39, 1
      %p282 = por %p280, %p281
      %p284 = scmp.ne.s32.totalorder %s267, %s283
      %p285 = scmp.eq.s32.totalorder %s39, 0
      %p286 = por %p284, %p285
      %s287 = ssub.s32 %s41, %s48
      %p288 = scmp.eq.s32.totalorder %s287, 0
      %s290 = sadd.s32 %s289, 1
      %s291 = scalar_select %p288, %s289, %s290
      %p294 = pneg %p288
      %p295 = scmp.eq.s32.totalorder %s33, 1
      %p296 = por %p294, %p295
      %p297 = scmp.ne.s32.totalorder %s289, %s292
      %p298 = scmp.eq.s32.totalorder %s33, 0
      %p299 = por %p297, %p298
      %p300 = scmp.ne.s32.totalorder %s289, %s292
      %p301 = scmp.eq.s32.totalorder %s38, 1
      %p302 = por %p300, %p301
      %p303 = scmp.ne.s32.totalorder %s292, %s293
      %p304 = scmp.eq.s32.totalorder %s38, 0
      %p305 = por %p303, %p304
      %p306 = scmp.ne.s32.totalorder %s292, %s293
      %p307 = scmp.eq.s32.totalorder %s39, 1
      %p308 = por %p306, %p307
      %p310 = scmp.ne.s32.totalorder %s293, %s309
      %p311 = scmp.eq.s32.totalorder %s39, 0
      %p312 = por %p310, %p311
      %s313 = ssub.s32 %s41, %s48
      %p314 = scmp.eq.s32.totalorder %s313, 0
      %s316 = sadd.s32 %s315, 1
      %s317 = scalar_select %p314, %s315, %s316
      %p320 = pneg %p314
      %p321 = scmp.eq.s32.totalorder %s33, 1
      %p322 = por %p320, %p321
      %p323 = scmp.ne.s32.totalorder %s315, %s318
      %p324 = scmp.eq.s32.totalorder %s33, 0
      %p325 = por %p323, %p324
      %p326 = scmp.ne.s32.totalorder %s315, %s318
      %p327 = scmp.eq.s32.totalorder %s38, 1
      %p328 = por %p326, %p327
      %p329 = scmp.ne.s32.totalorder %s318, %s319
      %p330 = scmp.eq.s32.totalorder %s38, 0
      %p331 = por %p329, %p330
      %p332 = scmp.ne.s32.totalorder %s318, %s319
      %p333 = scmp.eq.s32.totalorder %s39, 1
      %p334 = por %p332, %p333
      %p336 = scmp.ne.s32.totalorder %s319, %s335
      %p337 = scmp.eq.s32.totalorder %s39, 0
      %p338 = por %p336, %p337
      %s339 = ssub.s32 %s41, %s48
      %p340 = scmp.eq.s32.totalorder %s339, 0
      %s342 = sadd.s32 %s341, 1
      %s343 = scalar_select %p340, %s341, %s342
      %p346 = pneg %p340
      %p347 = scmp.eq.s32.totalorder %s33, 1
      %p348 = por %p346, %p347
      %p349 = scmp.ne.s32.totalorder %s341, %s344
      %p350 = scmp.eq.s32.totalorder %s33, 0
      %p351 = por %p349, %p350
      %p352 = scmp.ne.s32.totalorder %s341, %s344
      %p353 = scmp.eq.s32.totalorder %s38, 1
      %p354 = por %p352, %p353
      %p355 = scmp.ne.s32.totalorder %s344, %s345
      %p356 = scmp.eq.s32.totalorder %s38, 0
      %p357 = por %p355, %p356
      %p358 = scmp.ne.s32.totalorder %s344, %s345
      %p359 = scmp.eq.s32.totalorder %s39, 1
      %p360 = por %p358, %p359
      %p362 = scmp.ne.s32.totalorder %s345, %s361
      %p363 = scmp.eq.s32.totalorder %s39, 0
      %p364 = por %p362, %p363
      %s365 = ssub.s32 %s41, %s48
      %p366 = scmp.eq.s32.totalorder %s365, 0
      %s368 = sadd.s32 %s367, 1
      %s369 = scalar_select %p366, %s367, %s368
      %p372 = pneg %p366
      %p373 = scmp.eq.s32.totalorder %s33, 1
      %p374 = por %p372, %p373
      %p375 = scmp.ne.s32.totalorder %s367, %s370
      %p376 = scmp.eq.s32.totalorder %s33, 0
      %p377 = por %p375, %p376
      %p378 = scmp.ne.s32.totalorder %s367, %s370
      %p379 = scmp.eq.s32.totalorder %s38, 1
      %p380 = por %p378, %p379
      %p381 = scmp.ne.s32.totalorder %s370, %s371
      %p382 = scmp.eq.s32.totalorder %s38, 0
      %p383 = por %p381, %p382
      %p384 = scmp.ne.s32.totalorder %s370, %s371
      %p385 = scmp.eq.s32.totalorder %s39, 1
      %p386 = por %p384, %p385
      %p388 = scmp.ne.s32.totalorder %s371, %s387
      %p389 = scmp.eq.s32.totalorder %s39, 0
      %p390 = por %p388, %p389
      %s391 = ssub.s32 %s41, %s48
      %p392 = scmp.eq.s32.totalorder %s391, 0
      %s394 = sadd.s32 %s393, 1
      %s395 = scalar_select %p392, %s393, %s394
      %p398 = pneg %p392
      %p399 = scmp.eq.s32.totalorder %s33, 1
      %p400 = por %p398, %p399
      %p401 = scmp.ne.s32.totalorder %s393, %s396
      %p402 = scmp.eq.s32.totalorder %s33, 0
      %p403 = por %p401, %p402
      %p404 = scmp.ne.s32.totalorder %s393, %s396
      %p405 = scmp.eq.s32.totalorder %s38, 1
      %p406 = por %p404, %p405
      %p407 = scmp.ne.s32.totalorder %s396, %s397
      %p408 = scmp.eq.s32.totalorder %s38, 0
      %p409 = por %p407, %p408
      %p410 = scmp.ne.s32.totalorder %s396, %s397
      %p411 = scmp.eq.s32.totalorder %s39, 1
      %p412 = por %p410, %p411
      %p414 = scmp.ne.s32.totalorder %s397, %s413
      %p415 = scmp.eq.s32.totalorder %s39, 0
      %p416 = por %p414, %p415
      %s417 = ssub.s32 %s41, %s48
      %p418 = scmp.eq.s32.totalorder %s417, 0
      %s420 = sadd.s32 %s419, 1
      %s421 = scalar_select %p418, %s419, %s420
      %p424 = pneg %p418
      %p425 = scmp.eq.s32.totalorder %s33, 1
      %p426 = por %p424, %p425
      %p427 = scmp.ne.s32.totalorder %s419, %s422
      %p428 = scmp.eq.s32.totalorder %s33, 0
      %p429 = por %p427, %p428
      %p430 = scmp.ne.s32.totalorder %s419, %s422
      %p431 = scmp.eq.s32.totalorder %s38, 1
      %p432 = por %p430, %p431
      %p433 = scmp.ne.s32.totalorder %s422, %s423
      %p434 = scmp.eq.s32.totalorder %s38, 0
      %p435 = por %p433, %p434
      %p436 = scmp.ne.s32.totalorder %s422, %s423
      %p437 = scmp.eq.s32.totalorder %s39, 1
      %p438 = por %p436, %p437
      %p440 = scmp.ne.s32.totalorder %s423, %s439
      %p441 = scmp.eq.s32.totalorder %s39, 0
      %p442 = por %p440, %p441
      %s443 = ssub.s32 %s41, %s48
      %p444 = scmp.eq.s32.totalorder %s443, 0
      %s446 = sadd.s32 %s445, 1
      %s447 = scalar_select %p444, %s445, %s446
      %p450 = pneg %p444
      %p451 = scmp.eq.s32.totalorder %s33, 1
      %p452 = por %p450, %p451
      %p453 = scmp.ne.s32.totalorder %s445, %s448
      %p454 = scmp.eq.s32.totalorder %s33, 0
      %p455 = por %p453, %p454
      %p456 = scmp.ne.s32.totalorder %s445, %s448
      %p457 = scmp.eq.s32.totalorder %s38, 1
      %p458 = por %p456, %p457
      %p459 = scmp.ne.s32.totalorder %s448, %s449
      %p460 = scmp.eq.s32.totalorder %s38, 0
      %p461 = por %p459, %p460
      %p462 = scmp.ne.s32.totalorder %s448, %s449
      %p463 = scmp.eq.s32.totalorder %s39, 1
      %p464 = por %p462, %p463
      %p466 = scmp.ne.s32.totalorder %s449, %s465
      %p467 = scmp.eq.s32.totalorder %s39, 0
      %p468 = por %p466, %p467
      %s469 = ssub.s32 %s41, %s48
      %p470 = scmp.eq.s32.totalorder %s469, 0
      %s472 = sadd.s32 %s471, 1
      %s473 = scalar_select %p470, %s471, %s472
      %p476 = pneg %p470
      %p477 = scmp.eq.s32.totalorder %s33, 1
      %p478 = por %p476, %p477
      %p479 = scmp.ne.s32.totalorder %s471, %s474
      %p480 = scmp.eq.s32.totalorder %s33, 0
      %p481 = por %p479, %p480
      %p482 = scmp.ne.s32.totalorder %s471, %s474
      %p483 = scmp.eq.s32.totalorder %s38, 1
      %p484 = por %p482, %p483
      %p485 = scmp.ne.s32.totalorder %s474, %s475
      %p486 = scmp.eq.s32.totalorder %s38, 0
      %p487 = por %p485, %p486
      %p488 = scmp.ne.s32.totalorder %s474, %s475
      %p489 = scmp.eq.s32.totalorder %s39, 1
      %p490 = por %p488, %p489
      %p492 = scmp.ne.s32.totalorder %s475, %s491
      %p493 = scmp.eq.s32.totalorder %s39, 0
      %p494 = por %p492, %p493
      %s495 = ssub.s32 %s41, %s48
      %p496 = scmp.eq.s32.totalorder %s495, 0
      %s498 = sadd.s32 %s497, 1
      %s499 = scalar_select %p496, %s497, %s498
      %p502 = pneg %p496
      %p503 = scmp.eq.s32.totalorder %s33, 1
      %p504 = por %p502, %p503
      %p505 = scmp.ne.s32.totalorder %s497, %s500
      %p506 = scmp.eq.s32.totalorder %s33, 0
      %p507 = por %p505, %p506
      %p508 = scmp.ne.s32.totalorder %s497, %s500
      %p509 = scmp.eq.s32.totalorder %s38, 1
      %p510 = por %p508, %p509
      %p511 = scmp.ne.s32.totalorder %s500, %s501
      %p512 = scmp.eq.s32.totalorder %s38, 0
      %p513 = por %p511, %p512
      %p514 = scmp.ne.s32.totalorder %s500, %s501
      %p515 = scmp.eq.s32.totalorder %s39, 1
      %p516 = por %p514, %p515
      %p518 = scmp.ne.s32.totalorder %s501, %s517
      %p519 = scmp.eq.s32.totalorder %s39, 0
      %p520 = por %p518, %p519
      %s522 = sadd.s32 %s521, 1
      %p525 = scmp.eq.s32.totalorder %s33, 1
      %p526 = scmp.ne.s32.totalorder %s521, %s523
      %p527 = scmp.eq.s32.totalorder %s33, 0
      %p528 = por %p526, %p527
      %p529 = scmp.ne.s32.totalorder %s521, %s523
      %p530 = scmp.eq.s32.totalorder %s38, 1
      %p531 = por %p529, %p530
      %p532 = scmp.ne.s32.totalorder %s523, %s524
      %p533 = scmp.eq.s32.totalorder %s38, 0
      %p534 = por %p532, %p533
      %p535 = scmp.ne.s32.totalorder %s523, %s524
      %p536 = scmp.eq.s32.totalorder %s39, 1
      %p537 = por %p535, %p536
      %p539 = scmp.ne.s32.totalorder %s524, %s538
      %p540 = scmp.eq.s32.totalorder %s39, 0
      %p541 = por %p539, %p540
      %s543 = sadd.s32 %s542, 1
      %p546 = scmp.eq.s32.totalorder %s33, 1
      %p547 = scmp.ne.s32.totalorder %s542, %s544
      %p548 = scmp.eq.s32.totalorder %s33, 0
      %p549 = por %p547, %p548
      %p550 = scmp.ne.s32.totalorder %s542, %s544
      %p551 = scmp.eq.s32.totalorder %s38, 1
      %p552 = por %p550, %p551
      %p553 = scmp.ne.s32.totalorder %s544, %s545
      %p554 = scmp.eq.s32.totalorder %s38, 0
      %p555 = por %p553, %p554
      %p556 = scmp.ne.s32.totalorder %s544, %s545
      %p557 = scmp.eq.s32.totalorder %s39, 1
      %p558 = por %p556, %p557
      %p560 = scmp.ne.s32.totalorder %s545, %s559
      %p561 = scmp.eq.s32.totalorder %s39, 0
      %p562 = por %p560, %p561
      %s563 = ssub.s32 %s40, %s52
      %p564 = scmp.eq.s32.totalorder %s563, 0
      %s566 = sadd.s32 %s565, 1
      %s567 = scalar_select %p564, %s565, %s566
      %p570 = pneg %p564
      %p571 = scmp.eq.s32.totalorder %s33, 1
      %p572 = por %p570, %p571
      %p573 = scmp.ne.s32.totalorder %s565, %s568
      %p574 = scmp.eq.s32.totalorder %s33, 0
      %p575 = por %p573, %p574
      %p576 = scmp.ne.s32.totalorder %s565, %s568
      %p577 = scmp.eq.s32.totalorder %s38, 1
      %p578 = por %p576, %p577
      %p579 = scmp.ne.s32.totalorder %s568, %s569
      %p580 = scmp.eq.s32.totalorder %s38, 0
      %p581 = por %p579, %p580
      %p582 = scmp.ne.s32.totalorder %s568, %s569
      %p583 = scmp.eq.s32.totalorder %s39, 1
      %p584 = por %p582, %p583
      %p586 = scmp.ne.s32.totalorder %s569, %s585
      %p587 = scmp.eq.s32.totalorder %s39, 0
      %p588 = por %p586, %p587
      %s589 = ssub.s32 %s40, %s52
      %p590 = scmp.eq.s32.totalorder %s589, 0
      %s592 = sadd.s32 %s591, 1
      %s593 = scalar_select %p590, %s591, %s592
      %p596 = pneg %p590
      %p597 = scmp.eq.s32.totalorder %s33, 1
      %p598 = por %p596, %p597
      %p599 = scmp.ne.s32.totalorder %s591, %s594
      %p600 = scmp.eq.s32.totalorder %s33, 0
      %p601 = por %p599, %p600
      %p602 = scmp.ne.s32.totalorder %s591, %s594
      %p603 = scmp.eq.s32.totalorder %s38, 1
      %p604 = por %p602, %p603
      %p605 = scmp.ne.s32.totalorder %s594, %s595
      %p606 = scmp.eq.s32.totalorder %s38, 0
      %p607 = por %p605, %p606
      %p608 = scmp.ne.s32.totalorder %s594, %s595
      %p609 = scmp.eq.s32.totalorder %s39, 1
      %p610 = por %p608, %p609
      %p612 = scmp.ne.s32.totalorder %s595, %s611
      %p613 = scmp.eq.s32.totalorder %s39, 0
      %p614 = por %p612, %p613
      %p615 = scmp.le.s32.totalorder 1, %s33
      %p616 = scmp.lt.s32.totalorder %s33, 3
      %p617 = pnand %p615, %p616
      %p618 = pneg %p617
      // Predicated region
      $region9: #{tpu_custom_call.1} parent=5 // pred_check
        _
      $region10: #{tpu_custom_call.1} parent=5 // pred_check_branch
        %620 = sbr.rel (%p617) target = $region12
      $region11: #{tpu_custom_call.1} parent=5 // pred_region
        %s621 = ssub.s32 %s33, 1
        // Predicated region
        $region13: #{tpu_custom_call.1} parent=11 // pred_check
          %p622 = pneg %p71
        $region14: #{tpu_custom_call.1} parent=11 // pred_check_branch
          %624 = sbr.rel (%p622) target = $region16
        $region15: #{tpu_custom_call.1} parent=11 // pred_region
          %s625 = smul.u32 2, %s42
          %s627 = ssub.s32 256, 256
          %628 = vsyncadd [#allocation3], %s627
          %s629 = smul.addr %s625, 128
          %s630 = scalar_lea.hbm %s0, %s629
          %s631 = sshll.u32 [#allocation2], 4
          %s632 = int_to_ptr.vmem [resolvable:$true] %s631
          %637 = dma.hbm_to_vmem [thread:$0]  %s630, 256, %s632, [#allocation3], 128, 128, 8
        $region16: #{tpu_custom_call.1} parent=11 // pred_fallthru
          _
        // Predicated region
        $region17: #{tpu_custom_call.1} parent=11 // pred_check
          %p638 = pneg %p97
        $region18: #{tpu_custom_call.1} parent=11 // pred_check_branch
          %640 = sbr.rel (%p638) target = $region20
        $region19: #{tpu_custom_call.1} parent=11 // pred_region
          %s641 = smul.u32 2, %s42
          %s643 = ssub.s32 128, 128
          %644 = vsyncadd [#allocation6], %s643
          %s645 = smul.addr %s641, 64
          %s646 = scalar_lea.hbm %s1, %s645
          %s647 = sshll.u32 [#allocation5], 4
          %s648 = int_to_ptr.vmem [resolvable:$true] %s647
          %653 = dma.hbm_to_vmem [thread:$0]  %s646, 128, %s648, [#allocation6], 64, 64, 4
        $region20: #{tpu_custom_call.1} parent=11 // pred_fallthru
          _
        // Predicated region
        $region21: #{tpu_custom_call.1} parent=11 // pred_check
          %p654 = pneg %p123
        $region22: #{tpu_custom_call.1} parent=11 // pred_check_branch
          %656 = sbr.rel (%p654) target = $region24
        $region23: #{tpu_custom_call.1} parent=11 // pred_region
          %s657 = smul.u32 2, %s42
          %s659 = ssub.s32 32, 32
          %660 = vsyncadd [#allocation6], %s659
          %s661 = smul.addr %s657, 16
          %s662 = scalar_lea.hbm %s2, %s661
          %s663 = sshll.u32 [#allocation7], 4
          %s664 = int_to_ptr.vmem [resolvable:$true] %s663
          %669 = dma.hbm_to_vmem [thread:$0]  %s662, 32, %s664, [#allocation6], 16, 16, 1
        $region24: #{tpu_custom_call.1} parent=11 // pred_fallthru
          _
        // Predicated region
        $region25: #{tpu_custom_call.1} parent=11 // pred_check
          %p670 = pneg %p149
        $region26: #{tpu_custom_call.1} parent=11 // pred_check_branch
          %672 = sbr.rel (%p670) target = $region28
        $region27: #{tpu_custom_call.1} parent=11 // pred_region
          %s673 = smul.u32 2, %s42
          %s675 = ssub.s32 32, 32
          %676 = vsyncadd [#allocation9], %s675
          %s677 = smul.addr %s673, 16
          %s678 = scalar_lea.hbm %s3, %s677
          %s679 = sshll.u32 [#allocation8], 4
          %s680 = int_to_ptr.vmem [resolvable:$true] %s679
          %685 = dma.hbm_to_vmem [thread:$0]  %s678, 32, %s680, [#allocation9], 16, 16, 1
        $region28: #{tpu_custom_call.1} parent=11 // pred_fallthru
          _
        // Predicated region
        $region29: #{tpu_custom_call.1} parent=11 // pred_check
          %p686 = pneg %p534
        $region30: #{tpu_custom_call.1} parent=11 // pred_check_branch
          %688 = sbr.rel (%p686) target = $region32
        $region31: #{tpu_custom_call.1} parent=11 // pred_region
          _
        $region32: #{tpu_custom_call.1} parent=11 // pred_fallthru
          _
        // Predicated region
        $region33: #{tpu_custom_call.1} parent=11 // pred_check
          %p689 = pneg %p555
        $region34: #{tpu_custom_call.1} parent=11 // pred_check_branch
          %691 = sbr.rel (%p689) target = $region36
        $region35: #{tpu_custom_call.1} parent=11 // pred_region
          _
        $region36: #{tpu_custom_call.1} parent=11 // pred_fallthru
          _
      $region12: #{tpu_custom_call.1} parent=5 // pred_fallthru
        _
      %p692 = scmp.lt.s32.totalorder %s33, 2
      // Predicated region
      $region37: #{tpu_custom_call.1} parent=5 // pred_check
        %p693 = pneg %p692
      $region38: #{tpu_custom_call.1} parent=5 // pred_check_branch
        %695 = sbr.rel (%p693) target = $region40
      $region39: #{tpu_custom_call.1} parent=5 // pred_region
        // Predicated region
        $region41: #{tpu_custom_call.1} parent=39 // pred_check
          %p696 = pneg %p169
        $region42: #{tpu_custom_call.1} parent=39 // pred_check_branch
          %698 = sbr.rel (%p696) target = $region44
        $region43: #{tpu_custom_call.1} parent=39 // pred_region
          %p699 = scmp.lt.s32.totalorder %s41, 1
          %s700 = scalar_select %p699, %s41, 1
          %s701 = smul.addr %s700, 4
          %s702 = scalar_lea.vmem %s4, %s701
        $region44: #{tpu_custom_call.1} parent=39 // pred_fallthru
          _
        // Predicated region
        $region45: #{tpu_custom_call.1} parent=39 // pred_check
          %p703 = pneg %p195
        $region46: #{tpu_custom_call.1} parent=39 // pred_check_branch
          %705 = sbr.rel (%p703) target = $region48
        $region47: #{tpu_custom_call.1} parent=39 // pred_region
          %p706 = scmp.lt.s32.totalorder %s41, 1
          %s707 = scalar_select %p706, %s41, 1
          %s708 = smul.addr %s707, 4
          %s709 = scalar_lea.vmem %s5, %s708
        $region48: #{tpu_custom_call.1} parent=39 // pred_fallthru
          _
        // Predicated region
        $region49: #{tpu_custom_call.1} parent=39 // pred_check
          %p710 = pneg %p221
        $region50: #{tpu_custom_call.1} parent=39 // pred_check_branch
          %712 = sbr.rel (%p710) target = $region52
        $region51: #{tpu_custom_call.1} parent=39 // pred_region
          %p713 = scmp.lt.s32.totalorder %s41, 1
          %s714 = scalar_select %p713, %s41, 1
          %s715 = smul.addr %s714, 12
          %s716 = smul.addr %s715, 4
          %s717 = scalar_lea.vmem %s6, %s716
        $region52: #{tpu_custom_call.1} parent=39 // pred_fallthru
          _
        // Predicated region
        $region53: #{tpu_custom_call.1} parent=39 // pred_check
          %p718 = pneg %p247
        $region54: #{tpu_custom_call.1} parent=39 // pred_check_branch
          %720 = sbr.rel (%p718) target = $region56
        $region55: #{tpu_custom_call.1} parent=39 // pred_region
          %p721 = scmp.lt.s32.totalorder %s41, 1
          %s722 = scalar_select %p721, %s41, 1
          %s723 = smul.addr %s722, 4
          %s724 = scalar_lea.vmem %s7, %s723
        $region56: #{tpu_custom_call.1} parent=39 // pred_fallthru
          _
        // Predicated region
        $region57: #{tpu_custom_call.1} parent=39 // pred_check
          %p725 = pneg %p273
        $region58: #{tpu_custom_call.1} parent=39 // pred_check_branch
          %727 = sbr.rel (%p725) target = $region60
        $region59: #{tpu_custom_call.1} parent=39 // pred_region
          %p728 = scmp.lt.s32.totalorder %s41, 1
          %s729 = scalar_select %p728, %s41, 1
          %s730 = smul.addr %s729, 4
          %s731 = smul.addr %s730, 4
          %s732 = scalar_lea.vmem %s8, %s731
        $region60: #{tpu_custom_call.1} parent=39 // pred_fallthru
          _
        // Predicated region
        $region61: #{tpu_custom_call.1} parent=39 // pred_check
          %p733 = pneg %p299
        $region62: #{tpu_custom_call.1} parent=39 // pred_check_branch
          %735 = sbr.rel (%p733) target = $region64
        $region63: #{tpu_custom_call.1} parent=39 // pred_region
          %s736 = sand.u32 %s33, 1
          %s737 = scalar_lea.sflag [#allocation3], %s736
          %s738 = sand.u32 %s289, 1
          %s739 = scalar_lea.vmem [#allocation10], %s738
          %s741 = ssub.s32 16, 16
          %742 = vsyncadd %s737, %s741
          %s743 = smul.addr %s41, 16
          %s744 = scalar_lea.hbm %s9, %s743
          %s746 = sshll.u32 %s739, 4
          %s747 = int_to_ptr.vmem [resolvable:$true] %s746
          %749 = dma.hbm_to_vmem [thread:$0]  %s744, 16, %s747, %s737
        $region64: #{tpu_custom_call.1} parent=39 // pred_fallthru
          _
        // Predicated region
        $region65: #{tpu_custom_call.1} parent=39 // pred_check
          %p750 = pneg %p325
        $region66: #{tpu_custom_call.1} parent=39 // pred_check_branch
          %752 = sbr.rel (%p750) target = $region68
        $region67: #{tpu_custom_call.1} parent=39 // pred_region
          %s753 = sand.u32 %s33, 1
          %s754 = scalar_lea.sflag [#allocation3], %s753
          %s755 = sand.u32 %s315, 1
          %s756 = smul.addr %s755, 48
          %s757 = scalar_lea.vmem [#allocation11], %s756
          %s759 = ssub.s32 768, 768
          %760 = vsyncadd %s754, %s759
          %s761 = smul.addr %s41, 12
          %s762 = smul.addr %s761, 64
          %s763 = scalar_lea.hbm %s10, %s762
          %s764 = sshll.u32 %s757, 4
          %s765 = int_to_ptr.vmem [resolvable:$true] %s764
          %770 = dma.hbm_to_vmem [thread:$0]  %s763, 768, %s765, %s754, 64, 64, 4
        $region68: #{tpu_custom_call.1} parent=39 // pred_fallthru
          _
        // Predicated region
        $region69: #{tpu_custom_call.1} parent=39 // pred_check
          %p771 = pneg %p351
        $region70: #{tpu_custom_call.1} parent=39 // pred_check_branch
          %773 = sbr.rel (%p771) target = $region72
        $region71: #{tpu_custom_call.1} parent=39 // pred_region
          %p774 = scmp.lt.s32.totalorder %s41, 1
          %s775 = scalar_select %p774, %s41, 1
          %s776 = smul.addr %s775, 4
          %s777 = scalar_lea.vmem %s11, %s776
        $region72: #{tpu_custom_call.1} parent=39 // pred_fallthru
          _
        // Predicated region
        $region73: #{tpu_custom_call.1} parent=39 // pred_check
          %p778 = pneg %p377
        $region74: #{tpu_custom_call.1} parent=39 // pred_check_branch
          %780 = sbr.rel (%p778) target = $region76
        $region75: #{tpu_custom_call.1} parent=39 // pred_region
          %p781 = scmp.lt.s32.totalorder %s41, 1
          %s782 = scalar_select %p781, %s41, 1
          %s783 = smul.addr %s782, 4
          %s784 = smul.addr %s783, 4
          %s785 = scalar_lea.vmem %s12, %s784
        $region76: #{tpu_custom_call.1} parent=39 // pred_fallthru
          _
        // Predicated region
        $region77: #{tpu_custom_call.1} parent=39 // pred_check
          %p786 = pneg %p403
        $region78: #{tpu_custom_call.1} parent=39 // pred_check_branch
          %788 = sbr.rel (%p786) target = $region80
        $region79: #{tpu_custom_call.1} parent=39 // pred_region
          %p789 = scmp.lt.s32.totalorder %s41, 1
          %s790 = scalar_select %p789, %s41, 1
          %s791 = scalar_lea.vmem %s13, %s790
        $region80: #{tpu_custom_call.1} parent=39 // pred_fallthru
          _
        // Predicated region
        $region81: #{tpu_custom_call.1} parent=39 // pred_check
          %p792 = pneg %p429
        $region82: #{tpu_custom_call.1} parent=39 // pred_check_branch
          %794 = sbr.rel (%p792) target = $region84
        $region83: #{tpu_custom_call.1} parent=39 // pred_region
          %s795 = sand.u32 %s33, 1
          %s796 = scalar_lea.sflag [#allocation3], %s795
          %s797 = sand.u32 %s419, 1
          %s798 = smul.addr %s797, 16
          %s799 = scalar_lea.vmem [#allocation12], %s798
          %s801 = ssub.s32 256, 256
          %802 = vsyncadd %s796, %s801
          %s803 = smul.addr %s41, 4
          %s804 = smul.addr %s803, 64
          %s805 = scalar_lea.hbm %s14, %s804
          %s806 = sshll.u32 %s799, 4
          %s807 = int_to_ptr.vmem [resolvable:$true] %s806
          %812 = dma.hbm_to_vmem [thread:$0]  %s805, 256, %s807, %s796, 64, 64, 4
        $region84: #{tpu_custom_call.1} parent=39 // pred_fallthru
          _
        // Predicated region
        $region85: #{tpu_custom_call.1} parent=39 // pred_check
          %p813 = pneg %p455
        $region86: #{tpu_custom_call.1} parent=39 // pred_check_branch
          %815 = sbr.rel (%p813) target = $region88
        $region87: #{tpu_custom_call.1} parent=39 // pred_region
          %p816 = scmp.lt.s32.totalorder %s41, 1
          %s817 = scalar_select %p816, %s41, 1
          %s818 = scalar_lea.vmem %s15, %s817
        $region88: #{tpu_custom_call.1} parent=39 // pred_fallthru
          _
        // Predicated region
        $region89: #{tpu_custom_call.1} parent=39 // pred_check
          %p819 = pneg %p481
        $region90: #{tpu_custom_call.1} parent=39 // pred_check_branch
          %821 = sbr.rel (%p819) target = $region92
        $region91: #{tpu_custom_call.1} parent=39 // pred_region
          %p822 = scmp.lt.s32.totalorder %s41, 1
          %s823 = scalar_select %p822, %s41, 1
          %s824 = smul.addr %s823, 8
          %s825 = smul.addr %s824, 4
          %s826 = scalar_lea.vmem %s16, %s825
        $region92: #{tpu_custom_call.1} parent=39 // pred_fallthru
          _
        // Predicated region
        $region93: #{tpu_custom_call.1} parent=39 // pred_check
          %p827 = pneg %p507
        $region94: #{tpu_custom_call.1} parent=39 // pred_check_branch
          %829 = sbr.rel (%p827) target = $region96
        $region95: #{tpu_custom_call.1} parent=39 // pred_region
          %p830 = scmp.lt.s32.totalorder %s41, 1
          %s831 = scalar_select %p830, %s41, 1
          %s832 = scalar_lea.vmem %s17, %s831
        $region96: #{tpu_custom_call.1} parent=39 // pred_fallthru
          _
      $region40: #{tpu_custom_call.1} parent=5 // pred_fallthru
        _
      %p833 = scmp.le.s32.totalorder 1, %s33
      %p834 = scmp.lt.s32.totalorder %s33, 3
      %p835 = pnand %p833, %p834
      %p836 = pneg %p835
      // Predicated region
      $region97: #{tpu_custom_call.1} parent=5 // pred_check
        _
      $region98: #{tpu_custom_call.1} parent=5 // pred_check_branch
        %838 = sbr.rel (%p835) target = $region100
      $region99: #{tpu_custom_call.1} parent=5 // pred_region
        %s839 = ssub.s32 %s33, 1
        // Predicated region
        $region101: #{tpu_custom_call.1} parent=99 // pred_check
          %p840 = pneg %p71
        $region102: #{tpu_custom_call.1} parent=99 // pred_check_branch
          %842 = sbr.rel (%p840) target = $region104
        $region103: #{tpu_custom_call.1} parent=99 // pred_region
          %843 = dma.done [#allocation3], 256
        $region104: #{tpu_custom_call.1} parent=99 // pred_fallthru
          _
        // Predicated region
        $region105: #{tpu_custom_call.1} parent=99 // pred_check
          %p844 = pneg %p97
        $region106: #{tpu_custom_call.1} parent=99 // pred_check_branch
          %846 = sbr.rel (%p844) target = $region108
        $region107: #{tpu_custom_call.1} parent=99 // pred_region
          %847 = dma.done [#allocation6], 128
        $region108: #{tpu_custom_call.1} parent=99 // pred_fallthru
          _
        // Predicated region
        $region109: #{tpu_custom_call.1} parent=99 // pred_check
          %p848 = pneg %p123
        $region110: #{tpu_custom_call.1} parent=99 // pred_check_branch
          %850 = sbr.rel (%p848) target = $region112
        $region111: #{tpu_custom_call.1} parent=99 // pred_region
          %851 = dma.done [#allocation6], 32
        $region112: #{tpu_custom_call.1} parent=99 // pred_fallthru
          _
        // Predicated region
        $region113: #{tpu_custom_call.1} parent=99 // pred_check
          %p852 = pneg %p149
        $region114: #{tpu_custom_call.1} parent=99 // pred_check_branch
          %854 = sbr.rel (%p852) target = $region116
        $region115: #{tpu_custom_call.1} parent=99 // pred_region
          %855 = dma.done [#allocation9], 32
        $region116: #{tpu_custom_call.1} parent=99 // pred_fallthru
          _
        %s856 = sand.u32 %s38, 1
        %s857 = scalar_lea.sflag [#allocation3], %s856
        %s858 = sand.u32 %s292, 1
        %s859 = scalar_lea.vmem [#allocation10], %s858
        // Predicated region
        $region117: #{tpu_custom_call.1} parent=99 // pred_check
          %p860 = pneg %p305
        $region118: #{tpu_custom_call.1} parent=99 // pred_check_branch
          %862 = sbr.rel (%p860) target = $region120
        $region119: #{tpu_custom_call.1} parent=99 // pred_region
          %863 = dma.done %s857, 16
        $region120: #{tpu_custom_call.1} parent=99 // pred_fallthru
          _
        %s864 = sand.u32 %s38, 1
        %s865 = scalar_lea.sflag [#allocation3], %s864
        %s866 = sand.u32 %s318, 1
        %s867 = smul.addr %s866, 48
        %s868 = scalar_lea.vmem [#allocation11], %s867
        // Predicated region
        $region121: #{tpu_custom_call.1} parent=99 // pred_check
          %p869 = pneg %p331
        $region122: #{tpu_custom_call.1} parent=99 // pred_check_branch
          %871 = sbr.rel (%p869) target = $region124
        $region123: #{tpu_custom_call.1} parent=99 // pred_region
          %872 = dma.done %s865, 768
        $region124: #{tpu_custom_call.1} parent=99 // pred_fallthru
          _
        %s873 = sand.u32 %s38, 1
        %s874 = scalar_lea.sflag [#allocation3], %s873
        %s875 = sand.u32 %s422, 1
        %s876 = smul.addr %s875, 16
        %s877 = scalar_lea.vmem [#allocation12], %s876
        // Predicated region
        $region125: #{tpu_custom_call.1} parent=99 // pred_check
          %p878 = pneg %p435
        $region126: #{tpu_custom_call.1} parent=99 // pred_check_branch
          %880 = sbr.rel (%p878) target = $region128
        $region127: #{tpu_custom_call.1} parent=99 // pred_region
          %881 = dma.done %s874, 256
        $region128: #{tpu_custom_call.1} parent=99 // pred_fallthru
          _
        %p882 = pneg %p71
        %p883 = pneg %p68
        %p884 = pneg %p97
        %p885 = pneg %p94
        %p886 = pneg %p123
        %p887 = pneg %p120
        %p888 = pneg %p149
        %p889 = pneg %p146
        %p890 = scmp.lt.s32.totalorder %s43, 1
        %s891 = scalar_select %p890, %s43, 1
        %s892 = smul.addr %s891, 4
        %s893 = scalar_lea.vmem %s4, %s892
        %p894 = pneg %p175
        %p895 = pneg %p172
        %p896 = scmp.lt.s32.totalorder %s43, 1
        %s897 = scalar_select %p896, %s43, 1
        %s898 = smul.addr %s897, 4
        %s899 = scalar_lea.vmem %s5, %s898
        %p900 = pneg %p201
        %p901 = pneg %p198
        %p902 = scmp.lt.s32.totalorder %s43, 1
        %s903 = scalar_select %p902, %s43, 1
        %s904 = smul.addr %s903, 12
        %s905 = smul.addr %s904, 4
        %s906 = scalar_lea.vmem %s6, %s905
        %p907 = pneg %p227
        %p908 = pneg %p224
        %p909 = scmp.lt.s32.totalorder %s43, 1
        %s910 = scalar_select %p909, %s43, 1
        %s911 = smul.addr %s910, 4
        %s912 = scalar_lea.vmem %s7, %s911
        %p913 = pneg %p253
        %p914 = pneg %p250
        %p915 = scmp.lt.s32.totalorder %s43, 1
        %s916 = scalar_select %p915, %s43, 1
        %s917 = smul.addr %s916, 4
        %s918 = smul.addr %s917, 4
        %s919 = scalar_lea.vmem %s8, %s918
        %p920 = pneg %p279
        %p921 = pneg %p276
        %s922 = sand.u32 %s38, 1
        %s923 = scalar_lea.sflag [#allocation3], %s922
        %s924 = sand.u32 %s292, 1
        %s925 = scalar_lea.vmem [#allocation10], %s924
        %p926 = pneg %p305
        %p927 = pneg %p302
        %s928 = sand.u32 %s38, 1
        %s929 = scalar_lea.sflag [#allocation3], %s928
        %s930 = sand.u32 %s318, 1
        %s931 = smul.addr %s930, 48
        %s932 = scalar_lea.vmem [#allocation11], %s931
        %p933 = pneg %p331
        %p934 = pneg %p328
        %p935 = scmp.lt.s32.totalorder %s43, 1
        %s936 = scalar_select %p935, %s43, 1
        %s937 = smul.addr %s936, 4
        %s938 = scalar_lea.vmem %s11, %s937
        %p939 = pneg %p357
        %p940 = pneg %p354
        %p941 = scmp.lt.s32.totalorder %s43, 1
        %s942 = scalar_select %p941, %s43, 1
        %s943 = smul.addr %s942, 4
        %s944 = smul.addr %s943, 4
        %s945 = scalar_lea.vmem %s12, %s944
        %p946 = pneg %p383
        %p947 = pneg %p380
        %p948 = scmp.lt.s32.totalorder %s43, 1
        %s949 = scalar_select %p948, %s43, 1
        %s950 = scalar_lea.vmem %s13, %s949
        %p951 = pneg %p409
        %p952 = pneg %p406
        %s953 = sand.u32 %s38, 1
        %s954 = scalar_lea.sflag [#allocation3], %s953
        %s955 = sand.u32 %s422, 1
        %s956 = smul.addr %s955, 16
        %s957 = scalar_lea.vmem [#allocation12], %s956
        %p958 = pneg %p435
        %p959 = pneg %p432
        %p960 = scmp.lt.s32.totalorder %s43, 1
        %s961 = scalar_select %p960, %s43, 1
        %s962 = scalar_lea.vmem %s15, %s961
        %p963 = pneg %p461
        %p964 = pneg %p458
        %p965 = scmp.lt.s32.totalorder %s43, 1
        %s966 = scalar_select %p965, %s43, 1
        %s967 = smul.addr %s966, 8
        %s968 = smul.addr %s967, 4
        %s969 = scalar_lea.vmem %s16, %s968
        %p970 = pneg %p487
        %p971 = pneg %p484
        %p972 = scmp.lt.s32.totalorder %s43, 1
        %s973 = scalar_select %p972, %s43, 1
        %s974 = scalar_lea.vmem %s17, %s973
        %p975 = pneg %p513
        %p976 = pneg %p510
        %p977 = pneg %p534
        %p978 = pneg %p531
        %p979 = pneg %p555
        %p980 = pneg %p552
        %p981 = pneg %p581
        %p982 = pneg %p578
        %p983 = pneg %p607
        %p984 = pneg %p604
        %s985 = smul.u32 2, %s42
        %s986 = smul.u32 2, %s42
        %s987 = smul.u32 2, %s42
        %s988 = smul.u32 2, %s42
        %p989 = scmp.lt.s32.totalorder %s43, 1
        %s990 = scalar_select %p989, %s43, 1
        %s991 = smul.addr %s990, 4
        %s992 = scalar_lea.vmem %s4, %s991
        %p993 = scmp.lt.s32.totalorder %s43, 1
        %s994 = scalar_select %p993, %s43, 1
        %s995 = smul.addr %s994, 4
        %s996 = scalar_lea.vmem %s5, %s995
        %p997 = scmp.lt.s32.totalorder %s43, 1
        %s998 = scalar_select %p997, %s43, 1
        %s999 = smul.addr %s998, 12
        %s1000 = smul.addr %s999, 4
        %s1001 = scalar_lea.vmem %s6, %s1000
        %p1002 = scmp.lt.s32.totalorder %s43, 1
        %s1003 = scalar_select %p1002, %s43, 1
        %s1004 = smul.addr %s1003, 4
        %s1005 = scalar_lea.vmem %s7, %s1004
        %p1006 = scmp.lt.s32.totalorder %s43, 1
        %s1007 = scalar_select %p1006, %s43, 1
        %s1008 = smul.addr %s1007, 4
        %s1009 = smul.addr %s1008, 4
        %s1010 = scalar_lea.vmem %s8, %s1009
        %p1011 = scmp.lt.s32.totalorder %s43, 1
        %s1012 = scalar_select %p1011, %s43, 1
        %s1013 = smul.addr %s1012, 4
        %s1014 = scalar_lea.vmem %s11, %s1013
        %p1015 = scmp.lt.s32.totalorder %s43, 1
        %s1016 = scalar_select %p1015, %s43, 1
        %s1017 = smul.addr %s1016, 4
        %s1018 = smul.addr %s1017, 4
        %s1019 = scalar_lea.vmem %s12, %s1018
        %p1020 = scmp.lt.s32.totalorder %s43, 1
        %s1021 = scalar_select %p1020, %s43, 1
        %s1022 = scalar_lea.vmem %s13, %s1021
        %p1023 = scmp.lt.s32.totalorder %s43, 1
        %s1024 = scalar_select %p1023, %s43, 1
        %s1025 = scalar_lea.vmem %s15, %s1024
        %p1026 = scmp.lt.s32.totalorder %s43, 1
        %s1027 = scalar_select %p1026, %s43, 1
        %s1028 = smul.addr %s1027, 8
        %s1029 = smul.addr %s1028, 4
        %s1030 = scalar_lea.vmem %s16, %s1029
        %p1031 = scmp.lt.s32.totalorder %s43, 1
        %s1032 = scalar_select %p1031, %s43, 1
        %s1033 = scalar_lea.vmem %s17, %s1032
        %s1034 = smul.u32 2, %s42
        %s1035 = smul.u32 2, %s42
        %p1037 = scmp.eq.s32.totalorder %s43, 0
        // Predicated region
        $region129: #{tpu_custom_call.1} parent=99 // pred_check
          %p1038 = pneg %p1037
        $region130: #{tpu_custom_call.1} parent=99 // pred_check_branch
          %1040 = sbr.rel (%p1038) target = $region132
        $region131: #{tpu_custom_call.1} parent=99 // pred_region
          %v1041 = vld [vmem:[#allocation2] sm:$0xff]
          %v1042 = vld [vmem:[#allocation2 + $0x8] sm:$0xff]
          %vm1043 = vcmask 261120
          %1044 = vst.msk [vmem:[#allocation13] sm:$0xff] %vm1043, %v1041
          %1045 = vst.msk [vmem:[#allocation13 + $0x8] sm:$0xff] %vm1043, %v1042
        $region132: #{tpu_custom_call.1} parent=99 // pred_fallthru
          _
        %v1046 = vld [vmem:[#allocation13] sm:$0xff]
        %v1047 = vld [vmem:[#allocation13 + $0x8] sm:$0xff]
        %v1048 = vld [vmem:[#allocation5] sm:$0xf]
        %v1049 = vld [vmem:[#allocation5 + $0x4] sm:$0xf]
        %v1050 = vlaneseq
        %v1051 = vshrl.u32 %v1050, 7
        %v1052 = vlaneseq
        %v1053 = vand.u32 %v1052, 127
        %vm1054 = vcmp.gt.s32.totalorder %v1053, %v1051
        %v1055 = vsel %vm1054, -1e+18, 0.0
        %v1056 = vld [vmem:[#allocation7] sm:$0x1]
        %v1057 = vld [vmem:[#allocation7 + $0x1] sm:$0x1]
        %v1060 = vlaneseq
        %v1061 = vshrl.u32 %v1060, 7
        %v1062 = vsub.s32 0, %v1061
        %v1063 = vrot.slane %v1056, %v1062
        %v1064 = vlaneseq
        %v1065 = vshrl.u32 %v1064, 7
        %v1066 = vsub.s32 0, %v1065
        %v1067 = vrot.slane %v1057, %v1066
        %v1070 = vadd.f32 %v1055, %v1063
        %v1071 = vadd.f32 %v1055, %v1067
        %v1072 = vld [vmem:[#allocation8] sm:$0x1]
        %v1073 = vld [vmem:[#allocation8 + $0x1] sm:$0x1]
        %v1074 = vld [vmem:[%s992] sm:$0x1]
        %v1075 = vld [vmem:[%s996] sm:$0x1]
        %vm1076 = vcmask 261120
        %v1077 = vsel %vm1076, %v1046, 0.0
        %1078 = vadd.xlane.f32.xlu0 %v1077
        %v1079 = vpop.xlane.xlu0 %1078
        %v1080 = vsel %vm1076, %v1047, 0.0
        %1081 = vadd.xlane.f32.xlu0 %v1080
        %v1082 = vpop.xlane.xlu0 %1081
        %v1083 = vrcp.pop 32.0
        %v1084 = vmul.f32 %v1079, %v1083
        %v1085 = vmul.f32 %v1082, %v1083
        %v1086 = vsub.f32 %v1046, %v1084
        %v1087 = vsub.f32 %v1047, %v1085
        %v1088 = vmul.f32 %v1086, %v1086
        %v1089 = vmul.f32 %v1087, %v1087
        %v1090 = vsel %vm1076, %v1088, 0.0
        %1091 = vadd.xlane.f32.xlu0 %v1090
        %v1092 = vpop.xlane.xlu0 %1091
        %v1093 = vsel %vm1076, %v1089, 0.0
        %1094 = vadd.xlane.f32.xlu0 %v1093
        %v1095 = vpop.xlane.xlu0 %1094
        %v1096 = vmul.f32 %v1092, %v1083
        %v1097 = vmul.f32 %v1095, %v1083
        %v1098 = vadd.f32 %v1096, 1e-06
        %v1099 = vadd.f32 %v1097, 1e-06
        %v1100 = vrsqrt.pop %v1098
        %v1101 = vrsqrt.pop %v1099
        %v1102 = vmul.f32 %v1086, %v1100
        %v1103 = vmul.f32 %v1087, %v1101
        %v1104 = vlaneseq
        %v1105 = vshrl.u32 %v1104, 7
        %v1106 = vsub.s32 0, %v1105
        %v1107 = vrot.slane %v1074, %v1106
        %v1108 = vmul.f32 %v1102, %v1107
        %v1109 = vmul.f32 %v1103, %v1107
        %v1110 = vlaneseq
        %v1111 = vshrl.u32 %v1110, 7
        %v1112 = vsub.s32 0, %v1111
        %v1113 = vrot.slane %v1075, %v1112
        %v1114 = vadd.f32 %v1108, %v1113
        %v1115 = vadd.f32 %v1109, %v1113
        %v1116 = vpack.c.bf16 %v1115, %v1114
        %v1117 = vld [vmem:[%s1001] sm:$0xf]
        %v1118 = vld [vmem:[%s1001 + $0x4] sm:$0xf]
        %v1119 = vld [vmem:[%s1001 + $0x8] sm:$0xf]
        %v1120 = vld [vmem:[%s1001 + $0xc] sm:$0xf]
        %s1121 = scalar_lea.vmem %s1001, 16
        %v1122 = vld [vmem:[%s1121] sm:$0xf]
        %v1123 = vld [vmem:[%s1121 + $0x4] sm:$0xf]
        %v1124 = vld [vmem:[%s1121 + $0x8] sm:$0xf]
        %v1125 = vld [vmem:[%s1121 + $0xc] sm:$0xf]
        %s1126 = scalar_lea.vmem %s1001, 32
        %v1127 = vld [vmem:[%s1126] sm:$0xf]
        %v1128 = vld [vmem:[%s1126 + $0x4] sm:$0xf]
        %v1129 = vld [vmem:[%s1126 + $0x8] sm:$0xf]
        %v1130 = vld [vmem:[%s1126 + $0xc] sm:$0xf]
        %v1131 = vld [vmem:[%s1005] sm:$0x1]
        %v1132 = vld [vmem:[%s1005 + $0x1] sm:$0x1]
        %v1133 = vld [vmem:[%s1005 + $0x2] sm:$0x1]
        %v1134 = vlaneseq
        %v1135 = vshrl.u32 %v1134, 7
        %v1136 = vsub.s32 0, %v1135
        %v1137 = vrot.slane %v1131, %v1136
        %v1142 = vunpack.c.l.b16 %v1117
        %v1143 = vunpack.c.l.b16 %v1118
        %v1144 = vunpack.c.l.b16 %v1119
        %v1145 = vunpack.c.l.b16 %v1120
        %v1146 = vpack.c.b16 %v1143, %v1142
        %v1147 = vpack.c.b16 %v1145, %v1144
        %v1151 = vsel %vm1076, %v1116, 0
        %1153 = vmatprep.subr.bf16.mxu0 0
        %1154 = vmatpush1.bf16.msra.mxu0 %v1146
        %1155 = vmatprep.subr.bf16.mxu0 0
        %1156 = vmatpush1.bf16.msra.mxu0 %v1147
        %1157 = vmatprep.subr.bf16.mxu0 0
        %1158 = vmatpush1.bf16.msra.mxu0 0
        %1159 = vmatprep.subr.bf16.mxu0 0
        %1160 = vmatpush1.bf16.msra.mxu0 0
        %1161 = vmatprep.subr.bf16.mxu0 0
        %1162 = vmatpush1.bf16.msra.mxu0 0
        %1163 = vmatprep.subr.bf16.mxu0 0
        %1164 = vmatpush1.bf16.msra.mxu0 0
        %1165 = vmatprep.subr.bf16.mxu0 0
        %1166 = vmatpush1.bf16.msra.mxu0 0
        %1167 = vmatprep.subr.bf16.mxu0 0
        %1168 = vmatpush1.bf16.msra.mxu0 0
        %1169 = vmatprep.subr.bf16.mxu0 0
        %1170 = vmatpush1.bf16.msra.mxu0 0
        %1171 = vmatprep.subr.bf16.mxu0 0
        %1172 = vmatpush1.bf16.msra.mxu0 0
        %1173 = vmatprep.subr.bf16.mxu0 0
        %1174 = vmatpush1.bf16.msra.mxu0 0
        %1175 = vmatprep.subr.bf16.mxu0 0
        %1176 = vmatpush1.bf16.msra.mxu0 0
        %1177 = vmatprep.subr.bf16.mxu0 0
        %1178 = vmatpush1.bf16.msra.mxu0 0
        %1179 = vmatprep.subr.bf16.mxu0 0
        %1180 = vmatpush1.bf16.msra.mxu0 0
        %1181 = vmatprep.subr.bf16.mxu0 0
        %1182 = vmatpush1.bf16.msra.mxu0 0
        %1183 = vmatprep.subr.bf16.mxu0 0
        %1184 = vmatpush1.bf16.msra.mxu0 0
        %1185 = vmatprep.mubr.bf16.mxu0 0
        %1186 = vmatmul.mubr.bf16.gmra.mrb[0].mxu0 %v1151
        %v1187 = vpop.f32.mrb[0].mxu0
        %v1188 = vadd.f32 %v1137, %v1187
        %v1189 = vpop.f32.mrb[0].mxu0
        %v1190 = vpop.f32.mrb[0].mxu0
        %v1191 = vadd.f32 %v1137, %v1190
        %v1192 = vpop.f32.mrb[0].mxu0
        %1193 = vdwg.mxu0
        %v1194 = vmul.f32 %v1188, 0.35355338
        %v1195 = vmul.f32 %v1191, 0.35355338
        %v1196 = vlaneseq
        %v1197 = vshrl.u32 %v1196, 7
        %v1198 = vsub.s32 0, %v1197
        %v1199 = vrot.slane %v1132, %v1198
        %v1204 = vunpack.c.l.b16 %v1122
        %v1205 = vunpack.c.l.b16 %v1123
        %v1206 = vunpack.c.l.b16 %v1124
        %v1207 = vunpack.c.l.b16 %v1125
        %v1208 = vpack.c.b16 %v1205, %v1204
        %v1209 = vpack.c.b16 %v1207, %v1206
        %1212 = vmatprep.subr.bf16.mxu0 0
        %1213 = vmatpush1.bf16.msra.mxu0 %v1208
        %1214 = vmatprep.subr.bf16.mxu0 0
        %1215 = vmatpush1.bf16.msra.mxu0 %v1209
        %1216 = vmatprep.subr.bf16.mxu0 0
        %1217 = vmatpush1.bf16.msra.mxu0 0
        %1218 = vmatprep.subr.bf16.mxu0 0
        %1219 = vmatpush1.bf16.msra.mxu0 0
        %1220 = vmatprep.subr.bf16.mxu0 0
        %1221 = vmatpush1.bf16.msra.mxu0 0
        %1222 = vmatprep.subr.bf16.mxu0 0
        %1223 = vmatpush1.bf16.msra.mxu0 0
        %1224 = vmatprep.subr.bf16.mxu0 0
        %1225 = vmatpush1.bf16.msra.mxu0 0
        %1226 = vmatprep.subr.bf16.mxu0 0
        %1227 = vmatpush1.bf16.msra.mxu0 0
        %1228 = vmatprep.subr.bf16.mxu0 0
        %1229 = vmatpush1.bf16.msra.mxu0 0
        %1230 = vmatprep.subr.bf16.mxu0 0
        %1231 = vmatpush1.bf16.msra.mxu0 0
        %1232 = vmatprep.subr.bf16.mxu0 0
        %1233 = vmatpush1.bf16.msra.mxu0 0
        %1234 = vmatprep.subr.bf16.mxu0 0
        %1235 = vmatpush1.bf16.msra.mxu0 0
        %1236 = vmatprep.subr.bf16.mxu0 0
        %1237 = vmatpush1.bf16.msra.mxu0 0
        %1238 = vmatprep.subr.bf16.mxu0 0
        %1239 = vmatpush1.bf16.msra.mxu0 0
        %1240 = vmatprep.subr.bf16.mxu0 0
        %1241 = vmatpush1.bf16.msra.mxu0 0
        %1242 = vmatprep.subr.bf16.mxu0 0
        %1243 = vmatpush1.bf16.msra.mxu0 0
        %1244 = vmatprep.mubr.bf16.mxu0 0
        %1245 = vmatmul.mubr.bf16.gmra.mrb[0].mxu0 %v1151
        %v1246 = vpop.f32.mrb[0].mxu0
        %v1247 = vadd.f32 %v1199, %v1246
        %v1248 = vpop.f32.mrb[0].mxu0
        %v1249 = vpop.f32.mrb[0].mxu0
        %v1250 = vadd.f32 %v1199, %v1249
        %v1251 = vpop.f32.mrb[0].mxu0
        %1252 = vdwg.mxu0
        %v1253 = vlaneseq
        %v1254 = vshrl.u32 %v1253, 7
        %v1255 = vsub.s32 0, %v1254
        %v1256 = vrot.slane %v1133, %v1255
        %v1261 = vunpack.c.l.b16 %v1127
        %v1262 = vunpack.c.l.b16 %v1128
        %v1263 = vunpack.c.l.b16 %v1129
        %v1264 = vunpack.c.l.b16 %v1130
        %v1265 = vpack.c.b16 %v1262, %v1261
        %v1266 = vpack.c.b16 %v1264, %v1263
        %1269 = vmatprep.subr.bf16.mxu0 0
        %1270 = vmatpush1.bf16.msra.mxu0 %v1265
        %1271 = vmatprep.subr.bf16.mxu0 0
        %1272 = vmatpush1.bf16.msra.mxu0 %v1266
        %1273 = vmatprep.subr.bf16.mxu0 0
        %1274 = vmatpush1.bf16.msra.mxu0 0
        %1275 = vmatprep.subr.bf16.mxu0 0
        %1276 = vmatpush1.bf16.msra.mxu0 0
        %1277 = vmatprep.subr.bf16.mxu0 0
        %1278 = vmatpush1.bf16.msra.mxu0 0
        %1279 = vmatprep.subr.bf16.mxu0 0
        %1280 = vmatpush1.bf16.msra.mxu0 0
        %1281 = vmatprep.subr.bf16.mxu0 0
        %1282 = vmatpush1.bf16.msra.mxu0 0
        %1283 = vmatprep.subr.bf16.mxu0 0
        %1284 = vmatpush1.bf16.msra.mxu0 0
        %1285 = vmatprep.subr.bf16.mxu0 0
        %1286 = vmatpush1.bf16.msra.mxu0 0
        %1287 = vmatprep.subr.bf16.mxu0 0
        %1288 = vmatpush1.bf16.msra.mxu0 0
        %1289 = vmatprep.subr.bf16.mxu0 0
        %1290 = vmatpush1.bf16.msra.mxu0 0
        %1291 = vmatprep.subr.bf16.mxu0 0
        %1292 = vmatpush1.bf16.msra.mxu0 0
        %1293 = vmatprep.subr.bf16.mxu0 0
        %1294 = vmatpush1.bf16.msra.mxu0 0
        %1295 = vmatprep.subr.bf16.mxu0 0
        %1296 = vmatpush1.bf16.msra.mxu0 0
        %1297 = vmatprep.subr.bf16.mxu0 0
        %1298 = vmatpush1.bf16.msra.mxu0 0
        %1299 = vmatprep.subr.bf16.mxu0 0
        %1300 = vmatpush1.bf16.msra.mxu0 0
        %1301 = vmatprep.mubr.bf16.mxu0 0
        %1302 = vmatmul.mubr.bf16.gmra.mrb[0].mxu0 %v1151
        %v1303 = vpop.f32.mrb[0].mxu0
        %v1304 = vadd.f32 %v1256, %v1303
        %v1305 = vpop.f32.mrb[0].mxu0
        %v1306 = vpop.f32.mrb[0].mxu0
        %v1307 = vadd.f32 %v1256, %v1306
        %v1308 = vpop.f32.mrb[0].mxu0
        %1309 = vdwg.mxu0
        %1312 = vrot.lane.b32.xlu0 %v1194, 120
        %v1313 = vpop.permute.xlu0 %1312
        %1314 = vrot.lane.b32.xlu0 %v1195, 120
        %v1315 = vpop.permute.xlu0 %1314
        %1318 = vrot.lane.b32.xlu0 %v1194, 112
        %v1319 = vpop.permute.xlu0 %1318
        %1320 = vrot.lane.b32.xlu0 %v1195, 112
        %v1321 = vpop.permute.xlu0 %1320
        %1324 = vrot.lane.b32.xlu0 %v1194, 104
        %v1325 = vpop.permute.xlu0 %1324
        %1326 = vrot.lane.b32.xlu0 %v1195, 104
        %v1327 = vpop.permute.xlu0 %1326
        %v1330 = vpack.c.bf16 %v1194, %v1194
        %v1331 = vpack.c.bf16 %v1313, %v1313
        %v1332 = vpack.c.bf16 %v1319, %v1319
        %v1333 = vpack.c.bf16 %v1325, %v1325
        %v1334 = vpack.c.bf16 %v1195, %v1195
        %v1335 = vpack.c.bf16 %v1315, %v1315
        %v1336 = vpack.c.bf16 %v1321, %v1321
        %v1337 = vpack.c.bf16 %v1327, %v1327
        %1340 = vrot.lane.b32.xlu0 %v1247, 120
        %v1341 = vpop.permute.xlu0 %1340
        %1342 = vrot.lane.b32.xlu0 %v1250, 120
        %v1343 = vpop.permute.xlu0 %1342
        %1346 = vrot.lane.b32.xlu0 %v1247, 112
        %v1347 = vpop.permute.xlu0 %1346
        %1348 = vrot.lane.b32.xlu0 %v1250, 112
        %v1349 = vpop.permute.xlu0 %1348
        %1352 = vrot.lane.b32.xlu0 %v1247, 104
        %v1353 = vpop.permute.xlu0 %1352
        %1354 = vrot.lane.b32.xlu0 %v1250, 104
        %v1355 = vpop.permute.xlu0 %1354
        %v1358 = vpack.c.bf16 %v1247, %v1247
        %v1359 = vpack.c.bf16 %v1341, %v1341
        %v1360 = vpack.c.bf16 %v1347, %v1347
        %v1361 = vpack.c.bf16 %v1353, %v1353
        %v1362 = vpack.c.bf16 %v1250, %v1250
        %v1363 = vpack.c.bf16 %v1343, %v1343
        %v1364 = vpack.c.bf16 %v1349, %v1349
        %v1365 = vpack.c.bf16 %v1355, %v1355
        %1368 = vrot.lane.b32.xlu0 %v1304, 120
        %v1369 = vpop.permute.xlu0 %1368
        %1370 = vrot.lane.b32.xlu0 %v1307, 120
        %v1371 = vpop.permute.xlu0 %1370
        %1374 = vrot.lane.b32.xlu0 %v1304, 112
        %v1375 = vpop.permute.xlu0 %1374
        %1376 = vrot.lane.b32.xlu0 %v1307, 112
        %v1377 = vpop.permute.xlu0 %1376
        %1380 = vrot.lane.b32.xlu0 %v1304, 104
        %v1381 = vpop.permute.xlu0 %1380
        %1382 = vrot.lane.b32.xlu0 %v1307, 104
        %v1383 = vpop.permute.xlu0 %1382
        %v1386 = vpack.c.bf16 %v1304, %v1304
        %v1387 = vpack.c.bf16 %v1369, %v1369
        %v1388 = vpack.c.bf16 %v1375, %v1375
        %v1389 = vpack.c.bf16 %v1381, %v1381
        %v1390 = vpack.c.bf16 %v1307, %v1307
        %v1391 = vpack.c.bf16 %v1371, %v1371
        %v1392 = vpack.c.bf16 %v1377, %v1377
        %v1393 = vpack.c.bf16 %v1383, %v1383
        %vm1394 = vcmask 64512
        %v1396 = vsel %vm1394, %v1330, 0
        %v1399 = vsel %vm1394, %v1358, 0
        %1401 = vmatprep.subr.bf16.mxu0 0
        %1402 = vmatpush1.bf16.xpose.msra.mxu0 %v1399
        %1403 = vmatprep.subr.bf16.mxu0 0
        %1404 = vmatpush1.bf16.xpose.msra.mxu0 0
        %1405 = vmatprep.subr.bf16.mxu0 0
        %1406 = vmatpush1.bf16.xpose.msra.mxu0 0
        %1407 = vmatprep.subr.bf16.mxu0 0
        %1408 = vmatpush1.bf16.xpose.msra.mxu0 0
        %1409 = vmatprep.subr.bf16.mxu0 0
        %1410 = vmatpush1.bf16.xpose.msra.mxu0 0
        %1411 = vmatprep.subr.bf16.mxu0 0
        %1412 = vmatpush1.bf16.xpose.msra.mxu0 0
        %1413 = vmatprep.subr.bf16.mxu0 0
        %1414 = vmatpush1.bf16.xpose.msra.mxu0 0
        %1415 = vmatprep.subr.bf16.mxu0 0
        %1416 = vmatpush1.bf16.xpose.msra.mxu0 0
        %1417 = vmatprep.subr.bf16.mxu0 0
        %1418 = vmatpush1.bf16.xpose.msra.mxu0 0
        %1419 = vmatprep.subr.bf16.mxu0 0
        %1420 = vmatpush1.bf16.xpose.msra.mxu0 0
        %1421 = vmatprep.subr.bf16.mxu0 0
        %1422 = vmatpush1.bf16.xpose.msra.mxu0 0
        %1423 = vmatprep.subr.bf16.mxu0 0
        %1424 = vmatpush1.bf16.xpose.msra.mxu0 0
        %1425 = vmatprep.subr.bf16.mxu0 0
        %1426 = vmatpush1.bf16.xpose.msra.mxu0 0
        %1427 = vmatprep.subr.bf16.mxu0 0
        %1428 = vmatpush1.bf16.xpose.msra.mxu0 0
        %1429 = vmatprep.subr.bf16.mxu0 0
        %1430 = vmatpush1.bf16.xpose.msra.mxu0 0
        %1431 = vmatprep.subr.bf16.mxu0 0
        %1432 = vmatpush1.bf16.xpose.msra.mxu0 0
        %1433 = vmatprep.mubr.bf16.mxu0 0
        %1434 = vmatmul.mubr.bf16.gmra.mrb[0].mxu0 %v1396
        %v1435 = vpop.f32.mrb[0].mxu0
        %v1436 = vadd.f32 0.0, %v1435
        %v1437 = vpop.f32.mrb[0].mxu0
        %v1438 = vpop.f32.mrb[0].mxu0
        %v1439 = vpop.f32.mrb[0].mxu0
        %1440 = vdwg.mxu0
        %v1442 = vsel %vm1394, %v1331, 0
        %v1445 = vsel %vm1394, %v1359, 0
        %1447 = vmatprep.subr.bf16.mxu0 0
        %1448 = vmatpush1.bf16.xpose.msra.mxu0 %v1445
        %1449 = vmatprep.subr.bf16.mxu0 0
        %1450 = vmatpush1.bf16.xpose.msra.mxu0 0
        %1451 = vmatprep.subr.bf16.mxu0 0
        %1452 = vmatpush1.bf16.xpose.msra.mxu0 0
        %1453 = vmatprep.subr.bf16.mxu0 0
        %1454 = vmatpush1.bf16.xpose.msra.mxu0 0
        %1455 = vmatprep.subr.bf16.mxu0 0
        %1456 = vmatpush1.bf16.xpose.msra.mxu0 0
        %1457 = vmatprep.subr.bf16.mxu0 0
        %1458 = vmatpush1.bf16.xpose.msra.mxu0 0
        %1459 = vmatprep.subr.bf16.mxu0 0
        %1460 = vmatpush1.bf16.xpose.msra.mxu0 0
        %1461 = vmatprep.subr.bf16.mxu0 0
        %1462 = vmatpush1.bf16.xpose.msra.mxu0 0
        %1463 = vmatprep.subr.bf16.mxu0 0
        %1464 = vmatpush1.bf16.xpose.msra.mxu0 0
        %1465 = vmatprep.subr.bf16.mxu0 0
        %1466 = vmatpush1.bf16.xpose.msra.mxu0 0
        %1467 = vmatprep.subr.bf16.mxu0 0
        %1468 = vmatpush1.bf16.xpose.msra.mxu0 0
        %1469 = vmatprep.subr.bf16.mxu0 0
        %1470 = vmatpush1.bf16.xpose.msra.mxu0 0
        %1471 = vmatprep.subr.bf16.mxu0 0
        %1472 = vmatpush1.bf16.xpose.msra.mxu0 0
        %1473 = vmatprep.subr.bf16.mxu0 0
        %1474 = vmatpush1.bf16.xpose.msra.mxu0 0
        %1475 = vmatprep.subr.bf16.mxu0 0
        %1476 = vmatpush1.bf16.xpose.msra.mxu0 0
        %1477 = vmatprep.subr.bf16.mxu0 0
        %1478 = vmatpush1.bf16.xpose.msra.mxu0 0
        %1479 = vmatprep.mubr.bf16.mxu0 0
        %1480 = vmatmul.mubr.bf16.gmra.mrb[0].mxu0 %v1442
        %v1481 = vpop.f32.mrb[0].mxu0
        %v1482 = vadd.f32 0.0, %v1481
        %v1483 = vpop.f32.mrb[0].mxu0
        %v1484 = vpop.f32.mrb[0].mxu0
        %v1485 = vpop.f32.mrb[0].mxu0
        %1486 = vdwg.mxu0
        %v1488 = vsel %vm1394, %v1332, 0
        %v1491 = vsel %vm1394, %v1360, 0
        %1493 = vmatprep.subr.bf16.mxu0 0
        %1494 = vmatpush1.bf16.xpose.msra.mxu0 %v1491
        %1495 = vmatprep.subr.bf16.mxu0 0
        %1496 = vmatpush1.bf16.xpose.msra.mxu0 0
        %1497 = vmatprep.subr.bf16.mxu0 0
        %1498 = vmatpush1.bf16.xpose.msra.mxu0 0
        %1499 = vmatprep.subr.bf16.mxu0 0
        %1500 = vmatpush1.bf16.xpose.msra.mxu0 0
        %1501 = vmatprep.subr.bf16.mxu0 0
        %1502 = vmatpush1.bf16.xpose.msra.mxu0 0
        %1503 = vmatprep.subr.bf16.mxu0 0
        %1504 = vmatpush1.bf16.xpose.msra.mxu0 0
        %1505 = vmatprep.subr.bf16.mxu0 0
        %1506 = vmatpush1.bf16.xpose.msra.mxu0 0
        %1507 = vmatprep.subr.bf16.mxu0 0
        %1508 = vmatpush1.bf16.xpose.msra.mxu0 0
        %1509 = vmatprep.subr.bf16.mxu0 0
        %1510 = vmatpush1.bf16.xpose.msra.mxu0 0
        %1511 = vmatprep.subr.bf16.mxu0 0
        %1512 = vmatpush1.bf16.xpose.msra.mxu0 0
        %1513 = vmatprep.subr.bf16.mxu0 0
        %1514 = vmatpush1.bf16.xpose.msra.mxu0 0
        %1515 = vmatprep.subr.bf16.mxu0 0
        %1516 = vmatpush1.bf16.xpose.msra.mxu0 0
        %1517 = vmatprep.subr.bf16.mxu0 0
        %1518 = vmatpush1.bf16.xpose.msra.mxu0 0
        %1519 = vmatprep.subr.bf16.mxu0 0
        %1520 = vmatpush1.bf16.xpose.msra.mxu0 0
        %1521 = vmatprep.subr.bf16.mxu0 0
        %1522 = vmatpush1.bf16.xpose.msra.mxu0 0
        %1523 = vmatprep.subr.bf16.mxu0 0
        %1524 = vmatpush1.bf16.xpose.msra.mxu0 0
        %1525 = vmatprep.mubr.bf16.mxu0 0
        %1526 = vmatmul.mubr.bf16.gmra.mrb[0].mxu0 %v1488
        %v1527 = vpop.f32.mrb[0].mxu0
        %v1528 = vadd.f32 0.0, %v1527
        %v1529 = vpop.f32.mrb[0].mxu0
        %v1530 = vpop.f32.mrb[0].mxu0
        %v1531 = vpop.f32.mrb[0].mxu0
        %1532 = vdwg.mxu0
        %v1534 = vsel %vm1394, %v1333, 0
        %v1537 = vsel %vm1394, %v1361, 0
        %1539 = vmatprep.subr.bf16.mxu0 0
        %1540 = vmatpush1.bf16.xpose.msra.mxu0 %v1537
        %1541 = vmatprep.subr.bf16.mxu0 0
        %1542 = vmatpush1.bf16.xpose.msra.mxu0 0
        %1543 = vmatprep.subr.bf16.mxu0 0
        %1544 = vmatpush1.bf16.xpose.msra.mxu0 0
        %1545 = vmatprep.subr.bf16.mxu0 0
        %1546 = vmatpush1.bf16.xpose.msra.mxu0 0
        %1547 = vmatprep.subr.bf16.mxu0 0
        %1548 = vmatpush1.bf16.xpose.msra.mxu0 0
        %1549 = vmatprep.subr.bf16.mxu0 0
        %1550 = vmatpush1.bf16.xpose.msra.mxu0 0
        %1551 = vmatprep.subr.bf16.mxu0 0
        %1552 = vmatpush1.bf16.xpose.msra.mxu0 0
        %1553 = vmatprep.subr.bf16.mxu0 0
        %1554 = vmatpush1.bf16.xpose.msra.mxu0 0
        %1555 = vmatprep.subr.bf16.mxu0 0
        %1556 = vmatpush1.bf16.xpose.msra.mxu0 0
        %1557 = vmatprep.subr.bf16.mxu0 0
        %1558 = vmatpush1.bf16.xpose.msra.mxu0 0
        %1559 = vmatprep.subr.bf16.mxu0 0
        %1560 = vmatpush1.bf16.xpose.msra.mxu0 0
        %1561 = vmatprep.subr.bf16.mxu0 0
        %1562 = vmatpush1.bf16.xpose.msra.mxu0 0
        %1563 = vmatprep.subr.bf16.mxu0 0
        %1564 = vmatpush1.bf16.xpose.msra.mxu0 0
        %1565 = vmatprep.subr.bf16.mxu0 0
        %1566 = vmatpush1.bf16.xpose.msra.mxu0 0
        %1567 = vmatprep.subr.bf16.mxu0 0
        %1568 = vmatpush1.bf16.xpose.msra.mxu0 0
        %1569 = vmatprep.subr.bf16.mxu0 0
        %1570 = vmatpush1.bf16.xpose.msra.mxu0 0
        %1571 = vmatprep.mubr.bf16.mxu0 0
        %1572 = vmatmul.mubr.bf16.gmra.mrb[0].mxu0 %v1534
        %v1573 = vpop.f32.mrb[0].mxu0
        %v1574 = vadd.f32 0.0, %v1573
        %v1575 = vpop.f32.mrb[0].mxu0
        %v1576 = vpop.f32.mrb[0].mxu0
        %v1577 = vpop.f32.mrb[0].mxu0
        %1578 = vdwg.mxu0
        %v1580 = vsel %vm1394, %v1334, 0
        %v1583 = vsel %vm1394, %v1362, 0
        %1585 = vmatprep.subr.bf16.mxu0 0
        %1586 = vmatpush1.bf16.xpose.msra.mxu0 %v1583
        %1587 = vmatprep.subr.bf16.mxu0 0
        %1588 = vmatpush1.bf16.xpose.msra.mxu0 0
        %1589 = vmatprep.subr.bf16.mxu0 0
        %1590 = vmatpush1.bf16.xpose.msra.mxu0 0
        %1591 = vmatprep.subr.bf16.mxu0 0
        %1592 = vmatpush1.bf16.xpose.msra.mxu0 0
        %1593 = vmatprep.subr.bf16.mxu0 0
        %1594 = vmatpush1.bf16.xpose.msra.mxu0 0
        %1595 = vmatprep.subr.bf16.mxu0 0
        %1596 = vmatpush1.bf16.xpose.msra.mxu0 0
        %1597 = vmatprep.subr.bf16.mxu0 0
        %1598 = vmatpush1.bf16.xpose.msra.mxu0 0
        %1599 = vmatprep.subr.bf16.mxu0 0
        %1600 = vmatpush1.bf16.xpose.msra.mxu0 0
        %1601 = vmatprep.subr.bf16.mxu0 0
        %1602 = vmatpush1.bf16.xpose.msra.mxu0 0
        %1603 = vmatprep.subr.bf16.mxu0 0
        %1604 = vmatpush1.bf16.xpose.msra.mxu0 0
        %1605 = vmatprep.subr.bf16.mxu0 0
        %1606 = vmatpush1.bf16.xpose.msra.mxu0 0
        %1607 = vmatprep.subr.bf16.mxu0 0
        %1608 = vmatpush1.bf16.xpose.msra.mxu0 0
        %1609 = vmatprep.subr.bf16.mxu0 0
        %1610 = vmatpush1.bf16.xpose.msra.mxu0 0
        %1611 = vmatprep.subr.bf16.mxu0 0
        %1612 = vmatpush1.bf16.xpose.msra.mxu0 0
        %1613 = vmatprep.subr.bf16.mxu0 0
        %1614 = vmatpush1.bf16.xpose.msra.mxu0 0
        %1615 = vmatprep.subr.bf16.mxu0 0
        %1616 = vmatpush1.bf16.xpose.msra.mxu0 0
        %1617 = vmatprep.mubr.bf16.mxu0 0
        %1618 = vmatmul.mubr.bf16.gmra.mrb[0].mxu0 %v1580
        %v1619 = vpop.f32.mrb[0].mxu0
        %v1620 = vadd.f32 0.0, %v1619
        %v1621 = vpop.f32.mrb[0].mxu0
        %v1622 = vpop.f32.mrb[0].mxu0
        %v1623 = vpop.f32.mrb[0].mxu0
        %1624 = vdwg.mxu0
        %v1626 = vsel %vm1394, %v1335, 0
        %v1629 = vsel %vm1394, %v1363, 0
        %1631 = vmatprep.subr.bf16.mxu0 0
        %1632 = vmatpush1.bf16.xpose.msra.mxu0 %v1629
        %1633 = vmatprep.subr.bf16.mxu0 0
        %1634 = vmatpush1.bf16.xpose.msra.mxu0 0
        %1635 = vmatprep.subr.bf16.mxu0 0
        %1636 = vmatpush1.bf16.xpose.msra.mxu0 0
        %1637 = vmatprep.subr.bf16.mxu0 0
        %1638 = vmatpush1.bf16.xpose.msra.mxu0 0
        %1639 = vmatprep.subr.bf16.mxu0 0
        %1640 = vmatpush1.bf16.xpose.msra.mxu0 0
        %1641 = vmatprep.subr.bf16.mxu0 0
        %1642 = vmatpush1.bf16.xpose.msra.mxu0 0
        %1643 = vmatprep.subr.bf16.mxu0 0
        %1644 = vmatpush1.bf16.xpose.msra.mxu0 0
        %1645 = vmatprep.subr.bf16.mxu0 0
        %1646 = vmatpush1.bf16.xpose.msra.mxu0 0
        %1647 = vmatprep.subr.bf16.mxu0 0
        %1648 = vmatpush1.bf16.xpose.msra.mxu0 0
        %1649 = vmatprep.subr.bf16.mxu0 0
        %1650 = vmatpush1.bf16.xpose.msra.mxu0 0
        %1651 = vmatprep.subr.bf16.mxu0 0
        %1652 = vmatpush1.bf16.xpose.msra.mxu0 0
        %1653 = vmatprep.subr.bf16.mxu0 0
        %1654 = vmatpush1.bf16.xpose.msra.mxu0 0
        %1655 = vmatprep.subr.bf16.mxu0 0
        %1656 = vmatpush1.bf16.xpose.msra.mxu0 0
        %1657 = vmatprep.subr.bf16.mxu0 0
        %1658 = vmatpush1.bf16.xpose.msra.mxu0 0
        %1659 = vmatprep.subr.bf16.mxu0 0
        %1660 = vmatpush1.bf16.xpose.msra.mxu0 0
        %1661 = vmatprep.subr.bf16.mxu0 0
        %1662 = vmatpush1.bf16.xpose.msra.mxu0 0
        %1663 = vmatprep.mubr.bf16.mxu0 0
        %1664 = vmatmul.mubr.bf16.gmra.mrb[0].mxu0 %v1626
        %v1665 = vpop.f32.mrb[0].mxu0
        %v1666 = vadd.f32 0.0, %v1665
        %v1667 = vpop.f32.mrb[0].mxu0
        %v1668 = vpop.f32.mrb[0].mxu0
        %v1669 = vpop.f32.mrb[0].mxu0
        %1670 = vdwg.mxu0
        %v1672 = vsel %vm1394, %v1336, 0
        %v1675 = vsel %vm1394, %v1364, 0
        %1677 = vmatprep.subr.bf16.mxu0 0
        %1678 = vmatpush1.bf16.xpose.msra.mxu0 %v1675
        %1679 = vmatprep.subr.bf16.mxu0 0
        %1680 = vmatpush1.bf16.xpose.msra.mxu0 0
        %1681 = vmatprep.subr.bf16.mxu0 0
        %1682 = vmatpush1.bf16.xpose.msra.mxu0 0
        %1683 = vmatprep.subr.bf16.mxu0 0
        %1684 = vmatpush1.bf16.xpose.msra.mxu0 0
        %1685 = vmatprep.subr.bf16.mxu0 0
        %1686 = vmatpush1.bf16.xpose.msra.mxu0 0
        %1687 = vmatprep.subr.bf16.mxu0 0
        %1688 = vmatpush1.bf16.xpose.msra.mxu0 0
        %1689 = vmatprep.subr.bf16.mxu0 0
        %1690 = vmatpush1.bf16.xpose.msra.mxu0 0
        %1691 = vmatprep.subr.bf16.mxu0 0
        %1692 = vmatpush1.bf16.xpose.msra.mxu0 0
        %1693 = vmatprep.subr.bf16.mxu0 0
        %1694 = vmatpush1.bf16.xpose.msra.mxu0 0
        %1695 = vmatprep.subr.bf16.mxu0 0
        %1696 = vmatpush1.bf16.xpose.msra.mxu0 0
        %1697 = vmatprep.subr.bf16.mxu0 0
        %1698 = vmatpush1.bf16.xpose.msra.mxu0 0
        %1699 = vmatprep.subr.bf16.mxu0 0
        %1700 = vmatpush1.bf16.xpose.msra.mxu0 0
        %1701 = vmatprep.subr.bf16.mxu0 0
        %1702 = vmatpush1.bf16.xpose.msra.mxu0 0
        %1703 = vmatprep.subr.bf16.mxu0 0
        %1704 = vmatpush1.bf16.xpose.msra.mxu0 0
        %1705 = vmatprep.subr.bf16.mxu0 0
        %1706 = vmatpush1.bf16.xpose.msra.mxu0 0
        %1707 = vmatprep.subr.bf16.mxu0 0
        %1708 = vmatpush1.bf16.xpose.msra.mxu0 0
        %1709 = vmatprep.mubr.bf16.mxu0 0
        %1710 = vmatmul.mubr.bf16.gmra.mrb[0].mxu0 %v1672
        %v1711 = vpop.f32.mrb[0].mxu0
        %v1712 = vadd.f32 0.0, %v1711
        %v1713 = vpop.f32.mrb[0].mxu0
        %v1714 = vpop.f32.mrb[0].mxu0
        %v1715 = vpop.f32.mrb[0].mxu0
        %1716 = vdwg.mxu0
        %v1718 = vsel %vm1394, %v1337, 0
        %v1721 = vsel %vm1394, %v1365, 0
        %1723 = vmatprep.subr.bf16.mxu0 0
        %1724 = vmatpush1.bf16.xpose.msra.mxu0 %v1721
        %1725 = vmatprep.subr.bf16.mxu0 0
        %1726 = vmatpush1.bf16.xpose.msra.mxu0 0
        %1727 = vmatprep.subr.bf16.mxu0 0
        %1728 = vmatpush1.bf16.xpose.msra.mxu0 0
        %1729 = vmatprep.subr.bf16.mxu0 0
        %1730 = vmatpush1.bf16.xpose.msra.mxu0 0
        %1731 = vmatprep.subr.bf16.mxu0 0
        %1732 = vmatpush1.bf16.xpose.msra.mxu0 0
        %1733 = vmatprep.subr.bf16.mxu0 0
        %1734 = vmatpush1.bf16.xpose.msra.mxu0 0
        %1735 = vmatprep.subr.bf16.mxu0 0
        %1736 = vmatpush1.bf16.xpose.msra.mxu0 0
        %1737 = vmatprep.subr.bf16.mxu0 0
        %1738 = vmatpush1.bf16.xpose.msra.mxu0 0
        %1739 = vmatprep.subr.bf16.mxu0 0
        %1740 = vmatpush1.bf16.xpose.msra.mxu0 0
        %1741 = vmatprep.subr.bf16.mxu0 0
        %1742 = vmatpush1.bf16.xpose.msra.mxu0 0
        %1743 = vmatprep.subr.bf16.mxu0 0
        %1744 = vmatpush1.bf16.xpose.msra.mxu0 0
        %1745 = vmatprep.subr.bf16.mxu0 0
        %1746 = vmatpush1.bf16.xpose.msra.mxu0 0
        %1747 = vmatprep.subr.bf16.mxu0 0
        %1748 = vmatpush1.bf16.xpose.msra.mxu0 0
        %1749 = vmatprep.subr.bf16.mxu0 0
        %1750 = vmatpush1.bf16.xpose.msra.mxu0 0
        %1751 = vmatprep.subr.bf16.mxu0 0
        %1752 = vmatpush1.bf16.xpose.msra.mxu0 0
        %1753 = vmatprep.subr.bf16.mxu0 0
        %1754 = vmatpush1.bf16.xpose.msra.mxu0 0
        %1755 = vmatprep.mubr.bf16.mxu0 0
        %1756 = vmatmul.mubr.bf16.gmra.mrb[0].mxu0 %v1718
        %v1757 = vpop.f32.mrb[0].mxu0
        %v1758 = vadd.f32 0.0, %v1757
        %v1759 = vpop.f32.mrb[0].mxu0
        %v1760 = vpop.f32.mrb[0].mxu0
        %v1761 = vpop.f32.mrb[0].mxu0
        %1762 = vdwg.mxu0
        %v1763 = vadd.f32 %v1436, %v1070
        %v1764 = vadd.f32 %v1482, %v1070
        %v1765 = vadd.f32 %v1528, %v1070
        %v1766 = vadd.f32 %v1574, %v1070
        %v1767 = vadd.f32 %v1620, %v1071
        %v1768 = vadd.f32 %v1666, %v1071
        %v1769 = vadd.f32 %v1712, %v1071
        %v1770 = vadd.f32 %v1758, %v1071
        %v1771 = vsel %vm1394, %v1763, -inf
        %1772 = vmax.xlane.f32.xlu0 %v1771
        %v1773 = vpop.xlane.xlu0 %1772
        %v1774 = vsel %vm1394, %v1764, -inf
        %1775 = vmax.xlane.f32.xlu0 %v1774
        %v1776 = vpop.xlane.xlu0 %1775
        %v1777 = vsel %vm1394, %v1765, -inf
        %1778 = vmax.xlane.f32.xlu0 %v1777
        %v1779 = vpop.xlane.xlu0 %1778
        %v1780 = vsel %vm1394, %v1766, -inf
        %1781 = vmax.xlane.f32.xlu0 %v1780
        %v1782 = vpop.xlane.xlu0 %1781
        %v1783 = vsel %vm1394, %v1767, -inf
        %1784 = vmax.xlane.f32.xlu0 %v1783
        %v1785 = vpop.xlane.xlu0 %1784
        %v1786 = vsel %vm1394, %v1768, -inf
        %1787 = vmax.xlane.f32.xlu0 %v1786
        %v1788 = vpop.xlane.xlu0 %1787
        %v1789 = vsel %vm1394, %v1769, -inf
        %1790 = vmax.xlane.f32.xlu0 %v1789
        %v1791 = vpop.xlane.xlu0 %1790
        %v1792 = vsel %vm1394, %v1770, -inf
        %1793 = vmax.xlane.f32.xlu0 %v1792
        %v1794 = vpop.xlane.xlu0 %1793
        %v1795 = vsub.f32 %v1763, %v1773
        %v1796 = vsub.f32 %v1764, %v1776
        %v1797 = vsub.f32 %v1765, %v1779
        %v1798 = vsub.f32 %v1766, %v1782
        %v1799 = vsub.f32 %v1767, %v1785
        %v1800 = vsub.f32 %v1768, %v1788
        %v1801 = vsub.f32 %v1769, %v1791
        %v1802 = vsub.f32 %v1770, %v1794
        %v1803 = vmul.f32 %v1795, 1.442695
        %v1804 = vpow.pop %v1803
        %v1805 = vmul.f32 %v1796, 1.442695
        %v1806 = vpow.pop %v1805
        %v1807 = vmul.f32 %v1797, 1.442695
        %v1808 = vpow.pop %v1807
        %v1809 = vmul.f32 %v1798, 1.442695
        %v1810 = vpow.pop %v1809
        %v1811 = vmul.f32 %v1799, 1.442695
        %v1812 = vpow.pop %v1811
        %v1813 = vmul.f32 %v1800, 1.442695
        %v1814 = vpow.pop %v1813
        %v1815 = vmul.f32 %v1801, 1.442695
        %v1816 = vpow.pop %v1815
        %v1817 = vmul.f32 %v1802, 1.442695
        %v1818 = vpow.pop %v1817
        %v1819 = vsel %vm1394, %v1804, 0.0
        %1820 = vadd.xlane.f32.xlu0 %v1819
        %v1821 = vpop.xlane.xlu0 %1820
        %v1822 = vsel %vm1394, %v1806, 0.0
        %1823 = vadd.xlane.f32.xlu0 %v1822
        %v1824 = vpop.xlane.xlu0 %1823
        %v1825 = vsel %vm1394, %v1808, 0.0
        %1826 = vadd.xlane.f32.xlu0 %v1825
        %v1827 = vpop.xlane.xlu0 %1826
        %v1828 = vsel %vm1394, %v1810, 0.0
        %1829 = vadd.xlane.f32.xlu0 %v1828
        %v1830 = vpop.xlane.xlu0 %1829
        %v1831 = vsel %vm1394, %v1812, 0.0
        %1832 = vadd.xlane.f32.xlu0 %v1831
        %v1833 = vpop.xlane.xlu0 %1832
        %v1834 = vsel %vm1394, %v1814, 0.0
        %1835 = vadd.xlane.f32.xlu0 %v1834
        %v1836 = vpop.xlane.xlu0 %1835
        %v1837 = vsel %vm1394, %v1816, 0.0
        %1838 = vadd.xlane.f32.xlu0 %v1837
        %v1839 = vpop.xlane.xlu0 %1838
        %v1840 = vsel %vm1394, %v1818, 0.0
        %1841 = vadd.xlane.f32.xlu0 %v1840
        %v1842 = vpop.xlane.xlu0 %1841
        %v1843 = vrcp.pop %v1821
        %v1844 = vrcp.pop %v1824
        %v1845 = vrcp.pop %v1827
        %v1846 = vrcp.pop %v1830
        %v1847 = vrcp.pop %v1833
        %v1848 = vrcp.pop %v1836
        %v1849 = vrcp.pop %v1839
        %v1850 = vrcp.pop %v1842
        %v1851 = vmul.f32 %v1804, %v1843
        %v1852 = vmul.f32 %v1806, %v1844
        %v1853 = vmul.f32 %v1808, %v1845
        %v1854 = vmul.f32 %v1810, %v1846
        %v1855 = vmul.f32 %v1812, %v1847
        %v1856 = vmul.f32 %v1814, %v1848
        %v1857 = vmul.f32 %v1816, %v1849
        %v1858 = vmul.f32 %v1818, %v1850
        %v1859 = vpack.c.bf16 %v1851, %v1851
        %v1860 = vpack.c.bf16 %v1852, %v1852
        %v1861 = vpack.c.bf16 %v1853, %v1853
        %v1862 = vpack.c.bf16 %v1854, %v1854
        %v1863 = vpack.c.bf16 %v1855, %v1855
        %v1864 = vpack.c.bf16 %v1856, %v1856
        %v1865 = vpack.c.bf16 %v1857, %v1857
        %v1866 = vpack.c.bf16 %v1858, %v1858
        %v1868 = vsel %vm1394, %v1859, 0
        %vm1870 = vcmask 1043456
        %v1872 = vsel %vm1870, %v1386, 0
        %1874 = vmatprep.subr.bf16.mxu0 0
        %1875 = vmatpush1.bf16.msra.mxu0 %v1872
        %1876 = vmatprep.subr.bf16.mxu0 0
        %1877 = vmatpush1.bf16.msra.mxu0 0
        %1878 = vmatprep.subr.bf16.mxu0 0
        %1879 = vmatpush1.bf16.msra.mxu0 0
        %1880 = vmatprep.subr.bf16.mxu0 0
        %1881 = vmatpush1.bf16.msra.mxu0 0
        %1882 = vmatprep.subr.bf16.mxu0 0
        %1883 = vmatpush1.bf16.msra.mxu0 0
        %1884 = vmatprep.subr.bf16.mxu0 0
        %1885 = vmatpush1.bf16.msra.mxu0 0
        %1886 = vmatprep.subr.bf16.mxu0 0
        %1887 = vmatpush1.bf16.msra.mxu0 0
        %1888 = vmatprep.subr.bf16.mxu0 0
        %1889 = vmatpush1.bf16.msra.mxu0 0
        %1890 = vmatprep.subr.bf16.mxu0 0
        %1891 = vmatpush1.bf16.msra.mxu0 0
        %1892 = vmatprep.subr.bf16.mxu0 0
        %1893 = vmatpush1.bf16.msra.mxu0 0
        %1894 = vmatprep.subr.bf16.mxu0 0
        %1895 = vmatpush1.bf16.msra.mxu0 0
        %1896 = vmatprep.subr.bf16.mxu0 0
        %1897 = vmatpush1.bf16.msra.mxu0 0
        %1898 = vmatprep.subr.bf16.mxu0 0
        %1899 = vmatpush1.bf16.msra.mxu0 0
        %1900 = vmatprep.subr.bf16.mxu0 0
        %1901 = vmatpush1.bf16.msra.mxu0 0
        %1902 = vmatprep.subr.bf16.mxu0 0
        %1903 = vmatpush1.bf16.msra.mxu0 0
        %1904 = vmatprep.subr.bf16.mxu0 0
        %1905 = vmatpush1.bf16.msra.mxu0 0
        %1906 = vmatprep.mubr.bf16.mxu0 0
        %1907 = vmatmul.mubr.bf16.gmra.mrb[0].mxu0 %v1868
        %v1908 = vpop.f32.mrb[0].mxu0
        %v1909 = vadd.f32 0.0, %v1908
        %v1910 = vpop.f32.mrb[0].mxu0
        %v1911 = vpop.f32.mrb[0].mxu0
        %v1912 = vpop.f32.mrb[0].mxu0
        %1913 = vdwg.mxu0
        %v1915 = vsel %vm1394, %v1860, 0
        %v1918 = vsel %vm1870, %v1387, 0
        %1920 = vmatprep.subr.bf16.mxu0 0
        %1921 = vmatpush1.bf16.msra.mxu0 %v1918
        %1922 = vmatprep.subr.bf16.mxu0 0
        %1923 = vmatpush1.bf16.msra.mxu0 0
        %1924 = vmatprep.subr.bf16.mxu0 0
        %1925 = vmatpush1.bf16.msra.mxu0 0
        %1926 = vmatprep.subr.bf16.mxu0 0
        %1927 = vmatpush1.bf16.msra.mxu0 0
        %1928 = vmatprep.subr.bf16.mxu0 0
        %1929 = vmatpush1.bf16.msra.mxu0 0
        %1930 = vmatprep.subr.bf16.mxu0 0
        %1931 = vmatpush1.bf16.msra.mxu0 0
        %1932 = vmatprep.subr.bf16.mxu0 0
        %1933 = vmatpush1.bf16.msra.mxu0 0
        %1934 = vmatprep.subr.bf16.mxu0 0
        %1935 = vmatpush1.bf16.msra.mxu0 0
        %1936 = vmatprep.subr.bf16.mxu0 0
        %1937 = vmatpush1.bf16.msra.mxu0 0
        %1938 = vmatprep.subr.bf16.mxu0 0
        %1939 = vmatpush1.bf16.msra.mxu0 0
        %1940 = vmatprep.subr.bf16.mxu0 0
        %1941 = vmatpush1.bf16.msra.mxu0 0
        %1942 = vmatprep.subr.bf16.mxu0 0
        %1943 = vmatpush1.bf16.msra.mxu0 0
        %1944 = vmatprep.subr.bf16.mxu0 0
        %1945 = vmatpush1.bf16.msra.mxu0 0
        %1946 = vmatprep.subr.bf16.mxu0 0
        %1947 = vmatpush1.bf16.msra.mxu0 0
        %1948 = vmatprep.subr.bf16.mxu0 0
        %1949 = vmatpush1.bf16.msra.mxu0 0
        %1950 = vmatprep.subr.bf16.mxu0 0
        %1951 = vmatpush1.bf16.msra.mxu0 0
        %1952 = vmatprep.mubr.bf16.mxu0 0
        %1953 = vmatmul.mubr.bf16.gmra.mrb[0].mxu0 %v1915
        %v1954 = vpop.f32.mrb[0].mxu0
        %v1955 = vadd.f32 0.0, %v1954
        %v1956 = vpop.f32.mrb[0].mxu0
        %v1957 = vpop.f32.mrb[0].mxu0
        %v1958 = vpop.f32.mrb[0].mxu0
        %1959 = vdwg.mxu0
        %v1961 = vsel %vm1394, %v1861, 0
        %v1964 = vsel %vm1870, %v1388, 0
        %1966 = vmatprep.subr.bf16.mxu0 0
        %1967 = vmatpush1.bf16.msra.mxu0 %v1964
        %1968 = vmatprep.subr.bf16.mxu0 0
        %1969 = vmatpush1.bf16.msra.mxu0 0
        %1970 = vmatprep.subr.bf16.mxu0 0
        %1971 = vmatpush1.bf16.msra.mxu0 0
        %1972 = vmatprep.subr.bf16.mxu0 0
        %1973 = vmatpush1.bf16.msra.mxu0 0
        %1974 = vmatprep.subr.bf16.mxu0 0
        %1975 = vmatpush1.bf16.msra.mxu0 0
        %1976 = vmatprep.subr.bf16.mxu0 0
        %1977 = vmatpush1.bf16.msra.mxu0 0
        %1978 = vmatprep.subr.bf16.mxu0 0
        %1979 = vmatpush1.bf16.msra.mxu0 0
        %1980 = vmatprep.subr.bf16.mxu0 0
        %1981 = vmatpush1.bf16.msra.mxu0 0
        %1982 = vmatprep.subr.bf16.mxu0 0
        %1983 = vmatpush1.bf16.msra.mxu0 0
        %1984 = vmatprep.subr.bf16.mxu0 0
        %1985 = vmatpush1.bf16.msra.mxu0 0
        %1986 = vmatprep.subr.bf16.mxu0 0
        %1987 = vmatpush1.bf16.msra.mxu0 0
        %1988 = vmatprep.subr.bf16.mxu0 0
        %1989 = vmatpush1.bf16.msra.mxu0 0
        %1990 = vmatprep.subr.bf16.mxu0 0
        %1991 = vmatpush1.bf16.msra.mxu0 0
        %1992 = vmatprep.subr.bf16.mxu0 0
        %1993 = vmatpush1.bf16.msra.mxu0 0
        %1994 = vmatprep.subr.bf16.mxu0 0
        %1995 = vmatpush1.bf16.msra.mxu0 0
        %1996 = vmatprep.subr.bf16.mxu0 0
        %1997 = vmatpush1.bf16.msra.mxu0 0
        %1998 = vmatprep.mubr.bf16.mxu0 0
        %1999 = vmatmul.mubr.bf16.gmra.mrb[0].mxu0 %v1961
        %v2000 = vpop.f32.mrb[0].mxu0
        %v2001 = vadd.f32 0.0, %v2000
        %v2002 = vpop.f32.mrb[0].mxu0
        %v2003 = vpop.f32.mrb[0].mxu0
        %v2004 = vpop.f32.mrb[0].mxu0
        %2005 = vdwg.mxu0
        %v2007 = vsel %vm1394, %v1862, 0
        %v2010 = vsel %vm1870, %v1389, 0
        %2012 = vmatprep.subr.bf16.mxu0 0
        %2013 = vmatpush1.bf16.msra.mxu0 %v2010
        %2014 = vmatprep.subr.bf16.mxu0 0
        %2015 = vmatpush1.bf16.msra.mxu0 0
        %2016 = vmatprep.subr.bf16.mxu0 0
        %2017 = vmatpush1.bf16.msra.mxu0 0
        %2018 = vmatprep.subr.bf16.mxu0 0
        %2019 = vmatpush1.bf16.msra.mxu0 0
        %2020 = vmatprep.subr.bf16.mxu0 0
        %2021 = vmatpush1.bf16.msra.mxu0 0
        %2022 = vmatprep.subr.bf16.mxu0 0
        %2023 = vmatpush1.bf16.msra.mxu0 0
        %2024 = vmatprep.subr.bf16.mxu0 0
        %2025 = vmatpush1.bf16.msra.mxu0 0
        %2026 = vmatprep.subr.bf16.mxu0 0
        %2027 = vmatpush1.bf16.msra.mxu0 0
        %2028 = vmatprep.subr.bf16.mxu0 0
        %2029 = vmatpush1.bf16.msra.mxu0 0
        %2030 = vmatprep.subr.bf16.mxu0 0
        %2031 = vmatpush1.bf16.msra.mxu0 0
        %2032 = vmatprep.subr.bf16.mxu0 0
        %2033 = vmatpush1.bf16.msra.mxu0 0
        %2034 = vmatprep.subr.bf16.mxu0 0
        %2035 = vmatpush1.bf16.msra.mxu0 0
        %2036 = vmatprep.subr.bf16.mxu0 0
        %2037 = vmatpush1.bf16.msra.mxu0 0
        %2038 = vmatprep.subr.bf16.mxu0 0
        %2039 = vmatpush1.bf16.msra.mxu0 0
        %2040 = vmatprep.subr.bf16.mxu0 0
        %2041 = vmatpush1.bf16.msra.mxu0 0
        %2042 = vmatprep.subr.bf16.mxu0 0
        %2043 = vmatpush1.bf16.msra.mxu0 0
        %2044 = vmatprep.mubr.bf16.mxu0 0
        %2045 = vmatmul.mubr.bf16.gmra.mrb[0].mxu0 %v2007
        %v2046 = vpop.f32.mrb[0].mxu0
        %v2047 = vadd.f32 0.0, %v2046
        %v2048 = vpop.f32.mrb[0].mxu0
        %v2049 = vpop.f32.mrb[0].mxu0
        %v2050 = vpop.f32.mrb[0].mxu0
        %2051 = vdwg.mxu0
        %v2053 = vsel %vm1394, %v1863, 0
        %v2056 = vsel %vm1870, %v1390, 0
        %2058 = vmatprep.subr.bf16.mxu0 0
        %2059 = vmatpush1.bf16.msra.mxu0 %v2056
        %2060 = vmatprep.subr.bf16.mxu0 0
        %2061 = vmatpush1.bf16.msra.mxu0 0
        %2062 = vmatprep.subr.bf16.mxu0 0
        %2063 = vmatpush1.bf16.msra.mxu0 0
        %2064 = vmatprep.subr.bf16.mxu0 0
        %2065 = vmatpush1.bf16.msra.mxu0 0
        %2066 = vmatprep.subr.bf16.mxu0 0
        %2067 = vmatpush1.bf16.msra.mxu0 0
        %2068 = vmatprep.subr.bf16.mxu0 0
        %2069 = vmatpush1.bf16.msra.mxu0 0
        %2070 = vmatprep.subr.bf16.mxu0 0
        %2071 = vmatpush1.bf16.msra.mxu0 0
        %2072 = vmatprep.subr.bf16.mxu0 0
        %2073 = vmatpush1.bf16.msra.mxu0 0
        %2074 = vmatprep.subr.bf16.mxu0 0
        %2075 = vmatpush1.bf16.msra.mxu0 0
        %2076 = vmatprep.subr.bf16.mxu0 0
        %2077 = vmatpush1.bf16.msra.mxu0 0
        %2078 = vmatprep.subr.bf16.mxu0 0
        %2079 = vmatpush1.bf16.msra.mxu0 0
        %2080 = vmatprep.subr.bf16.mxu0 0
        %2081 = vmatpush1.bf16.msra.mxu0 0
        %2082 = vmatprep.subr.bf16.mxu0 0
        %2083 = vmatpush1.bf16.msra.mxu0 0
        %2084 = vmatprep.subr.bf16.mxu0 0
        %2085 = vmatpush1.bf16.msra.mxu0 0
        %2086 = vmatprep.subr.bf16.mxu0 0
        %2087 = vmatpush1.bf16.msra.mxu0 0
        %2088 = vmatprep.subr.bf16.mxu0 0
        %2089 = vmatpush1.bf16.msra.mxu0 0
        %2090 = vmatprep.mubr.bf16.mxu0 0
        %2091 = vmatmul.mubr.bf16.gmra.mrb[0].mxu0 %v2053
        %v2092 = vpop.f32.mrb[0].mxu0
        %v2093 = vadd.f32 0.0, %v2092
        %v2094 = vpop.f32.mrb[0].mxu0
        %v2095 = vpop.f32.mrb[0].mxu0
        %v2096 = vpop.f32.mrb[0].mxu0
        %2097 = vdwg.mxu0
        %v2099 = vsel %vm1394, %v1864, 0
        %v2102 = vsel %vm1870, %v1391, 0
        %2104 = vmatprep.subr.bf16.mxu0 0
        %2105 = vmatpush1.bf16.msra.mxu0 %v2102
        %2106 = vmatprep.subr.bf16.mxu0 0
        %2107 = vmatpush1.bf16.msra.mxu0 0
        %2108 = vmatprep.subr.bf16.mxu0 0
        %2109 = vmatpush1.bf16.msra.mxu0 0
        %2110 = vmatprep.subr.bf16.mxu0 0
        %2111 = vmatpush1.bf16.msra.mxu0 0
        %2112 = vmatprep.subr.bf16.mxu0 0
        %2113 = vmatpush1.bf16.msra.mxu0 0
        %2114 = vmatprep.subr.bf16.mxu0 0
        %2115 = vmatpush1.bf16.msra.mxu0 0
        %2116 = vmatprep.subr.bf16.mxu0 0
        %2117 = vmatpush1.bf16.msra.mxu0 0
        %2118 = vmatprep.subr.bf16.mxu0 0
        %2119 = vmatpush1.bf16.msra.mxu0 0
        %2120 = vmatprep.subr.bf16.mxu0 0
        %2121 = vmatpush1.bf16.msra.mxu0 0
        %2122 = vmatprep.subr.bf16.mxu0 0
        %2123 = vmatpush1.bf16.msra.mxu0 0
        %2124 = vmatprep.subr.bf16.mxu0 0
        %2125 = vmatpush1.bf16.msra.mxu0 0
        %2126 = vmatprep.subr.bf16.mxu0 0
        %2127 = vmatpush1.bf16.msra.mxu0 0
        %2128 = vmatprep.subr.bf16.mxu0 0
        %2129 = vmatpush1.bf16.msra.mxu0 0
        %2130 = vmatprep.subr.bf16.mxu0 0
        %2131 = vmatpush1.bf16.msra.mxu0 0
        %2132 = vmatprep.subr.bf16.mxu0 0
        %2133 = vmatpush1.bf16.msra.mxu0 0
        %2134 = vmatprep.subr.bf16.mxu0 0
        %2135 = vmatpush1.bf16.msra.mxu0 0
        %2136 = vmatprep.mubr.bf16.mxu0 0
        %2137 = vmatmul.mubr.bf16.gmra.mrb[0].mxu0 %v2099
        %v2138 = vpop.f32.mrb[0].mxu0
        %v2139 = vadd.f32 0.0, %v2138
        %v2140 = vpop.f32.mrb[0].mxu0
        %v2141 = vpop.f32.mrb[0].mxu0
        %v2142 = vpop.f32.mrb[0].mxu0
        %2143 = vdwg.mxu0
        %v2145 = vsel %vm1394, %v1865, 0
        %v2148 = vsel %vm1870, %v1392, 0
        %2150 = vmatprep.subr.bf16.mxu0 0
        %2151 = vmatpush1.bf16.msra.mxu0 %v2148
        %2152 = vmatprep.subr.bf16.mxu0 0
        %2153 = vmatpush1.bf16.msra.mxu0 0
        %2154 = vmatprep.subr.bf16.mxu0 0
        %2155 = vmatpush1.bf16.msra.mxu0 0
        %2156 = vmatprep.subr.bf16.mxu0 0
        %2157 = vmatpush1.bf16.msra.mxu0 0
        %2158 = vmatprep.subr.bf16.mxu0 0
        %2159 = vmatpush1.bf16.msra.mxu0 0
        %2160 = vmatprep.subr.bf16.mxu0 0
        %2161 = vmatpush1.bf16.msra.mxu0 0
        %2162 = vmatprep.subr.bf16.mxu0 0
        %2163 = vmatpush1.bf16.msra.mxu0 0
        %2164 = vmatprep.subr.bf16.mxu0 0
        %2165 = vmatpush1.bf16.msra.mxu0 0
        %2166 = vmatprep.subr.bf16.mxu0 0
        %2167 = vmatpush1.bf16.msra.mxu0 0
        %2168 = vmatprep.subr.bf16.mxu0 0
        %2169 = vmatpush1.bf16.msra.mxu0 0
        %2170 = vmatprep.subr.bf16.mxu0 0
        %2171 = vmatpush1.bf16.msra.mxu0 0
        %2172 = vmatprep.subr.bf16.mxu0 0
        %2173 = vmatpush1.bf16.msra.mxu0 0
        %2174 = vmatprep.subr.bf16.mxu0 0
        %2175 = vmatpush1.bf16.msra.mxu0 0
        %2176 = vmatprep.subr.bf16.mxu0 0
        %2177 = vmatpush1.bf16.msra.mxu0 0
        %2178 = vmatprep.subr.bf16.mxu0 0
        %2179 = vmatpush1.bf16.msra.mxu0 0
        %2180 = vmatprep.subr.bf16.mxu0 0
        %2181 = vmatpush1.bf16.msra.mxu0 0
        %2182 = vmatprep.mubr.bf16.mxu0 0
        %2183 = vmatmul.mubr.bf16.gmra.mrb[0].mxu0 %v2145
        %v2184 = vpop.f32.mrb[0].mxu0
        %v2185 = vadd.f32 0.0, %v2184
        %v2186 = vpop.f32.mrb[0].mxu0
        %v2187 = vpop.f32.mrb[0].mxu0
        %v2188 = vpop.f32.mrb[0].mxu0
        %2189 = vdwg.mxu0
        %v2191 = vsel %vm1394, %v1866, 0
        %v2194 = vsel %vm1870, %v1393, 0
        %2196 = vmatprep.subr.bf16.mxu0 0
        %2197 = vmatpush1.bf16.msra.mxu0 %v2194
        %2198 = vmatprep.subr.bf16.mxu0 0
        %2199 = vmatpush1.bf16.msra.mxu0 0
        %2200 = vmatprep.subr.bf16.mxu0 0
        %2201 = vmatpush1.bf16.msra.mxu0 0
        %2202 = vmatprep.subr.bf16.mxu0 0
        %2203 = vmatpush1.bf16.msra.mxu0 0
        %2204 = vmatprep.subr.bf16.mxu0 0
        %2205 = vmatpush1.bf16.msra.mxu0 0
        %2206 = vmatprep.subr.bf16.mxu0 0
        %2207 = vmatpush1.bf16.msra.mxu0 0
        %2208 = vmatprep.subr.bf16.mxu0 0
        %2209 = vmatpush1.bf16.msra.mxu0 0
        %2210 = vmatprep.subr.bf16.mxu0 0
        %2211 = vmatpush1.bf16.msra.mxu0 0
        %2212 = vmatprep.subr.bf16.mxu0 0
        %2213 = vmatpush1.bf16.msra.mxu0 0
        %2214 = vmatprep.subr.bf16.mxu0 0
        %2215 = vmatpush1.bf16.msra.mxu0 0
        %2216 = vmatprep.subr.bf16.mxu0 0
        %2217 = vmatpush1.bf16.msra.mxu0 0
        %2218 = vmatprep.subr.bf16.mxu0 0
        %2219 = vmatpush1.bf16.msra.mxu0 0
        %2220 = vmatprep.subr.bf16.mxu0 0
        %2221 = vmatpush1.bf16.msra.mxu0 0
        %2222 = vmatprep.subr.bf16.mxu0 0
        %2223 = vmatpush1.bf16.msra.mxu0 0
        %2224 = vmatprep.subr.bf16.mxu0 0
        %2225 = vmatpush1.bf16.msra.mxu0 0
        %2226 = vmatprep.subr.bf16.mxu0 0
        %2227 = vmatpush1.bf16.msra.mxu0 0
        %2228 = vmatprep.mubr.bf16.mxu0 0
        %2229 = vmatmul.mubr.bf16.gmra.mrb[0].mxu0 %v2191
        %v2230 = vpop.f32.mrb[0].mxu0
        %v2231 = vadd.f32 0.0, %v2230
        %v2232 = vpop.f32.mrb[0].mxu0
        %v2233 = vpop.f32.mrb[0].mxu0
        %v2234 = vpop.f32.mrb[0].mxu0
        %2235 = vdwg.mxu0
        %2238 = vrot.lane.b32.xlu0 %v1955, 8
        %v2239 = vpop.permute.xlu0 %2238
        %2240 = vrot.lane.b32.xlu0 %v2139, 8
        %v2241 = vpop.permute.xlu0 %2240
        %2246 = vrot.lane.b32.xlu0 %v2001, 16
        %v2247 = vpop.permute.xlu0 %2246
        %2248 = vrot.lane.b32.xlu0 %v2185, 16
        %v2249 = vpop.permute.xlu0 %2248
        %2254 = vrot.lane.b32.xlu0 %v2047, 24
        %v2255 = vpop.permute.xlu0 %2254
        %2256 = vrot.lane.b32.xlu0 %v2231, 24
        %v2257 = vpop.permute.xlu0 %2256
        %v2260 = vsel %vm1394, %v1909, %v2239
        %v2261 = vsel %vm1394, %v2093, %v2241
        %vm2262 = vcmask 130048
        %v2263 = vsel %vm2262, %v2260, %v2247
        %v2264 = vsel %vm2262, %v2261, %v2249
        %vm2265 = vcmask 195584
        %v2266 = vsel %vm2265, %v2263, %v2255
        %v2267 = vsel %vm2265, %v2264, %v2257
        %v2268 = vpack.c.bf16 %v2267, %v2266
        %v2269 = vld [vmem:[%s1010] sm:$0xf]
        %v2270 = vld [vmem:[%s1010 + $0x4] sm:$0xf]
        %v2271 = vld [vmem:[%s1010 + $0x8] sm:$0xf]
        %v2272 = vld [vmem:[%s1010 + $0xc] sm:$0xf]
        %v2273 = vld [vmem:[%s859] sm:$0x1]
        %v2275 = vlaneseq
        %v2276 = vshrl.u32 %v2275, 7
        %v2277 = vsub.s32 0, %v2276
        %v2278 = vrot.slane %v2273, %v2277
        %v2284 = vunpack.c.l.b16 %v2269
        %v2285 = vunpack.c.l.b16 %v2270
        %v2286 = vunpack.c.l.b16 %v2271
        %v2287 = vunpack.c.l.b16 %v2272
        %v2288 = vpack.c.b16 %v2285, %v2284
        %v2289 = vpack.c.b16 %v2287, %v2286
        %v2293 = vsel %vm1076, %v2268, 0
        %2295 = vmatprep.subr.bf16.mxu0 0
        %2296 = vmatpush1.bf16.msra.mxu0 %v2288
        %2297 = vmatprep.subr.bf16.mxu0 0
        %2298 = vmatpush1.bf16.msra.mxu0 %v2289
        %2299 = vmatprep.subr.bf16.mxu0 0
        %2300 = vmatpush1.bf16.msra.mxu0 0
        %2301 = vmatprep.subr.bf16.mxu0 0
        %2302 = vmatpush1.bf16.msra.mxu0 0
        %2303 = vmatprep.subr.bf16.mxu0 0
        %2304 = vmatpush1.bf16.msra.mxu0 0
        %2305 = vmatprep.subr.bf16.mxu0 0
        %2306 = vmatpush1.bf16.msra.mxu0 0
        %2307 = vmatprep.subr.bf16.mxu0 0
        %2308 = vmatpush1.bf16.msra.mxu0 0
        %2309 = vmatprep.subr.bf16.mxu0 0
        %2310 = vmatpush1.bf16.msra.mxu0 0
        %2311 = vmatprep.subr.bf16.mxu0 0
        %2312 = vmatpush1.bf16.msra.mxu0 0
        %2313 = vmatprep.subr.bf16.mxu0 0
        %2314 = vmatpush1.bf16.msra.mxu0 0
        %2315 = vmatprep.subr.bf16.mxu0 0
        %2316 = vmatpush1.bf16.msra.mxu0 0
        %2317 = vmatprep.subr.bf16.mxu0 0
        %2318 = vmatpush1.bf16.msra.mxu0 0
        %2319 = vmatprep.subr.bf16.mxu0 0
        %2320 = vmatpush1.bf16.msra.mxu0 0
        %2321 = vmatprep.subr.bf16.mxu0 0
        %2322 = vmatpush1.bf16.msra.mxu0 0
        %2323 = vmatprep.subr.bf16.mxu0 0
        %2324 = vmatpush1.bf16.msra.mxu0 0
        %2325 = vmatprep.subr.bf16.mxu0 0
        %2326 = vmatpush1.bf16.msra.mxu0 0
        %2327 = vmatprep.mubr.bf16.mxu0 0
        %2328 = vmatmul.mubr.bf16.gmra.mrb[0].mxu0 %v2293
        %v2329 = vpop.f32.mrb[0].mxu0
        %v2330 = vadd.f32 %v2278, %v2329
        %v2331 = vpop.f32.mrb[0].mxu0
        %v2332 = vpop.f32.mrb[0].mxu0
        %v2333 = vadd.f32 %v2278, %v2332
        %v2334 = vpop.f32.mrb[0].mxu0
        %2335 = vdwg.mxu0
        %v2336 = vadd.f32 %v2330, %v1046
        %v2337 = vadd.f32 %v2333, %v1047
        %v2338 = vld [vmem:[%s992 + $0x1] sm:$0x1]
        %v2339 = vld [vmem:[%s996 + $0x1] sm:$0x1]
        %v2340 = vsel %vm1076, %v2336, 0.0
        %2341 = vadd.xlane.f32.xlu0 %v2340
        %v2342 = vpop.xlane.xlu0 %2341
        %v2343 = vsel %vm1076, %v2337, 0.0
        %2344 = vadd.xlane.f32.xlu0 %v2343
        %v2345 = vpop.xlane.xlu0 %2344
        %v2346 = vmul.f32 %v2342, %v1083
        %v2347 = vmul.f32 %v2345, %v1083
        %v2348 = vsub.f32 %v2336, %v2346
        %v2349 = vsub.f32 %v2337, %v2347
        %v2350 = vmul.f32 %v2348, %v2348
        %v2351 = vmul.f32 %v2349, %v2349
        %v2352 = vsel %vm1076, %v2350, 0.0
        %2353 = vadd.xlane.f32.xlu0 %v2352
        %v2354 = vpop.xlane.xlu0 %2353
        %v2355 = vsel %vm1076, %v2351, 0.0
        %2356 = vadd.xlane.f32.xlu0 %v2355
        %v2357 = vpop.xlane.xlu0 %2356
        %v2358 = vmul.f32 %v2354, %v1083
        %v2359 = vmul.f32 %v2357, %v1083
        %v2360 = vadd.f32 %v2358, 1e-06
        %v2361 = vadd.f32 %v2359, 1e-06
        %v2362 = vrsqrt.pop %v2360
        %v2363 = vrsqrt.pop %v2361
        %v2364 = vmul.f32 %v2348, %v2362
        %v2365 = vmul.f32 %v2349, %v2363
        %v2366 = vlaneseq
        %v2367 = vshrl.u32 %v2366, 7
        %v2368 = vsub.s32 0, %v2367
        %v2369 = vrot.slane %v2338, %v2368
        %v2370 = vmul.f32 %v2364, %v2369
        %v2371 = vmul.f32 %v2365, %v2369
        %v2372 = vlaneseq
        %v2373 = vshrl.u32 %v2372, 7
        %v2374 = vsub.s32 0, %v2373
        %v2375 = vrot.slane %v2339, %v2374
        %v2376 = vadd.f32 %v2370, %v2375
        %v2377 = vadd.f32 %v2371, %v2375
        %v2378 = vpack.c.bf16 %v2377, %v2376
        %v2379 = vld [vmem:[%s868] sm:$0xf]
        %v2380 = vld [vmem:[%s868 + $0x4] sm:$0xf]
        %v2381 = vld [vmem:[%s868 + $0x8] sm:$0xf]
        %v2382 = vld [vmem:[%s868 + $0xc] sm:$0xf]
        %s2383 = scalar_lea.vmem %s868, 16 [#allocation11]
        %v2384 = vld [vmem:[%s2383] sm:$0xf]
        %v2385 = vld [vmem:[%s2383 + $0x4] sm:$0xf]
        %v2386 = vld [vmem:[%s2383 + $0x8] sm:$0xf]
        %v2387 = vld [vmem:[%s2383 + $0xc] sm:$0xf]
        %s2388 = scalar_lea.vmem %s868, 32 [#allocation11]
        %v2389 = vld [vmem:[%s2388] sm:$0xf]
        %v2390 = vld [vmem:[%s2388 + $0x4] sm:$0xf]
        %v2391 = vld [vmem:[%s2388 + $0x8] sm:$0xf]
        %v2392 = vld [vmem:[%s2388 + $0xc] sm:$0xf]
        %v2393 = vld [vmem:[%s1014] sm:$0x1]
        %v2394 = vld [vmem:[%s1014 + $0x1] sm:$0x1]
        %v2395 = vld [vmem:[%s1014 + $0x2] sm:$0x1]
        %v2396 = vlaneseq
        %v2397 = vshrl.u32 %v2396, 7
        %v2398 = vsub.s32 0, %v2397
        %v2399 = vrot.slane %v2393, %v2398
        %v2404 = vunpack.c.l.b16 %v2379
        %v2405 = vunpack.c.l.b16 %v2380
        %v2406 = vunpack.c.l.b16 %v2381
        %v2407 = vunpack.c.l.b16 %v2382
        %v2408 = vpack.c.b16 %v2405, %v2404
        %v2409 = vpack.c.b16 %v2407, %v2406
        %v2413 = vsel %vm1076, %v2378, 0
        %2415 = vmatprep.subr.bf16.mxu0 0
        %2416 = vmatpush1.bf16.msra.mxu0 %v2408
        %2417 = vmatprep.subr.bf16.mxu0 0
        %2418 = vmatpush1.bf16.msra.mxu0 %v2409
        %2419 = vmatprep.subr.bf16.mxu0 0
        %2420 = vmatpush1.bf16.msra.mxu0 0
        %2421 = vmatprep.subr.bf16.mxu0 0
        %2422 = vmatpush1.bf16.msra.mxu0 0
        %2423 = vmatprep.subr.bf16.mxu0 0
        %2424 = vmatpush1.bf16.msra.mxu0 0
        %2425 = vmatprep.subr.bf16.mxu0 0
        %2426 = vmatpush1.bf16.msra.mxu0 0
        %2427 = vmatprep.subr.bf16.mxu0 0
        %2428 = vmatpush1.bf16.msra.mxu0 0
        %2429 = vmatprep.subr.bf16.mxu0 0
        %2430 = vmatpush1.bf16.msra.mxu0 0
        %2431 = vmatprep.subr.bf16.mxu0 0
        %2432 = vmatpush1.bf16.msra.mxu0 0
        %2433 = vmatprep.subr.bf16.mxu0 0
        %2434 = vmatpush1.bf16.msra.mxu0 0
        %2435 = vmatprep.subr.bf16.mxu0 0
        %2436 = vmatpush1.bf16.msra.mxu0 0
        %2437 = vmatprep.subr.bf16.mxu0 0
        %2438 = vmatpush1.bf16.msra.mxu0 0
        %2439 = vmatprep.subr.bf16.mxu0 0
        %2440 = vmatpush1.bf16.msra.mxu0 0
        %2441 = vmatprep.subr.bf16.mxu0 0
        %2442 = vmatpush1.bf16.msra.mxu0 0
        %2443 = vmatprep.subr.bf16.mxu0 0
        %2444 = vmatpush1.bf16.msra.mxu0 0
        %2445 = vmatprep.subr.bf16.mxu0 0
        %2446 = vmatpush1.bf16.msra.mxu0 0
        %2447 = vmatprep.mubr.bf16.mxu0 0
        %2448 = vmatmul.mubr.bf16.gmra.mrb[0].mxu0 %v2413
        %v2449 = vpop.f32.mrb[0].mxu0
        %v2450 = vadd.f32 %v2399, %v2449
        %v2451 = vpop.f32.mrb[0].mxu0
        %v2452 = vpop.f32.mrb[0].mxu0
        %v2453 = vadd.f32 %v2399, %v2452
        %v2454 = vpop.f32.mrb[0].mxu0
        %2455 = vdwg.mxu0
        %v2456 = vmul.f32 %v2450, 0.35355338
        %v2457 = vmul.f32 %v2453, 0.35355338
        %v2458 = vlaneseq
        %v2459 = vshrl.u32 %v2458, 7
        %v2460 = vsub.s32 0, %v2459
        %v2461 = vrot.slane %v2394, %v2460
        %v2464 = vunpack.c.l.b16 %v1048
        %v2465 = vunpack.c.l.b16 %v1049
        %v2466 = vpack.c.b16 %v2465, %v2464
        %v2471 = vunpack.c.l.b16 %v2384
        %v2472 = vunpack.c.l.b16 %v2385
        %v2473 = vunpack.c.l.b16 %v2386
        %v2474 = vunpack.c.l.b16 %v2387
        %v2475 = vpack.c.b16 %v2472, %v2471
        %v2476 = vpack.c.b16 %v2474, %v2473
        %v2480 = vsel %vm1076, %v2466, 0
        %2482 = vmatprep.subr.bf16.mxu0 0
        %2483 = vmatpush1.bf16.msra.mxu0 %v2475
        %2484 = vmatprep.subr.bf16.mxu0 0
        %2485 = vmatpush1.bf16.msra.mxu0 %v2476
        %2486 = vmatprep.subr.bf16.mxu0 0
        %2487 = vmatpush1.bf16.msra.mxu0 0
        %2488 = vmatprep.subr.bf16.mxu0 0
        %2489 = vmatpush1.bf16.msra.mxu0 0
        %2490 = vmatprep.subr.bf16.mxu0 0
        %2491 = vmatpush1.bf16.msra.mxu0 0
        %2492 = vmatprep.subr.bf16.mxu0 0
        %2493 = vmatpush1.bf16.msra.mxu0 0
        %2494 = vmatprep.subr.bf16.mxu0 0
        %2495 = vmatpush1.bf16.msra.mxu0 0
        %2496 = vmatprep.subr.bf16.mxu0 0
        %2497 = vmatpush1.bf16.msra.mxu0 0
        %2498 = vmatprep.subr.bf16.mxu0 0
        %2499 = vmatpush1.bf16.msra.mxu0 0
        %2500 = vmatprep.subr.bf16.mxu0 0
        %2501 = vmatpush1.bf16.msra.mxu0 0
        %2502 = vmatprep.subr.bf16.mxu0 0
        %2503 = vmatpush1.bf16.msra.mxu0 0
        %2504 = vmatprep.subr.bf16.mxu0 0
        %2505 = vmatpush1.bf16.msra.mxu0 0
        %2506 = vmatprep.subr.bf16.mxu0 0
        %2507 = vmatpush1.bf16.msra.mxu0 0
        %2508 = vmatprep.subr.bf16.mxu0 0
        %2509 = vmatpush1.bf16.msra.mxu0 0
        %2510 = vmatprep.subr.bf16.mxu0 0
        %2511 = vmatpush1.bf16.msra.mxu0 0
        %2512 = vmatprep.subr.bf16.mxu0 0
        %2513 = vmatpush1.bf16.msra.mxu0 0
        %2514 = vmatprep.mubr.bf16.mxu0 0
        %2515 = vmatmul.mubr.bf16.gmra.mrb[0].mxu0 %v2480
        %v2516 = vpop.f32.mrb[0].mxu0
        %v2517 = vadd.f32 %v2461, %v2516
        %v2518 = vpop.f32.mrb[0].mxu0
        %v2519 = vpop.f32.mrb[0].mxu0
        %v2520 = vadd.f32 %v2461, %v2519
        %v2521 = vpop.f32.mrb[0].mxu0
        %2522 = vdwg.mxu0
        %v2523 = vlaneseq
        %v2524 = vshrl.u32 %v2523, 7
        %v2525 = vsub.s32 0, %v2524
        %v2526 = vrot.slane %v2395, %v2525
        %v2531 = vunpack.c.l.b16 %v2389
        %v2532 = vunpack.c.l.b16 %v2390
        %v2533 = vunpack.c.l.b16 %v2391
        %v2534 = vunpack.c.l.b16 %v2392
        %v2535 = vpack.c.b16 %v2532, %v2531
        %v2536 = vpack.c.b16 %v2534, %v2533
        %2539 = vmatprep.subr.bf16.mxu0 0
        %2540 = vmatpush1.bf16.msra.mxu0 %v2535
        %2541 = vmatprep.subr.bf16.mxu0 0
        %2542 = vmatpush1.bf16.msra.mxu0 %v2536
        %2543 = vmatprep.subr.bf16.mxu0 0
        %2544 = vmatpush1.bf16.msra.mxu0 0
        %2545 = vmatprep.subr.bf16.mxu0 0
        %2546 = vmatpush1.bf16.msra.mxu0 0
        %2547 = vmatprep.subr.bf16.mxu0 0
        %2548 = vmatpush1.bf16.msra.mxu0 0
        %2549 = vmatprep.subr.bf16.mxu0 0
        %2550 = vmatpush1.bf16.msra.mxu0 0
        %2551 = vmatprep.subr.bf16.mxu0 0
        %2552 = vmatpush1.bf16.msra.mxu0 0
        %2553 = vmatprep.subr.bf16.mxu0 0
        %2554 = vmatpush1.bf16.msra.mxu0 0
        %2555 = vmatprep.subr.bf16.mxu0 0
        %2556 = vmatpush1.bf16.msra.mxu0 0
        %2557 = vmatprep.subr.bf16.mxu0 0
        %2558 = vmatpush1.bf16.msra.mxu0 0
        %2559 = vmatprep.subr.bf16.mxu0 0
        %2560 = vmatpush1.bf16.msra.mxu0 0
        %2561 = vmatprep.subr.bf16.mxu0 0
        %2562 = vmatpush1.bf16.msra.mxu0 0
        %2563 = vmatprep.subr.bf16.mxu0 0
        %2564 = vmatpush1.bf16.msra.mxu0 0
        %2565 = vmatprep.subr.bf16.mxu0 0
        %2566 = vmatpush1.bf16.msra.mxu0 0
        %2567 = vmatprep.subr.bf16.mxu0 0
        %2568 = vmatpush1.bf16.msra.mxu0 0
        %2569 = vmatprep.subr.bf16.mxu0 0
        %2570 = vmatpush1.bf16.msra.mxu0 0
        %2571 = vmatprep.mubr.bf16.mxu0 0
        %2572 = vmatmul.mubr.bf16.gmra.mrb[0].mxu0 %v2480
        %v2573 = vpop.f32.mrb[0].mxu0
        %v2574 = vadd.f32 %v2526, %v2573
        %v2575 = vpop.f32.mrb[0].mxu0
        %v2576 = vpop.f32.mrb[0].mxu0
        %v2577 = vadd.f32 %v2526, %v2576
        %v2578 = vpop.f32.mrb[0].mxu0
        %2579 = vdwg.mxu0
        %2582 = vrot.lane.b32.xlu0 %v2456, 120
        %v2583 = vpop.permute.xlu0 %2582
        %2584 = vrot.lane.b32.xlu0 %v2457, 120
        %v2585 = vpop.permute.xlu0 %2584
        %2588 = vrot.lane.b32.xlu0 %v2456, 112
        %v2589 = vpop.permute.xlu0 %2588
        %2590 = vrot.lane.b32.xlu0 %v2457, 112
        %v2591 = vpop.permute.xlu0 %2590
        %2594 = vrot.lane.b32.xlu0 %v2456, 104
        %v2595 = vpop.permute.xlu0 %2594
        %2596 = vrot.lane.b32.xlu0 %v2457, 104
        %v2597 = vpop.permute.xlu0 %2596
        %v2600 = vpack.c.bf16 %v2456, %v2456
        %v2601 = vpack.c.bf16 %v2583, %v2583
        %v2602 = vpack.c.bf16 %v2589, %v2589
        %v2603 = vpack.c.bf16 %v2595, %v2595
        %v2604 = vpack.c.bf16 %v2457, %v2457
        %v2605 = vpack.c.bf16 %v2585, %v2585
        %v2606 = vpack.c.bf16 %v2591, %v2591
        %v2607 = vpack.c.bf16 %v2597, %v2597
        %2610 = vrot.lane.b32.xlu0 %v2517, 120
        %v2611 = vpop.permute.xlu0 %2610
        %2612 = vrot.lane.b32.xlu0 %v2520, 120
        %v2613 = vpop.permute.xlu0 %2612
        %2616 = vrot.lane.b32.xlu0 %v2517, 112
        %v2617 = vpop.permute.xlu0 %2616
        %2618 = vrot.lane.b32.xlu0 %v2520, 112
        %v2619 = vpop.permute.xlu0 %2618
        %2622 = vrot.lane.b32.xlu0 %v2517, 104
        %v2623 = vpop.permute.xlu0 %2622
        %2624 = vrot.lane.b32.xlu0 %v2520, 104
        %v2625 = vpop.permute.xlu0 %2624
        %v2628 = vpack.c.bf16 %v2517, %v2517
        %v2629 = vpack.c.bf16 %v2611, %v2611
        %v2630 = vpack.c.bf16 %v2617, %v2617
        %v2631 = vpack.c.bf16 %v2623, %v2623
        %v2632 = vpack.c.bf16 %v2520, %v2520
        %v2633 = vpack.c.bf16 %v2613, %v2613
        %v2634 = vpack.c.bf16 %v2619, %v2619
        %v2635 = vpack.c.bf16 %v2625, %v2625
        %2638 = vrot.lane.b32.xlu0 %v2574, 120
        %v2639 = vpop.permute.xlu0 %2638
        %2640 = vrot.lane.b32.xlu0 %v2577, 120
        %v2641 = vpop.permute.xlu0 %2640
        %2644 = vrot.lane.b32.xlu0 %v2574, 112
        %v2645 = vpop.permute.xlu0 %2644
        %2646 = vrot.lane.b32.xlu0 %v2577, 112
        %v2647 = vpop.permute.xlu0 %2646
        %2650 = vrot.lane.b32.xlu0 %v2574, 104
        %v2651 = vpop.permute.xlu0 %2650
        %2652 = vrot.lane.b32.xlu0 %v2577, 104
        %v2653 = vpop.permute.xlu0 %2652
        %v2656 = vpack.c.bf16 %v2574, %v2574
        %v2657 = vpack.c.bf16 %v2639, %v2639
        %v2658 = vpack.c.bf16 %v2645, %v2645
        %v2659 = vpack.c.bf16 %v2651, %v2651
        %v2660 = vpack.c.bf16 %v2577, %v2577
        %v2661 = vpack.c.bf16 %v2641, %v2641
        %v2662 = vpack.c.bf16 %v2647, %v2647
        %v2663 = vpack.c.bf16 %v2653, %v2653
        %v2665 = vsel %vm1394, %v2600, 0
        %v2668 = vsel %vm1394, %v2628, 0
        %2670 = vmatprep.subr.bf16.mxu0 0
        %2671 = vmatpush1.bf16.xpose.msra.mxu0 %v2668
        %2672 = vmatprep.subr.bf16.mxu0 0
        %2673 = vmatpush1.bf16.xpose.msra.mxu0 0
        %2674 = vmatprep.subr.bf16.mxu0 0
        %2675 = vmatpush1.bf16.xpose.msra.mxu0 0
        %2676 = vmatprep.subr.bf16.mxu0 0
        %2677 = vmatpush1.bf16.xpose.msra.mxu0 0
        %2678 = vmatprep.subr.bf16.mxu0 0
        %2679 = vmatpush1.bf16.xpose.msra.mxu0 0
        %2680 = vmatprep.subr.bf16.mxu0 0
        %2681 = vmatpush1.bf16.xpose.msra.mxu0 0
        %2682 = vmatprep.subr.bf16.mxu0 0
        %2683 = vmatpush1.bf16.xpose.msra.mxu0 0
        %2684 = vmatprep.subr.bf16.mxu0 0
        %2685 = vmatpush1.bf16.xpose.msra.mxu0 0
        %2686 = vmatprep.subr.bf16.mxu0 0
        %2687 = vmatpush1.bf16.xpose.msra.mxu0 0
        %2688 = vmatprep.subr.bf16.mxu0 0
        %2689 = vmatpush1.bf16.xpose.msra.mxu0 0
        %2690 = vmatprep.subr.bf16.mxu0 0
        %2691 = vmatpush1.bf16.xpose.msra.mxu0 0
        %2692 = vmatprep.subr.bf16.mxu0 0
        %2693 = vmatpush1.bf16.xpose.msra.mxu0 0
        %2694 = vmatprep.subr.bf16.mxu0 0
        %2695 = vmatpush1.bf16.xpose.msra.mxu0 0
        %2696 = vmatprep.subr.bf16.mxu0 0
        %2697 = vmatpush1.bf16.xpose.msra.mxu0 0
        %2698 = vmatprep.subr.bf16.mxu0 0
        %2699 = vmatpush1.bf16.xpose.msra.mxu0 0
        %2700 = vmatprep.subr.bf16.mxu0 0
        %2701 = vmatpush1.bf16.xpose.msra.mxu0 0
        %2702 = vmatprep.mubr.bf16.mxu0 0
        %2703 = vmatmul.mubr.bf16.gmra.mrb[0].mxu0 %v2665
        %v2704 = vpop.f32.mrb[0].mxu0
        %v2705 = vadd.f32 0.0, %v2704
        %v2706 = vpop.f32.mrb[0].mxu0
        %v2707 = vpop.f32.mrb[0].mxu0
        %v2708 = vpop.f32.mrb[0].mxu0
        %2709 = vdwg.mxu0
        %v2711 = vsel %vm1394, %v2601, 0
        %v2714 = vsel %vm1394, %v2629, 0
        %2716 = vmatprep.subr.bf16.mxu0 0
        %2717 = vmatpush1.bf16.xpose.msra.mxu0 %v2714
        %2718 = vmatprep.subr.bf16.mxu0 0
        %2719 = vmatpush1.bf16.xpose.msra.mxu0 0
        %2720 = vmatprep.subr.bf16.mxu0 0
        %2721 = vmatpush1.bf16.xpose.msra.mxu0 0
        %2722 = vmatprep.subr.bf16.mxu0 0
        %2723 = vmatpush1.bf16.xpose.msra.mxu0 0
        %2724 = vmatprep.subr.bf16.mxu0 0
        %2725 = vmatpush1.bf16.xpose.msra.mxu0 0
        %2726 = vmatprep.subr.bf16.mxu0 0
        %2727 = vmatpush1.bf16.xpose.msra.mxu0 0
        %2728 = vmatprep.subr.bf16.mxu0 0
        %2729 = vmatpush1.bf16.xpose.msra.mxu0 0
        %2730 = vmatprep.subr.bf16.mxu0 0
        %2731 = vmatpush1.bf16.xpose.msra.mxu0 0
        %2732 = vmatprep.subr.bf16.mxu0 0
        %2733 = vmatpush1.bf16.xpose.msra.mxu0 0
        %2734 = vmatprep.subr.bf16.mxu0 0
        %2735 = vmatpush1.bf16.xpose.msra.mxu0 0
        %2736 = vmatprep.subr.bf16.mxu0 0
        %2737 = vmatpush1.bf16.xpose.msra.mxu0 0
        %2738 = vmatprep.subr.bf16.mxu0 0
        %2739 = vmatpush1.bf16.xpose.msra.mxu0 0
        %2740 = vmatprep.subr.bf16.mxu0 0
        %2741 = vmatpush1.bf16.xpose.msra.mxu0 0
        %2742 = vmatprep.subr.bf16.mxu0 0
        %2743 = vmatpush1.bf16.xpose.msra.mxu0 0
        %2744 = vmatprep.subr.bf16.mxu0 0
        %2745 = vmatpush1.bf16.xpose.msra.mxu0 0
        %2746 = vmatprep.subr.bf16.mxu0 0
        %2747 = vmatpush1.bf16.xpose.msra.mxu0 0
        %2748 = vmatprep.mubr.bf16.mxu0 0
        %2749 = vmatmul.mubr.bf16.gmra.mrb[0].mxu0 %v2711
        %v2750 = vpop.f32.mrb[0].mxu0
        %v2751 = vadd.f32 0.0, %v2750
        %v2752 = vpop.f32.mrb[0].mxu0
        %v2753 = vpop.f32.mrb[0].mxu0
        %v2754 = vpop.f32.mrb[0].mxu0
        %2755 = vdwg.mxu0
        %v2757 = vsel %vm1394, %v2602, 0
        %v2760 = vsel %vm1394, %v2630, 0
        %2762 = vmatprep.subr.bf16.mxu0 0
        %2763 = vmatpush1.bf16.xpose.msra.mxu0 %v2760
        %2764 = vmatprep.subr.bf16.mxu0 0
        %2765 = vmatpush1.bf16.xpose.msra.mxu0 0
        %2766 = vmatprep.subr.bf16.mxu0 0
        %2767 = vmatpush1.bf16.xpose.msra.mxu0 0
        %2768 = vmatprep.subr.bf16.mxu0 0
        %2769 = vmatpush1.bf16.xpose.msra.mxu0 0
        %2770 = vmatprep.subr.bf16.mxu0 0
        %2771 = vmatpush1.bf16.xpose.msra.mxu0 0
        %2772 = vmatprep.subr.bf16.mxu0 0
        %2773 = vmatpush1.bf16.xpose.msra.mxu0 0
        %2774 = vmatprep.subr.bf16.mxu0 0
        %2775 = vmatpush1.bf16.xpose.msra.mxu0 0
        %2776 = vmatprep.subr.bf16.mxu0 0
        %2777 = vmatpush1.bf16.xpose.msra.mxu0 0
        %2778 = vmatprep.subr.bf16.mxu0 0
        %2779 = vmatpush1.bf16.xpose.msra.mxu0 0
        %2780 = vmatprep.subr.bf16.mxu0 0
        %2781 = vmatpush1.bf16.xpose.msra.mxu0 0
        %2782 = vmatprep.subr.bf16.mxu0 0
        %2783 = vmatpush1.bf16.xpose.msra.mxu0 0
        %2784 = vmatprep.subr.bf16.mxu0 0
        %2785 = vmatpush1.bf16.xpose.msra.mxu0 0
        %2786 = vmatprep.subr.bf16.mxu0 0
        %2787 = vmatpush1.bf16.xpose.msra.mxu0 0
        %2788 = vmatprep.subr.bf16.mxu0 0
        %2789 = vmatpush1.bf16.xpose.msra.mxu0 0
        %2790 = vmatprep.subr.bf16.mxu0 0
        %2791 = vmatpush1.bf16.xpose.msra.mxu0 0
        %2792 = vmatprep.subr.bf16.mxu0 0
        %2793 = vmatpush1.bf16.xpose.msra.mxu0 0
        %2794 = vmatprep.mubr.bf16.mxu0 0
        %2795 = vmatmul.mubr.bf16.gmra.mrb[0].mxu0 %v2757
        %v2796 = vpop.f32.mrb[0].mxu0
        %v2797 = vadd.f32 0.0, %v2796
        %v2798 = vpop.f32.mrb[0].mxu0
        %v2799 = vpop.f32.mrb[0].mxu0
        %v2800 = vpop.f32.mrb[0].mxu0
        %2801 = vdwg.mxu0
        %v2803 = vsel %vm1394, %v2603, 0
        %v2806 = vsel %vm1394, %v2631, 0
        %2808 = vmatprep.subr.bf16.mxu0 0
        %2809 = vmatpush1.bf16.xpose.msra.mxu0 %v2806
        %2810 = vmatprep.subr.bf16.mxu0 0
        %2811 = vmatpush1.bf16.xpose.msra.mxu0 0
        %2812 = vmatprep.subr.bf16.mxu0 0
        %2813 = vmatpush1.bf16.xpose.msra.mxu0 0
        %2814 = vmatprep.subr.bf16.mxu0 0
        %2815 = vmatpush1.bf16.xpose.msra.mxu0 0
        %2816 = vmatprep.subr.bf16.mxu0 0
        %2817 = vmatpush1.bf16.xpose.msra.mxu0 0
        %2818 = vmatprep.subr.bf16.mxu0 0
        %2819 = vmatpush1.bf16.xpose.msra.mxu0 0
        %2820 = vmatprep.subr.bf16.mxu0 0
        %2821 = vmatpush1.bf16.xpose.msra.mxu0 0
        %2822 = vmatprep.subr.bf16.mxu0 0
        %2823 = vmatpush1.bf16.xpose.msra.mxu0 0
        %2824 = vmatprep.subr.bf16.mxu0 0
        %2825 = vmatpush1.bf16.xpose.msra.mxu0 0
        %2826 = vmatprep.subr.bf16.mxu0 0
        %2827 = vmatpush1.bf16.xpose.msra.mxu0 0
        %2828 = vmatprep.subr.bf16.mxu0 0
        %2829 = vmatpush1.bf16.xpose.msra.mxu0 0
        %2830 = vmatprep.subr.bf16.mxu0 0
        %2831 = vmatpush1.bf16.xpose.msra.mxu0 0
        %2832 = vmatprep.subr.bf16.mxu0 0
        %2833 = vmatpush1.bf16.xpose.msra.mxu0 0
        %2834 = vmatprep.subr.bf16.mxu0 0
        %2835 = vmatpush1.bf16.xpose.msra.mxu0 0
        %2836 = vmatprep.subr.bf16.mxu0 0
        %2837 = vmatpush1.bf16.xpose.msra.mxu0 0
        %2838 = vmatprep.subr.bf16.mxu0 0
        %2839 = vmatpush1.bf16.xpose.msra.mxu0 0
        %2840 = vmatprep.mubr.bf16.mxu0 0
        %2841 = vmatmul.mubr.bf16.gmra.mrb[0].mxu0 %v2803
        %v2842 = vpop.f32.mrb[0].mxu0
        %v2843 = vadd.f32 0.0, %v2842
        %v2844 = vpop.f32.mrb[0].mxu0
        %v2845 = vpop.f32.mrb[0].mxu0
        %v2846 = vpop.f32.mrb[0].mxu0
        %2847 = vdwg.mxu0
        %v2849 = vsel %vm1394, %v2604, 0
        %v2852 = vsel %vm1394, %v2632, 0
        %2854 = vmatprep.subr.bf16.mxu0 0
        %2855 = vmatpush1.bf16.xpose.msra.mxu0 %v2852
        %2856 = vmatprep.subr.bf16.mxu0 0
        %2857 = vmatpush1.bf16.xpose.msra.mxu0 0
        %2858 = vmatprep.subr.bf16.mxu0 0
        %2859 = vmatpush1.bf16.xpose.msra.mxu0 0
        %2860 = vmatprep.subr.bf16.mxu0 0
        %2861 = vmatpush1.bf16.xpose.msra.mxu0 0
        %2862 = vmatprep.subr.bf16.mxu0 0
        %2863 = vmatpush1.bf16.xpose.msra.mxu0 0
        %2864 = vmatprep.subr.bf16.mxu0 0
        %2865 = vmatpush1.bf16.xpose.msra.mxu0 0
        %2866 = vmatprep.subr.bf16.mxu0 0
        %2867 = vmatpush1.bf16.xpose.msra.mxu0 0
        %2868 = vmatprep.subr.bf16.mxu0 0
        %2869 = vmatpush1.bf16.xpose.msra.mxu0 0
        %2870 = vmatprep.subr.bf16.mxu0 0
        %2871 = vmatpush1.bf16.xpose.msra.mxu0 0
        %2872 = vmatprep.subr.bf16.mxu0 0
        %2873 = vmatpush1.bf16.xpose.msra.mxu0 0
        %2874 = vmatprep.subr.bf16.mxu0 0
        %2875 = vmatpush1.bf16.xpose.msra.mxu0 0
        %2876 = vmatprep.subr.bf16.mxu0 0
        %2877 = vmatpush1.bf16.xpose.msra.mxu0 0
        %2878 = vmatprep.subr.bf16.mxu0 0
        %2879 = vmatpush1.bf16.xpose.msra.mxu0 0
        %2880 = vmatprep.subr.bf16.mxu0 0
        %2881 = vmatpush1.bf16.xpose.msra.mxu0 0
        %2882 = vmatprep.subr.bf16.mxu0 0
        %2883 = vmatpush1.bf16.xpose.msra.mxu0 0
        %2884 = vmatprep.subr.bf16.mxu0 0
        %2885 = vmatpush1.bf16.xpose.msra.mxu0 0
        %2886 = vmatprep.mubr.bf16.mxu0 0
        %2887 = vmatmul.mubr.bf16.gmra.mrb[0].mxu0 %v2849
        %v2888 = vpop.f32.mrb[0].mxu0
        %v2889 = vadd.f32 0.0, %v2888
        %v2890 = vpop.f32.mrb[0].mxu0
        %v2891 = vpop.f32.mrb[0].mxu0
        %v2892 = vpop.f32.mrb[0].mxu0
        %2893 = vdwg.mxu0
        %v2895 = vsel %vm1394, %v2605, 0
        %v2898 = vsel %vm1394, %v2633, 0
        %2900 = vmatprep.subr.bf16.mxu0 0
        %2901 = vmatpush1.bf16.xpose.msra.mxu0 %v2898
        %2902 = vmatprep.subr.bf16.mxu0 0
        %2903 = vmatpush1.bf16.xpose.msra.mxu0 0
        %2904 = vmatprep.subr.bf16.mxu0 0
        %2905 = vmatpush1.bf16.xpose.msra.mxu0 0
        %2906 = vmatprep.subr.bf16.mxu0 0
        %2907 = vmatpush1.bf16.xpose.msra.mxu0 0
        %2908 = vmatprep.subr.bf16.mxu0 0
        %2909 = vmatpush1.bf16.xpose.msra.mxu0 0
        %2910 = vmatprep.subr.bf16.mxu0 0
        %2911 = vmatpush1.bf16.xpose.msra.mxu0 0
        %2912 = vmatprep.subr.bf16.mxu0 0
        %2913 = vmatpush1.bf16.xpose.msra.mxu0 0
        %2914 = vmatprep.subr.bf16.mxu0 0
        %2915 = vmatpush1.bf16.xpose.msra.mxu0 0
        %2916 = vmatprep.subr.bf16.mxu0 0
        %2917 = vmatpush1.bf16.xpose.msra.mxu0 0
        %2918 = vmatprep.subr.bf16.mxu0 0
        %2919 = vmatpush1.bf16.xpose.msra.mxu0 0
        %2920 = vmatprep.subr.bf16.mxu0 0
        %2921 = vmatpush1.bf16.xpose.msra.mxu0 0
        %2922 = vmatprep.subr.bf16.mxu0 0
        %2923 = vmatpush1.bf16.xpose.msra.mxu0 0
        %2924 = vmatprep.subr.bf16.mxu0 0
        %2925 = vmatpush1.bf16.xpose.msra.mxu0 0
        %2926 = vmatprep.subr.bf16.mxu0 0
        %2927 = vmatpush1.bf16.xpose.msra.mxu0 0
        %2928 = vmatprep.subr.bf16.mxu0 0
        %2929 = vmatpush1.bf16.xpose.msra.mxu0 0
        %2930 = vmatprep.subr.bf16.mxu0 0
        %2931 = vmatpush1.bf16.xpose.msra.mxu0 0
        %2932 = vmatprep.mubr.bf16.mxu0 0
        %2933 = vmatmul.mubr.bf16.gmra.mrb[0].mxu0 %v2895
        %v2934 = vpop.f32.mrb[0].mxu0
        %v2935 = vadd.f32 0.0, %v2934
        %v2936 = vpop.f32.mrb[0].mxu0
        %v2937 = vpop.f32.mrb[0].mxu0
        %v2938 = vpop.f32.mrb[0].mxu0
        %2939 = vdwg.mxu0
        %v2941 = vsel %vm1394, %v2606, 0
        %v2944 = vsel %vm1394, %v2634, 0
        %2946 = vmatprep.subr.bf16.mxu0 0
        %2947 = vmatpush1.bf16.xpose.msra.mxu0 %v2944
        %2948 = vmatprep.subr.bf16.mxu0 0
        %2949 = vmatpush1.bf16.xpose.msra.mxu0 0
        %2950 = vmatprep.subr.bf16.mxu0 0
        %2951 = vmatpush1.bf16.xpose.msra.mxu0 0
        %2952 = vmatprep.subr.bf16.mxu0 0
        %2953 = vmatpush1.bf16.xpose.msra.mxu0 0
        %2954 = vmatprep.subr.bf16.mxu0 0
        %2955 = vmatpush1.bf16.xpose.msra.mxu0 0
        %2956 = vmatprep.subr.bf16.mxu0 0
        %2957 = vmatpush1.bf16.xpose.msra.mxu0 0
        %2958 = vmatprep.subr.bf16.mxu0 0
        %2959 = vmatpush1.bf16.xpose.msra.mxu0 0
        %2960 = vmatprep.subr.bf16.mxu0 0
        %2961 = vmatpush1.bf16.xpose.msra.mxu0 0
        %2962 = vmatprep.subr.bf16.mxu0 0
        %2963 = vmatpush1.bf16.xpose.msra.mxu0 0
        %2964 = vmatprep.subr.bf16.mxu0 0
        %2965 = vmatpush1.bf16.xpose.msra.mxu0 0
        %2966 = vmatprep.subr.bf16.mxu0 0
        %2967 = vmatpush1.bf16.xpose.msra.mxu0 0
        %2968 = vmatprep.subr.bf16.mxu0 0
        %2969 = vmatpush1.bf16.xpose.msra.mxu0 0
        %2970 = vmatprep.subr.bf16.mxu0 0
        %2971 = vmatpush1.bf16.xpose.msra.mxu0 0
        %2972 = vmatprep.subr.bf16.mxu0 0
        %2973 = vmatpush1.bf16.xpose.msra.mxu0 0
        %2974 = vmatprep.subr.bf16.mxu0 0
        %2975 = vmatpush1.bf16.xpose.msra.mxu0 0
        %2976 = vmatprep.subr.bf16.mxu0 0
        %2977 = vmatpush1.bf16.xpose.msra.mxu0 0
        %2978 = vmatprep.mubr.bf16.mxu0 0
        %2979 = vmatmul.mubr.bf16.gmra.mrb[0].mxu0 %v2941
        %v2980 = vpop.f32.mrb[0].mxu0
        %v2981 = vadd.f32 0.0, %v2980
        %v2982 = vpop.f32.mrb[0].mxu0
        %v2983 = vpop.f32.mrb[0].mxu0
        %v2984 = vpop.f32.mrb[0].mxu0
        %2985 = vdwg.mxu0
        %v2987 = vsel %vm1394, %v2607, 0
        %v2990 = vsel %vm1394, %v2635, 0
        %2992 = vmatprep.subr.bf16.mxu0 0
        %2993 = vmatpush1.bf16.xpose.msra.mxu0 %v2990
        %2994 = vmatprep.subr.bf16.mxu0 0
        %2995 = vmatpush1.bf16.xpose.msra.mxu0 0
        %2996 = vmatprep.subr.bf16.mxu0 0
        %2997 = vmatpush1.bf16.xpose.msra.mxu0 0
        %2998 = vmatprep.subr.bf16.mxu0 0
        %2999 = vmatpush1.bf16.xpose.msra.mxu0 0
        %3000 = vmatprep.subr.bf16.mxu0 0
        %3001 = vmatpush1.bf16.xpose.msra.mxu0 0
        %3002 = vmatprep.subr.bf16.mxu0 0
        %3003 = vmatpush1.bf16.xpose.msra.mxu0 0
        %3004 = vmatprep.subr.bf16.mxu0 0
        %3005 = vmatpush1.bf16.xpose.msra.mxu0 0
        %3006 = vmatprep.subr.bf16.mxu0 0
        %3007 = vmatpush1.bf16.xpose.msra.mxu0 0
        %3008 = vmatprep.subr.bf16.mxu0 0
        %3009 = vmatpush1.bf16.xpose.msra.mxu0 0
        %3010 = vmatprep.subr.bf16.mxu0 0
        %3011 = vmatpush1.bf16.xpose.msra.mxu0 0
        %3012 = vmatprep.subr.bf16.mxu0 0
        %3013 = vmatpush1.bf16.xpose.msra.mxu0 0
        %3014 = vmatprep.subr.bf16.mxu0 0
        %3015 = vmatpush1.bf16.xpose.msra.mxu0 0
        %3016 = vmatprep.subr.bf16.mxu0 0
        %3017 = vmatpush1.bf16.xpose.msra.mxu0 0
        %3018 = vmatprep.subr.bf16.mxu0 0
        %3019 = vmatpush1.bf16.xpose.msra.mxu0 0
        %3020 = vmatprep.subr.bf16.mxu0 0
        %3021 = vmatpush1.bf16.xpose.msra.mxu0 0
        %3022 = vmatprep.subr.bf16.mxu0 0
        %3023 = vmatpush1.bf16.xpose.msra.mxu0 0
        %3024 = vmatprep.mubr.bf16.mxu0 0
        %3025 = vmatmul.mubr.bf16.gmra.mrb[0].mxu0 %v2987
        %v3026 = vpop.f32.mrb[0].mxu0
        %v3027 = vadd.f32 0.0, %v3026
        %v3028 = vpop.f32.mrb[0].mxu0
        %v3029 = vpop.f32.mrb[0].mxu0
        %v3030 = vpop.f32.mrb[0].mxu0
        %3031 = vdwg.mxu0
        %v3034 = vlaneseq
        %v3035 = vshrl.u32 %v3034, 7
        %v3036 = vsub.s32 0, %v3035
        %v3037 = vrot.slane %v1072, %v3036
        %v3038 = vlaneseq
        %v3039 = vshrl.u32 %v3038, 7
        %v3040 = vsub.s32 0, %v3039
        %v3041 = vrot.slane %v1073, %v3040
        %v3044 = vadd.f32 %v2705, %v3037
        %v3045 = vadd.f32 %v2751, %v3037
        %v3046 = vadd.f32 %v2797, %v3037
        %v3047 = vadd.f32 %v2843, %v3037
        %v3048 = vadd.f32 %v2889, %v3041
        %v3049 = vadd.f32 %v2935, %v3041
        %v3050 = vadd.f32 %v2981, %v3041
        %v3051 = vadd.f32 %v3027, %v3041
        %v3052 = vsel %vm1394, %v3044, -inf
        %3053 = vmax.xlane.f32.xlu0 %v3052
        %v3054 = vpop.xlane.xlu0 %3053
        %v3055 = vsel %vm1394, %v3045, -inf
        %3056 = vmax.xlane.f32.xlu0 %v3055
        %v3057 = vpop.xlane.xlu0 %3056
        %v3058 = vsel %vm1394, %v3046, -inf
        %3059 = vmax.xlane.f32.xlu0 %v3058
        %v3060 = vpop.xlane.xlu0 %3059
        %v3061 = vsel %vm1394, %v3047, -inf
        %3062 = vmax.xlane.f32.xlu0 %v3061
        %v3063 = vpop.xlane.xlu0 %3062
        %v3064 = vsel %vm1394, %v3048, -inf
        %3065 = vmax.xlane.f32.xlu0 %v3064
        %v3066 = vpop.xlane.xlu0 %3065
        %v3067 = vsel %vm1394, %v3049, -inf
        %3068 = vmax.xlane.f32.xlu0 %v3067
        %v3069 = vpop.xlane.xlu0 %3068
        %v3070 = vsel %vm1394, %v3050, -inf
        %3071 = vmax.xlane.f32.xlu0 %v3070
        %v3072 = vpop.xlane.xlu0 %3071
        %v3073 = vsel %vm1394, %v3051, -inf
        %3074 = vmax.xlane.f32.xlu0 %v3073
        %v3075 = vpop.xlane.xlu0 %3074
        %v3076 = vsub.f32 %v3044, %v3054
        %v3077 = vsub.f32 %v3045, %v3057
        %v3078 = vsub.f32 %v3046, %v3060
        %v3079 = vsub.f32 %v3047, %v3063
        %v3080 = vsub.f32 %v3048, %v3066
        %v3081 = vsub.f32 %v3049, %v3069
        %v3082 = vsub.f32 %v3050, %v3072
        %v3083 = vsub.f32 %v3051, %v3075
        %v3084 = vmul.f32 %v3076, 1.442695
        %v3085 = vpow.pop %v3084
        %v3086 = vmul.f32 %v3077, 1.442695
        %v3087 = vpow.pop %v3086
        %v3088 = vmul.f32 %v3078, 1.442695
        %v3089 = vpow.pop %v3088
        %v3090 = vmul.f32 %v3079, 1.442695
        %v3091 = vpow.pop %v3090
        %v3092 = vmul.f32 %v3080, 1.442695
        %v3093 = vpow.pop %v3092
        %v3094 = vmul.f32 %v3081, 1.442695
        %v3095 = vpow.pop %v3094
        %v3096 = vmul.f32 %v3082, 1.442695
        %v3097 = vpow.pop %v3096
        %v3098 = vmul.f32 %v3083, 1.442695
        %v3099 = vpow.pop %v3098
        %v3100 = vsel %vm1394, %v3085, 0.0
        %3101 = vadd.xlane.f32.xlu0 %v3100
        %v3102 = vpop.xlane.xlu0 %3101
        %v3103 = vsel %vm1394, %v3087, 0.0
        %3104 = vadd.xlane.f32.xlu0 %v3103
        %v3105 = vpop.xlane.xlu0 %3104
        %v3106 = vsel %vm1394, %v3089, 0.0
        %3107 = vadd.xlane.f32.xlu0 %v3106
        %v3108 = vpop.xlane.xlu0 %3107
        %v3109 = vsel %vm1394, %v3091, 0.0
        %3110 = vadd.xlane.f32.xlu0 %v3109
        %v3111 = vpop.xlane.xlu0 %3110
        %v3112 = vsel %vm1394, %v3093, 0.0
        %3113 = vadd.xlane.f32.xlu0 %v3112
        %v3114 = vpop.xlane.xlu0 %3113
        %v3115 = vsel %vm1394, %v3095, 0.0
        %3116 = vadd.xlane.f32.xlu0 %v3115
        %v3117 = vpop.xlane.xlu0 %3116
        %v3118 = vsel %vm1394, %v3097, 0.0
        %3119 = vadd.xlane.f32.xlu0 %v3118
        %v3120 = vpop.xlane.xlu0 %3119
        %v3121 = vsel %vm1394, %v3099, 0.0
        %3122 = vadd.xlane.f32.xlu0 %v3121
        %v3123 = vpop.xlane.xlu0 %3122
        %v3124 = vrcp.pop %v3102
        %v3125 = vmul.f32 %v3085, %v3124
        %v3126 = vrcp.pop %v3105
        %v3127 = vmul.f32 %v3087, %v3126
        %v3128 = vrcp.pop %v3108
        %v3129 = vmul.f32 %v3089, %v3128
        %v3130 = vrcp.pop %v3111
        %v3131 = vmul.f32 %v3091, %v3130
        %v3132 = vrcp.pop %v3114
        %v3133 = vmul.f32 %v3093, %v3132
        %v3134 = vrcp.pop %v3117
        %v3135 = vmul.f32 %v3095, %v3134
        %v3136 = vrcp.pop %v3120
        %v3137 = vmul.f32 %v3097, %v3136
        %v3138 = vrcp.pop %v3123
        %v3139 = vmul.f32 %v3099, %v3138
        %v3140 = vpack.c.bf16 %v3125, %v3125
        %v3141 = vpack.c.bf16 %v3127, %v3127
        %v3142 = vpack.c.bf16 %v3129, %v3129
        %v3143 = vpack.c.bf16 %v3131, %v3131
        %v3144 = vpack.c.bf16 %v3133, %v3133
        %v3145 = vpack.c.bf16 %v3135, %v3135
        %v3146 = vpack.c.bf16 %v3137, %v3137
        %v3147 = vpack.c.bf16 %v3139, %v3139
        %v3149 = vsel %vm1394, %v3140, 0
        %v3152 = vsel %vm1870, %v2656, 0
        %3154 = vmatprep.subr.bf16.mxu0 0
        %3155 = vmatpush1.bf16.msra.mxu0 %v3152
        %3156 = vmatprep.subr.bf16.mxu0 0
        %3157 = vmatpush1.bf16.msra.mxu0 0
        %3158 = vmatprep.subr.bf16.mxu0 0
        %3159 = vmatpush1.bf16.msra.mxu0 0
        %3160 = vmatprep.subr.bf16.mxu0 0
        %3161 = vmatpush1.bf16.msra.mxu0 0
        %3162 = vmatprep.subr.bf16.mxu0 0
        %3163 = vmatpush1.bf16.msra.mxu0 0
        %3164 = vmatprep.subr.bf16.mxu0 0
        %3165 = vmatpush1.bf16.msra.mxu0 0
        %3166 = vmatprep.subr.bf16.mxu0 0
        %3167 = vmatpush1.bf16.msra.mxu0 0
        %3168 = vmatprep.subr.bf16.mxu0 0
        %3169 = vmatpush1.bf16.msra.mxu0 0
        %3170 = vmatprep.subr.bf16.mxu0 0
        %3171 = vmatpush1.bf16.msra.mxu0 0
        %3172 = vmatprep.subr.bf16.mxu0 0
        %3173 = vmatpush1.bf16.msra.mxu0 0
        %3174 = vmatprep.subr.bf16.mxu0 0
        %3175 = vmatpush1.bf16.msra.mxu0 0
        %3176 = vmatprep.subr.bf16.mxu0 0
        %3177 = vmatpush1.bf16.msra.mxu0 0
        %3178 = vmatprep.subr.bf16.mxu0 0
        %3179 = vmatpush1.bf16.msra.mxu0 0
        %3180 = vmatprep.subr.bf16.mxu0 0
        %3181 = vmatpush1.bf16.msra.mxu0 0
        %3182 = vmatprep.subr.bf16.mxu0 0
        %3183 = vmatpush1.bf16.msra.mxu0 0
        %3184 = vmatprep.subr.bf16.mxu0 0
        %3185 = vmatpush1.bf16.msra.mxu0 0
        %3186 = vmatprep.mubr.bf16.mxu0 0
        %3187 = vmatmul.mubr.bf16.gmra.mrb[0].mxu0 %v3149
        %v3188 = vpop.f32.mrb[0].mxu0
        %v3189 = vadd.f32 0.0, %v3188
        %v3190 = vpop.f32.mrb[0].mxu0
        %v3191 = vpop.f32.mrb[0].mxu0
        %v3192 = vpop.f32.mrb[0].mxu0
        %3193 = vdwg.mxu0
        %v3195 = vsel %vm1394, %v3141, 0
        %v3198 = vsel %vm1870, %v2657, 0
        %3200 = vmatprep.subr.bf16.mxu0 0
        %3201 = vmatpush1.bf16.msra.mxu0 %v3198
        %3202 = vmatprep.subr.bf16.mxu0 0
        %3203 = vmatpush1.bf16.msra.mxu0 0
        %3204 = vmatprep.subr.bf16.mxu0 0
        %3205 = vmatpush1.bf16.msra.mxu0 0
        %3206 = vmatprep.subr.bf16.mxu0 0
        %3207 = vmatpush1.bf16.msra.mxu0 0
        %3208 = vmatprep.subr.bf16.mxu0 0
        %3209 = vmatpush1.bf16.msra.mxu0 0
        %3210 = vmatprep.subr.bf16.mxu0 0
        %3211 = vmatpush1.bf16.msra.mxu0 0
        %3212 = vmatprep.subr.bf16.mxu0 0
        %3213 = vmatpush1.bf16.msra.mxu0 0
        %3214 = vmatprep.subr.bf16.mxu0 0
        %3215 = vmatpush1.bf16.msra.mxu0 0
        %3216 = vmatprep.subr.bf16.mxu0 0
        %3217 = vmatpush1.bf16.msra.mxu0 0
        %3218 = vmatprep.subr.bf16.mxu0 0
        %3219 = vmatpush1.bf16.msra.mxu0 0
        %3220 = vmatprep.subr.bf16.mxu0 0
        %3221 = vmatpush1.bf16.msra.mxu0 0
        %3222 = vmatprep.subr.bf16.mxu0 0
        %3223 = vmatpush1.bf16.msra.mxu0 0
        %3224 = vmatprep.subr.bf16.mxu0 0
        %3225 = vmatpush1.bf16.msra.mxu0 0
        %3226 = vmatprep.subr.bf16.mxu0 0
        %3227 = vmatpush1.bf16.msra.mxu0 0
        %3228 = vmatprep.subr.bf16.mxu0 0
        %3229 = vmatpush1.bf16.msra.mxu0 0
        %3230 = vmatprep.subr.bf16.mxu0 0
        %3231 = vmatpush1.bf16.msra.mxu0 0
        %3232 = vmatprep.mubr.bf16.mxu0 0
        %3233 = vmatmul.mubr.bf16.gmra.mrb[0].mxu0 %v3195
        %v3234 = vpop.f32.mrb[0].mxu0
        %v3235 = vadd.f32 0.0, %v3234
        %v3236 = vpop.f32.mrb[0].mxu0
        %v3237 = vpop.f32.mrb[0].mxu0
        %v3238 = vpop.f32.mrb[0].mxu0
        %3239 = vdwg.mxu0
        %v3241 = vsel %vm1394, %v3142, 0
        %v3244 = vsel %vm1870, %v2658, 0
        %3246 = vmatprep.subr.bf16.mxu0 0
        %3247 = vmatpush1.bf16.msra.mxu0 %v3244
        %3248 = vmatprep.subr.bf16.mxu0 0
        %3249 = vmatpush1.bf16.msra.mxu0 0
        %3250 = vmatprep.subr.bf16.mxu0 0
        %3251 = vmatpush1.bf16.msra.mxu0 0
        %3252 = vmatprep.subr.bf16.mxu0 0
        %3253 = vmatpush1.bf16.msra.mxu0 0
        %3254 = vmatprep.subr.bf16.mxu0 0
        %3255 = vmatpush1.bf16.msra.mxu0 0
        %3256 = vmatprep.subr.bf16.mxu0 0
        %3257 = vmatpush1.bf16.msra.mxu0 0
        %3258 = vmatprep.subr.bf16.mxu0 0
        %3259 = vmatpush1.bf16.msra.mxu0 0
        %3260 = vmatprep.subr.bf16.mxu0 0
        %3261 = vmatpush1.bf16.msra.mxu0 0
        %3262 = vmatprep.subr.bf16.mxu0 0
        %3263 = vmatpush1.bf16.msra.mxu0 0
        %3264 = vmatprep.subr.bf16.mxu0 0
        %3265 = vmatpush1.bf16.msra.mxu0 0
        %3266 = vmatprep.subr.bf16.mxu0 0
        %3267 = vmatpush1.bf16.msra.mxu0 0
        %3268 = vmatprep.subr.bf16.mxu0 0
        %3269 = vmatpush1.bf16.msra.mxu0 0
        %3270 = vmatprep.subr.bf16.mxu0 0
        %3271 = vmatpush1.bf16.msra.mxu0 0
        %3272 = vmatprep.subr.bf16.mxu0 0
        %3273 = vmatpush1.bf16.msra.mxu0 0
        %3274 = vmatprep.subr.bf16.mxu0 0
        %3275 = vmatpush1.bf16.msra.mxu0 0
        %3276 = vmatprep.subr.bf16.mxu0 0
        %3277 = vmatpush1.bf16.msra.mxu0 0
        %3278 = vmatprep.mubr.bf16.mxu0 0
        %3279 = vmatmul.mubr.bf16.gmra.mrb[0].mxu0 %v3241
        %v3280 = vpop.f32.mrb[0].mxu0
        %v3281 = vadd.f32 0.0, %v3280
        %v3282 = vpop.f32.mrb[0].mxu0
        %v3283 = vpop.f32.mrb[0].mxu0
        %v3284 = vpop.f32.mrb[0].mxu0
        %3285 = vdwg.mxu0
        %v3287 = vsel %vm1394, %v3143, 0
        %v3290 = vsel %vm1870, %v2659, 0
        %3292 = vmatprep.subr.bf16.mxu0 0
        %3293 = vmatpush1.bf16.msra.mxu0 %v3290
        %3294 = vmatprep.subr.bf16.mxu0 0
        %3295 = vmatpush1.bf16.msra.mxu0 0
        %3296 = vmatprep.subr.bf16.mxu0 0
        %3297 = vmatpush1.bf16.msra.mxu0 0
        %3298 = vmatprep.subr.bf16.mxu0 0
        %3299 = vmatpush1.bf16.msra.mxu0 0
        %3300 = vmatprep.subr.bf16.mxu0 0
        %3301 = vmatpush1.bf16.msra.mxu0 0
        %3302 = vmatprep.subr.bf16.mxu0 0
        %3303 = vmatpush1.bf16.msra.mxu0 0
        %3304 = vmatprep.subr.bf16.mxu0 0
        %3305 = vmatpush1.bf16.msra.mxu0 0
        %3306 = vmatprep.subr.bf16.mxu0 0
        %3307 = vmatpush1.bf16.msra.mxu0 0
        %3308 = vmatprep.subr.bf16.mxu0 0
        %3309 = vmatpush1.bf16.msra.mxu0 0
        %3310 = vmatprep.subr.bf16.mxu0 0
        %3311 = vmatpush1.bf16.msra.mxu0 0
        %3312 = vmatprep.subr.bf16.mxu0 0
        %3313 = vmatpush1.bf16.msra.mxu0 0
        %3314 = vmatprep.subr.bf16.mxu0 0
        %3315 = vmatpush1.bf16.msra.mxu0 0
        %3316 = vmatprep.subr.bf16.mxu0 0
        %3317 = vmatpush1.bf16.msra.mxu0 0
        %3318 = vmatprep.subr.bf16.mxu0 0
        %3319 = vmatpush1.bf16.msra.mxu0 0
        %3320 = vmatprep.subr.bf16.mxu0 0
        %3321 = vmatpush1.bf16.msra.mxu0 0
        %3322 = vmatprep.subr.bf16.mxu0 0
        %3323 = vmatpush1.bf16.msra.mxu0 0
        %3324 = vmatprep.mubr.bf16.mxu0 0
        %3325 = vmatmul.mubr.bf16.gmra.mrb[0].mxu0 %v3287
        %v3326 = vpop.f32.mrb[0].mxu0
        %v3327 = vadd.f32 0.0, %v3326
        %v3328 = vpop.f32.mrb[0].mxu0
        %v3329 = vpop.f32.mrb[0].mxu0
        %v3330 = vpop.f32.mrb[0].mxu0
        %3331 = vdwg.mxu0
        %v3333 = vsel %vm1394, %v3144, 0
        %v3336 = vsel %vm1870, %v2660, 0
        %3338 = vmatprep.subr.bf16.mxu0 0
        %3339 = vmatpush1.bf16.msra.mxu0 %v3336
        %3340 = vmatprep.subr.bf16.mxu0 0
        %3341 = vmatpush1.bf16.msra.mxu0 0
        %3342 = vmatprep.subr.bf16.mxu0 0
        %3343 = vmatpush1.bf16.msra.mxu0 0
        %3344 = vmatprep.subr.bf16.mxu0 0
        %3345 = vmatpush1.bf16.msra.mxu0 0
        %3346 = vmatprep.subr.bf16.mxu0 0
        %3347 = vmatpush1.bf16.msra.mxu0 0
        %3348 = vmatprep.subr.bf16.mxu0 0
        %3349 = vmatpush1.bf16.msra.mxu0 0
        %3350 = vmatprep.subr.bf16.mxu0 0
        %3351 = vmatpush1.bf16.msra.mxu0 0
        %3352 = vmatprep.subr.bf16.mxu0 0
        %3353 = vmatpush1.bf16.msra.mxu0 0
        %3354 = vmatprep.subr.bf16.mxu0 0
        %3355 = vmatpush1.bf16.msra.mxu0 0
        %3356 = vmatprep.subr.bf16.mxu0 0
        %3357 = vmatpush1.bf16.msra.mxu0 0
        %3358 = vmatprep.subr.bf16.mxu0 0
        %3359 = vmatpush1.bf16.msra.mxu0 0
        %3360 = vmatprep.subr.bf16.mxu0 0
        %3361 = vmatpush1.bf16.msra.mxu0 0
        %3362 = vmatprep.subr.bf16.mxu0 0
        %3363 = vmatpush1.bf16.msra.mxu0 0
        %3364 = vmatprep.subr.bf16.mxu0 0
        %3365 = vmatpush1.bf16.msra.mxu0 0
        %3366 = vmatprep.subr.bf16.mxu0 0
        %3367 = vmatpush1.bf16.msra.mxu0 0
        %3368 = vmatprep.subr.bf16.mxu0 0
        %3369 = vmatpush1.bf16.msra.mxu0 0
        %3370 = vmatprep.mubr.bf16.mxu0 0
        %3371 = vmatmul.mubr.bf16.gmra.mrb[0].mxu0 %v3333
        %v3372 = vpop.f32.mrb[0].mxu0
        %v3373 = vadd.f32 0.0, %v3372
        %v3374 = vpop.f32.mrb[0].mxu0
        %v3375 = vpop.f32.mrb[0].mxu0
        %v3376 = vpop.f32.mrb[0].mxu0
        %3377 = vdwg.mxu0
        %v3379 = vsel %vm1394, %v3145, 0
        %v3382 = vsel %vm1870, %v2661, 0
        %3384 = vmatprep.subr.bf16.mxu0 0
        %3385 = vmatpush1.bf16.msra.mxu0 %v3382
        %3386 = vmatprep.subr.bf16.mxu0 0
        %3387 = vmatpush1.bf16.msra.mxu0 0
        %3388 = vmatprep.subr.bf16.mxu0 0
        %3389 = vmatpush1.bf16.msra.mxu0 0
        %3390 = vmatprep.subr.bf16.mxu0 0
        %3391 = vmatpush1.bf16.msra.mxu0 0
        %3392 = vmatprep.subr.bf16.mxu0 0
        %3393 = vmatpush1.bf16.msra.mxu0 0
        %3394 = vmatprep.subr.bf16.mxu0 0
        %3395 = vmatpush1.bf16.msra.mxu0 0
        %3396 = vmatprep.subr.bf16.mxu0 0
        %3397 = vmatpush1.bf16.msra.mxu0 0
        %3398 = vmatprep.subr.bf16.mxu0 0
        %3399 = vmatpush1.bf16.msra.mxu0 0
        %3400 = vmatprep.subr.bf16.mxu0 0
        %3401 = vmatpush1.bf16.msra.mxu0 0
        %3402 = vmatprep.subr.bf16.mxu0 0
        %3403 = vmatpush1.bf16.msra.mxu0 0
        %3404 = vmatprep.subr.bf16.mxu0 0
        %3405 = vmatpush1.bf16.msra.mxu0 0
        %3406 = vmatprep.subr.bf16.mxu0 0
        %3407 = vmatpush1.bf16.msra.mxu0 0
        %3408 = vmatprep.subr.bf16.mxu0 0
        %3409 = vmatpush1.bf16.msra.mxu0 0
        %3410 = vmatprep.subr.bf16.mxu0 0
        %3411 = vmatpush1.bf16.msra.mxu0 0
        %3412 = vmatprep.subr.bf16.mxu0 0
        %3413 = vmatpush1.bf16.msra.mxu0 0
        %3414 = vmatprep.subr.bf16.mxu0 0
        %3415 = vmatpush1.bf16.msra.mxu0 0
        %3416 = vmatprep.mubr.bf16.mxu0 0
        %3417 = vmatmul.mubr.bf16.gmra.mrb[0].mxu0 %v3379
        %v3418 = vpop.f32.mrb[0].mxu0
        %v3419 = vadd.f32 0.0, %v3418
        %v3420 = vpop.f32.mrb[0].mxu0
        %v3421 = vpop.f32.mrb[0].mxu0
        %v3422 = vpop.f32.mrb[0].mxu0
        %3423 = vdwg.mxu0
        %v3425 = vsel %vm1394, %v3146, 0
        %v3428 = vsel %vm1870, %v2662, 0
        %3430 = vmatprep.subr.bf16.mxu0 0
        %3431 = vmatpush1.bf16.msra.mxu0 %v3428
        %3432 = vmatprep.subr.bf16.mxu0 0
        %3433 = vmatpush1.bf16.msra.mxu0 0
        %3434 = vmatprep.subr.bf16.mxu0 0
        %3435 = vmatpush1.bf16.msra.mxu0 0
        %3436 = vmatprep.subr.bf16.mxu0 0
        %3437 = vmatpush1.bf16.msra.mxu0 0
        %3438 = vmatprep.subr.bf16.mxu0 0
        %3439 = vmatpush1.bf16.msra.mxu0 0
        %3440 = vmatprep.subr.bf16.mxu0 0
        %3441 = vmatpush1.bf16.msra.mxu0 0
        %3442 = vmatprep.subr.bf16.mxu0 0
        %3443 = vmatpush1.bf16.msra.mxu0 0
        %3444 = vmatprep.subr.bf16.mxu0 0
        %3445 = vmatpush1.bf16.msra.mxu0 0
        %3446 = vmatprep.subr.bf16.mxu0 0
        %3447 = vmatpush1.bf16.msra.mxu0 0
        %3448 = vmatprep.subr.bf16.mxu0 0
        %3449 = vmatpush1.bf16.msra.mxu0 0
        %3450 = vmatprep.subr.bf16.mxu0 0
        %3451 = vmatpush1.bf16.msra.mxu0 0
        %3452 = vmatprep.subr.bf16.mxu0 0
        %3453 = vmatpush1.bf16.msra.mxu0 0
        %3454 = vmatprep.subr.bf16.mxu0 0
        %3455 = vmatpush1.bf16.msra.mxu0 0
        %3456 = vmatprep.subr.bf16.mxu0 0
        %3457 = vmatpush1.bf16.msra.mxu0 0
        %3458 = vmatprep.subr.bf16.mxu0 0
        %3459 = vmatpush1.bf16.msra.mxu0 0
        %3460 = vmatprep.subr.bf16.mxu0 0
        %3461 = vmatpush1.bf16.msra.mxu0 0
        %3462 = vmatprep.mubr.bf16.mxu0 0
        %3463 = vmatmul.mubr.bf16.gmra.mrb[0].mxu0 %v3425
        %v3464 = vpop.f32.mrb[0].mxu0
        %v3465 = vadd.f32 0.0, %v3464
        %v3466 = vpop.f32.mrb[0].mxu0
        %v3467 = vpop.f32.mrb[0].mxu0
        %v3468 = vpop.f32.mrb[0].mxu0
        %3469 = vdwg.mxu0
        %v3471 = vsel %vm1394, %v3147, 0
        %v3474 = vsel %vm1870, %v2663, 0
        %3476 = vmatprep.subr.bf16.mxu0 0
        %3477 = vmatpush1.bf16.msra.mxu0 %v3474
        %3478 = vmatprep.subr.bf16.mxu0 0
        %3479 = vmatpush1.bf16.msra.mxu0 0
        %3480 = vmatprep.subr.bf16.mxu0 0
        %3481 = vmatpush1.bf16.msra.mxu0 0
        %3482 = vmatprep.subr.bf16.mxu0 0
        %3483 = vmatpush1.bf16.msra.mxu0 0
        %3484 = vmatprep.subr.bf16.mxu0 0
        %3485 = vmatpush1.bf16.msra.mxu0 0
        %3486 = vmatprep.subr.bf16.mxu0 0
        %3487 = vmatpush1.bf16.msra.mxu0 0
        %3488 = vmatprep.subr.bf16.mxu0 0
        %3489 = vmatpush1.bf16.msra.mxu0 0
        %3490 = vmatprep.subr.bf16.mxu0 0
        %3491 = vmatpush1.bf16.msra.mxu0 0
        %3492 = vmatprep.subr.bf16.mxu0 0
        %3493 = vmatpush1.bf16.msra.mxu0 0
        %3494 = vmatprep.subr.bf16.mxu0 0
        %3495 = vmatpush1.bf16.msra.mxu0 0
        %3496 = vmatprep.subr.bf16.mxu0 0
        %3497 = vmatpush1.bf16.msra.mxu0 0
        %3498 = vmatprep.subr.bf16.mxu0 0
        %3499 = vmatpush1.bf16.msra.mxu0 0
        %3500 = vmatprep.subr.bf16.mxu0 0
        %3501 = vmatpush1.bf16.msra.mxu0 0
        %3502 = vmatprep.subr.bf16.mxu0 0
        %3503 = vmatpush1.bf16.msra.mxu0 0
        %3504 = vmatprep.subr.bf16.mxu0 0
        %3505 = vmatpush1.bf16.msra.mxu0 0
        %3506 = vmatprep.subr.bf16.mxu0 0
        %3507 = vmatpush1.bf16.msra.mxu0 0
        %3508 = vmatprep.mubr.bf16.mxu0 0
        %3509 = vmatmul.mubr.bf16.gmra.mrb[0].mxu0 %v3471
        %v3510 = vpop.f32.mrb[0].mxu0
        %v3511 = vadd.f32 0.0, %v3510
        %v3512 = vpop.f32.mrb[0].mxu0
        %v3513 = vpop.f32.mrb[0].mxu0
        %v3514 = vpop.f32.mrb[0].mxu0
        %3515 = vdwg.mxu0
        %3518 = vrot.lane.b32.xlu0 %v3235, 8
        %v3519 = vpop.permute.xlu0 %3518
        %3520 = vrot.lane.b32.xlu0 %v3419, 8
        %v3521 = vpop.permute.xlu0 %3520
        %3526 = vrot.lane.b32.xlu0 %v3281, 16
        %v3527 = vpop.permute.xlu0 %3526
        %3528 = vrot.lane.b32.xlu0 %v3465, 16
        %v3529 = vpop.permute.xlu0 %3528
        %3534 = vrot.lane.b32.xlu0 %v3327, 24
        %v3535 = vpop.permute.xlu0 %3534
        %3536 = vrot.lane.b32.xlu0 %v3511, 24
        %v3537 = vpop.permute.xlu0 %3536
        %v3540 = vsel %vm1394, %v3189, %v3519
        %v3541 = vsel %vm1394, %v3373, %v3521
        %v3542 = vsel %vm2262, %v3540, %v3527
        %v3543 = vsel %vm2262, %v3541, %v3529
        %v3544 = vsel %vm2265, %v3542, %v3535
        %v3545 = vsel %vm2265, %v3543, %v3537
        %v3546 = vpack.c.bf16 %v3545, %v3544
        %v3547 = vld [vmem:[%s1019] sm:$0xf]
        %v3548 = vld [vmem:[%s1019 + $0x4] sm:$0xf]
        %v3549 = vld [vmem:[%s1019 + $0x8] sm:$0xf]
        %v3550 = vld [vmem:[%s1019 + $0xc] sm:$0xf]
        %v3551 = vld [vmem:[%s1022] sm:$0x1]
        %v3553 = vlaneseq
        %v3554 = vshrl.u32 %v3553, 7
        %v3555 = vsub.s32 0, %v3554
        %v3556 = vrot.slane %v3551, %v3555
        %v3562 = vunpack.c.l.b16 %v3547
        %v3563 = vunpack.c.l.b16 %v3548
        %v3564 = vunpack.c.l.b16 %v3549
        %v3565 = vunpack.c.l.b16 %v3550
        %v3566 = vpack.c.b16 %v3563, %v3562
        %v3567 = vpack.c.b16 %v3565, %v3564
        %v3571 = vsel %vm1076, %v3546, 0
        %3573 = vmatprep.subr.bf16.mxu0 0
        %3574 = vmatpush1.bf16.msra.mxu0 %v3566
        %3575 = vmatprep.subr.bf16.mxu0 0
        %3576 = vmatpush1.bf16.msra.mxu0 %v3567
        %3577 = vmatprep.subr.bf16.mxu0 0
        %3578 = vmatpush1.bf16.msra.mxu0 0
        %3579 = vmatprep.subr.bf16.mxu0 0
        %3580 = vmatpush1.bf16.msra.mxu0 0
        %3581 = vmatprep.subr.bf16.mxu0 0
        %3582 = vmatpush1.bf16.msra.mxu0 0
        %3583 = vmatprep.subr.bf16.mxu0 0
        %3584 = vmatpush1.bf16.msra.mxu0 0
        %3585 = vmatprep.subr.bf16.mxu0 0
        %3586 = vmatpush1.bf16.msra.mxu0 0
        %3587 = vmatprep.subr.bf16.mxu0 0
        %3588 = vmatpush1.bf16.msra.mxu0 0
        %3589 = vmatprep.subr.bf16.mxu0 0
        %3590 = vmatpush1.bf16.msra.mxu0 0
        %3591 = vmatprep.subr.bf16.mxu0 0
        %3592 = vmatpush1.bf16.msra.mxu0 0
        %3593 = vmatprep.subr.bf16.mxu0 0
        %3594 = vmatpush1.bf16.msra.mxu0 0
        %3595 = vmatprep.subr.bf16.mxu0 0
        %3596 = vmatpush1.bf16.msra.mxu0 0
        %3597 = vmatprep.subr.bf16.mxu0 0
        %3598 = vmatpush1.bf16.msra.mxu0 0
        %3599 = vmatprep.subr.bf16.mxu0 0
        %3600 = vmatpush1.bf16.msra.mxu0 0
        %3601 = vmatprep.subr.bf16.mxu0 0
        %3602 = vmatpush1.bf16.msra.mxu0 0
        %3603 = vmatprep.subr.bf16.mxu0 0
        %3604 = vmatpush1.bf16.msra.mxu0 0
        %3605 = vmatprep.mubr.bf16.mxu0 0
        %3606 = vmatmul.mubr.bf16.gmra.mrb[0].mxu0 %v3571
        %v3607 = vpop.f32.mrb[0].mxu0
        %v3608 = vadd.f32 %v3556, %v3607
        %v3609 = vpop.f32.mrb[0].mxu0
        %v3610 = vpop.f32.mrb[0].mxu0
        %v3611 = vadd.f32 %v3556, %v3610
        %v3612 = vpop.f32.mrb[0].mxu0
        %3613 = vdwg.mxu0
        %v3614 = vadd.f32 %v3608, %v2336
        %v3615 = vadd.f32 %v3611, %v2337
        %v3616 = vld [vmem:[%s992 + $0x2] sm:$0x1]
        %v3617 = vld [vmem:[%s996 + $0x2] sm:$0x1]
        %v3618 = vsel %vm1076, %v3614, 0.0
        %3619 = vadd.xlane.f32.xlu0 %v3618
        %v3620 = vpop.xlane.xlu0 %3619
        %v3621 = vsel %vm1076, %v3615, 0.0
        %3622 = vadd.xlane.f32.xlu0 %v3621
        %v3623 = vpop.xlane.xlu0 %3622
        %v3624 = vmul.f32 %v3620, %v1083
        %v3625 = vmul.f32 %v3623, %v1083
        %v3626 = vsub.f32 %v3614, %v3624
        %v3627 = vsub.f32 %v3615, %v3625
        %v3628 = vmul.f32 %v3626, %v3626
        %v3629 = vmul.f32 %v3627, %v3627
        %v3630 = vsel %vm1076, %v3628, 0.0
        %3631 = vadd.xlane.f32.xlu0 %v3630
        %v3632 = vpop.xlane.xlu0 %3631
        %v3633 = vsel %vm1076, %v3629, 0.0
        %3634 = vadd.xlane.f32.xlu0 %v3633
        %v3635 = vpop.xlane.xlu0 %3634
        %v3636 = vmul.f32 %v3632, %v1083
        %v3637 = vmul.f32 %v3635, %v1083
        %v3638 = vadd.f32 %v3636, 1e-06
        %v3639 = vadd.f32 %v3637, 1e-06
        %v3640 = vrsqrt.pop %v3638
        %v3641 = vrsqrt.pop %v3639
        %v3642 = vmul.f32 %v3626, %v3640
        %v3643 = vmul.f32 %v3627, %v3641
        %v3644 = vlaneseq
        %v3645 = vshrl.u32 %v3644, 7
        %v3646 = vsub.s32 0, %v3645
        %v3647 = vrot.slane %v3616, %v3646
        %v3648 = vmul.f32 %v3642, %v3647
        %v3649 = vmul.f32 %v3643, %v3647
        %v3650 = vlaneseq
        %v3651 = vshrl.u32 %v3650, 7
        %v3652 = vsub.s32 0, %v3651
        %v3653 = vrot.slane %v3617, %v3652
        %v3654 = vadd.f32 %v3648, %v3653
        %v3655 = vadd.f32 %v3649, %v3653
        %v3656 = vpack.c.bf16 %v3655, %v3654
        %v3657 = vld [vmem:[%s877] sm:$0xf]
        %v3658 = vld [vmem:[%s877 + $0x4] sm:$0xf]
        %v3659 = vld [vmem:[%s877 + $0x8] sm:$0xf]
        %v3660 = vld [vmem:[%s877 + $0xc] sm:$0xf]
        %v3661 = vld [vmem:[%s1025] sm:$0x1]
        %v3663 = vlaneseq
        %v3664 = vshrl.u32 %v3663, 7
        %v3665 = vsub.s32 0, %v3664
        %v3666 = vrot.slane %v3661, %v3665
        %v3672 = vunpack.c.l.b16 %v3657
        %v3673 = vunpack.c.l.b16 %v3658
        %v3674 = vunpack.c.l.b16 %v3659
        %v3675 = vunpack.c.l.b16 %v3660
        %v3676 = vpack.c.b16 %v3673, %v3672
        %v3677 = vpack.c.b16 %v3675, %v3674
        %v3681 = vsel %vm1076, %v3656, 0
        %3683 = vmatprep.subr.bf16.mxu0 0
        %3684 = vmatpush1.bf16.msra.mxu0 %v3676
        %3685 = vmatprep.subr.bf16.mxu0 0
        %3686 = vmatpush1.bf16.msra.mxu0 %v3677
        %3687 = vmatprep.subr.bf16.mxu0 0
        %3688 = vmatpush1.bf16.msra.mxu0 0
        %3689 = vmatprep.subr.bf16.mxu0 0
        %3690 = vmatpush1.bf16.msra.mxu0 0
        %3691 = vmatprep.subr.bf16.mxu0 0
        %3692 = vmatpush1.bf16.msra.mxu0 0
        %3693 = vmatprep.subr.bf16.mxu0 0
        %3694 = vmatpush1.bf16.msra.mxu0 0
        %3695 = vmatprep.subr.bf16.mxu0 0
        %3696 = vmatpush1.bf16.msra.mxu0 0
        %3697 = vmatprep.subr.bf16.mxu0 0
        %3698 = vmatpush1.bf16.msra.mxu0 0
        %3699 = vmatprep.subr.bf16.mxu0 0
        %3700 = vmatpush1.bf16.msra.mxu0 0
        %3701 = vmatprep.subr.bf16.mxu0 0
        %3702 = vmatpush1.bf16.msra.mxu0 0
        %3703 = vmatprep.subr.bf16.mxu0 0
        %3704 = vmatpush1.bf16.msra.mxu0 0
        %3705 = vmatprep.subr.bf16.mxu0 0
        %3706 = vmatpush1.bf16.msra.mxu0 0
        %3707 = vmatprep.subr.bf16.mxu0 0
        %3708 = vmatpush1.bf16.msra.mxu0 0
        %3709 = vmatprep.subr.bf16.mxu0 0
        %3710 = vmatpush1.bf16.msra.mxu0 0
        %3711 = vmatprep.subr.bf16.mxu0 0
        %3712 = vmatpush1.bf16.msra.mxu0 0
        %3713 = vmatprep.subr.bf16.mxu0 0
        %3714 = vmatpush1.bf16.msra.mxu0 0
        %3715 = vmatprep.mubr.bf16.mxu0 0
        %3716 = vmatmul.mubr.bf16.gmra.mrb[0].mxu0 %v3681
        %v3717 = vpop.f32.mrb[0].mxu0
        %v3718 = vadd.f32 %v3666, %v3717
        %v3719 = vpop.f32.mrb[0].mxu0
        %v3720 = vpop.f32.mrb[0].mxu0
        %v3721 = vadd.f32 %v3666, %v3720
        %v3722 = vpop.f32.mrb[0].mxu0
        %3723 = vdwg.mxu0
        %v3724 = vmax.f32 %v3718, 0.0
        %v3725 = vmax.f32 %v3721, 0.0
        %v3726 = vpack.c.bf16 %v3725, %v3724
        %v3727 = vld [vmem:[%s1030] sm:$0xf]
        %v3728 = vld [vmem:[%s1030 + $0x4] sm:$0xf]
        %v3729 = vld [vmem:[%s1030 + $0x8] sm:$0xf]
        %v3730 = vld [vmem:[%s1030 + $0xc] sm:$0xf]
        %v3731 = vld [vmem:[%s1030 + $0x10] sm:$0xf]
        %v3732 = vld [vmem:[%s1030 + $0x14] sm:$0xf]
        %v3733 = vld [vmem:[%s1030 + $0x18] sm:$0xf]
        %v3734 = vld [vmem:[%s1030 + $0x1c] sm:$0xf]
        %v3735 = vld [vmem:[%s1033] sm:$0x1]
        %v3737 = vlaneseq
        %v3738 = vshrl.u32 %v3737, 7
        %v3739 = vsub.s32 0, %v3738
        %v3740 = vrot.slane %v3735, %v3739
        %v3750 = vunpack.c.l.b16 %v3727
        %v3751 = vunpack.c.l.b16 %v3728
        %v3752 = vunpack.c.l.b16 %v3729
        %v3753 = vunpack.c.l.b16 %v3730
        %v3754 = vunpack.c.l.b16 %v3731
        %v3755 = vunpack.c.l.b16 %v3732
        %v3756 = vunpack.c.l.b16 %v3733
        %v3757 = vunpack.c.l.b16 %v3734
        %v3758 = vpack.c.b16 %v3751, %v3750
        %v3759 = vpack.c.b16 %v3753, %v3752
        %v3760 = vpack.c.b16 %v3755, %v3754
        %v3761 = vpack.c.b16 %v3757, %v3756
        %vm3766 = vcmask 523264
        %v3768 = vsel %vm3766, %v3726, 0
        %3770 = vmatprep.subr.bf16.mxu0 0
        %3771 = vmatpush1.bf16.msra.mxu0 %v3758
        %3772 = vmatprep.subr.bf16.mxu0 0
        %3773 = vmatpush1.bf16.msra.mxu0 %v3759
        %3774 = vmatprep.subr.bf16.mxu0 0
        %3775 = vmatpush1.bf16.msra.mxu0 %v3760
        %3776 = vmatprep.subr.bf16.mxu0 0
        %3777 = vmatpush1.bf16.msra.mxu0 %v3761
        %3778 = vmatprep.subr.bf16.mxu0 0
        %3779 = vmatpush1.bf16.msra.mxu0 0
        %3780 = vmatprep.subr.bf16.mxu0 0
        %3781 = vmatpush1.bf16.msra.mxu0 0
        %3782 = vmatprep.subr.bf16.mxu0 0
        %3783 = vmatpush1.bf16.msra.mxu0 0
        %3784 = vmatprep.subr.bf16.mxu0 0
        %3785 = vmatpush1.bf16.msra.mxu0 0
        %3786 = vmatprep.subr.bf16.mxu0 0
        %3787 = vmatpush1.bf16.msra.mxu0 0
        %3788 = vmatprep.subr.bf16.mxu0 0
        %3789 = vmatpush1.bf16.msra.mxu0 0
        %3790 = vmatprep.subr.bf16.mxu0 0
        %3791 = vmatpush1.bf16.msra.mxu0 0
        %3792 = vmatprep.subr.bf16.mxu0 0
        %3793 = vmatpush1.bf16.msra.mxu0 0
        %3794 = vmatprep.subr.bf16.mxu0 0
        %3795 = vmatpush1.bf16.msra.mxu0 0
        %3796 = vmatprep.subr.bf16.mxu0 0
        %3797 = vmatpush1.bf16.msra.mxu0 0
        %3798 = vmatprep.subr.bf16.mxu0 0
        %3799 = vmatpush1.bf16.msra.mxu0 0
        %3800 = vmatprep.subr.bf16.mxu0 0
        %3801 = vmatpush1.bf16.msra.mxu0 0
        %3802 = vmatprep.mubr.bf16.mxu0 0
        %3803 = vmatmul.mubr.bf16.gmra.mrb[0].mxu0 %v3768
        %v3804 = vpop.f32.mrb[0].mxu0
        %v3805 = vadd.f32 %v3740, %v3804
        %v3806 = vpop.f32.mrb[0].mxu0
        %v3807 = vpop.f32.mrb[0].mxu0
        %v3808 = vadd.f32 %v3740, %v3807
        %v3809 = vpop.f32.mrb[0].mxu0
        %3810 = vdwg.mxu0
        %v3811 = vadd.f32 %v3805, %v3614
        %v3812 = vadd.f32 %v3808, %v3615
        %p3813 = scmp.ne.s32.totalorder %s43, 1
        // Predicated region
        $region133: #{tpu_custom_call.1} parent=99 // pred_check
          %p3814 = pneg %p3813
        $region134: #{tpu_custom_call.1} parent=99 // pred_check_branch
          %3816 = sbr.rel (%p3814) target = $region136
        $region135: #{tpu_custom_call.1} parent=99 // pred_region
          %3817 = vst.msk [vmem:[#allocation13] sm:$0xff] %vm1076, %v3811
          %3818 = vst.msk [vmem:[#allocation13 + $0x8] sm:$0xff] %vm1076, %v3812
        $region136: #{tpu_custom_call.1} parent=99 // pred_fallthru
          _
        %p3819 = scmp.eq.s32.totalorder %s43, 1
        // Predicated region
        $region137: #{tpu_custom_call.1} parent=99 // pred_check
          %p3820 = pneg %p3819
        $region138: #{tpu_custom_call.1} parent=99 // pred_check_branch
          %3822 = sbr.rel (%p3820) target = $region140
        $region139: #{tpu_custom_call.1} parent=99 // pred_region
          %v3823 = vld [vmem:[%s18] sm:$0x1]
          %v3824 = vld [vmem:[%s19] sm:$0x1]
          %v3825 = vsel %vm1076, %v3811, 0.0
          %3826 = vadd.xlane.f32.xlu0 %v3825
          %v3827 = vpop.xlane.xlu0 %3826
          %v3828 = vsel %vm1076, %v3812, 0.0
          %3829 = vadd.xlane.f32.xlu0 %v3828
          %v3830 = vpop.xlane.xlu0 %3829
          %v3831 = vmul.f32 %v3827, %v1083
          %v3832 = vmul.f32 %v3830, %v1083
          %v3833 = vsub.f32 %v3811, %v3831
          %v3834 = vsub.f32 %v3812, %v3832
          %v3835 = vmul.f32 %v3833, %v3833
          %v3836 = vmul.f32 %v3834, %v3834
          %v3837 = vsel %vm1076, %v3835, 0.0
          %3838 = vadd.xlane.f32.xlu0 %v3837
          %v3839 = vpop.xlane.xlu0 %3838
          %v3840 = vsel %vm1076, %v3836, 0.0
          %3841 = vadd.xlane.f32.xlu0 %v3840
          %v3842 = vpop.xlane.xlu0 %3841
          %v3843 = vmul.f32 %v3839, %v1083
          %v3844 = vmul.f32 %v3842, %v1083
          %v3845 = vadd.f32 %v3843, 1e-06
          %v3846 = vadd.f32 %v3844, 1e-06
          %v3847 = vrsqrt.pop %v3845
          %v3848 = vrsqrt.pop %v3846
          %v3849 = vmul.f32 %v3833, %v3847
          %v3850 = vmul.f32 %v3834, %v3848
          %v3852 = vlaneseq
          %v3853 = vshrl.u32 %v3852, 7
          %v3854 = vsub.s32 0, %v3853
          %v3855 = vrot.slane %v3823, %v3854
          %v3857 = vmul.f32 %v3849, %v3855
          %v3858 = vmul.f32 %v3850, %v3855
          %v3860 = vlaneseq
          %v3861 = vshrl.u32 %v3860, 7
          %v3862 = vsub.s32 0, %v3861
          %v3863 = vrot.slane %v3824, %v3862
          %v3865 = vadd.f32 %v3857, %v3863
          %v3866 = vadd.f32 %v3858, %v3863
          %3867 = vst.msk [vmem:[#allocation13] sm:$0xff] %vm1076, %v3865
          %3868 = vst.msk [vmem:[#allocation13 + $0x8] sm:$0xff] %vm1076, %v3866
          %3869 = vst.msk [vmem:[#allocation14] sm:$0xff] %vm1394, %v3125
          %3870 = vst.msk [vmem:[#allocation14 + $0x8] sm:$0xff] %vm1394, %v3133
        $region140: #{tpu_custom_call.1} parent=99 // pred_fallthru
          _
        // Predicated region
        $region141: #{tpu_custom_call.1} parent=99 // pred_check
          %p3871 = pneg %p578
        $region142: #{tpu_custom_call.1} parent=99 // pred_check_branch
          %3873 = sbr.rel (%p3871) target = $region144
        $region143: #{tpu_custom_call.1} parent=99 // pred_region
          %s3874 = smul.u32 2, %s42
          %s3876 = ssub.s32 256, 256
          %3877 = vsyncadd [#allocation4], %s3876
          %s3878 = smul.addr %s3874, 128
          %s3879 = scalar_lea.hbm %s20, %s3878
          %s3880 = sshll.u32 [#allocation13], 4
          %s3881 = int_to_ptr.vmem [resolvable:$true] %s3880
          %3886 = dma.vmem_to_hbm [thread:$0]  %s3881, 256, %s3879, [#allocation4], 128, 128, 8
        $region144: #{tpu_custom_call.1} parent=99 // pred_fallthru
          _
        // Predicated region
        $region145: #{tpu_custom_call.1} parent=99 // pred_check
          %p3887 = pneg %p604
        $region146: #{tpu_custom_call.1} parent=99 // pred_check_branch
          %3889 = sbr.rel (%p3887) target = $region148
        $region147: #{tpu_custom_call.1} parent=99 // pred_region
          %s3890 = smul.u32 2, %s42
          %s3892 = ssub.s32 256, 256
          %3893 = vsyncadd [#allocation15], %s3892
          %s3894 = smul.addr %s3890, 128
          %s3895 = scalar_lea.hbm %s21, %s3894
          %s3896 = sshll.u32 [#allocation14], 4
          %s3897 = int_to_ptr.vmem [resolvable:$true] %s3896
          %3902 = dma.vmem_to_hbm [thread:$0]  %s3897, 256, %s3895, [#allocation15], 128, 128, 8
        $region148: #{tpu_custom_call.1} parent=99 // pred_fallthru
          _
        // Predicated region
        $region149: #{tpu_custom_call.1} parent=99 // pred_check
          %p3903 = pneg %p578
        $region150: #{tpu_custom_call.1} parent=99 // pred_check_branch
          %3905 = sbr.rel (%p3903) target = $region152
        $region151: #{tpu_custom_call.1} parent=99 // pred_region
          %3906 = dma.done [#allocation4], 256
        $region152: #{tpu_custom_call.1} parent=99 // pred_fallthru
          _
        // Predicated region
        $region153: #{tpu_custom_call.1} parent=99 // pred_check
          %p3907 = pneg %p604
        $region154: #{tpu_custom_call.1} parent=99 // pred_check_branch
          %3909 = sbr.rel (%p3907) target = $region156
        $region155: #{tpu_custom_call.1} parent=99 // pred_region
          %3910 = dma.done [#allocation15], 256
        $region156: #{tpu_custom_call.1} parent=99 // pred_fallthru
          _
      $region100: #{tpu_custom_call.1} parent=5 // pred_fallthru
        _
      %p3911 = scmp.le.s32.totalorder 2, %s33
      // Predicated region
      $region157: #{tpu_custom_call.1} parent=5 // pred_check
        %p3912 = pneg %p3911
      $region158: #{tpu_custom_call.1} parent=5 // pred_check_branch
        %3914 = sbr.rel (%p3912) target = $region160
      $region159: #{tpu_custom_call.1} parent=5 // pred_region
        %s3915 = ssub.s32 %s33, 2
      $region160: #{tpu_custom_call.1} parent=5 // pred_fallthru
        _
    $region6: #{tpu_custom_call.1} parent=1 // loop_footer
      %s37 = sadd.s32 1, %s33
    $region7: #{tpu_custom_call.1} parent=1 // loop_footer_branch
      %32 = sbr.rel target = $region3
    $region8: #{tpu_custom_call.1} parent=1 // loop_exit
      _
    %3916 = vsyncpa [#allocation3], 1
    %s3917 = scalar_lea.sflag [#allocation3], 1
    %3918 = vsyncpa %s3917, 1
    %3919 = vsyncpa [#allocation6], 1
    %3920 = vsyncpa [#allocation9], 1
    %3921 = vsyncpa [#allocation4], 1
    %s3922 = scalar_lea.sflag [#allocation4], 1
    %3923 = vsyncpa %s3922, 1
    %3924 = vsyncpa [#allocation15], 1

</llo_original>
